<compile_context>
chip_gen: v6e
topology: v6e:2x2x1
jax: 0.10.0
libtpu: 0.0.40
codegen_flags: <defaults>
</compile_context>

<pallas_src>
import math

import jax
import jax.numpy as jnp
from jax.experimental import pallas as pl
from jax.experimental.pallas import tpu as pltpu

BN_EPS = 1e-5
LN_EPS = 1e-8


# ----------------------------------------------------------------------------
# Fused UET kernel (one batch element per grid step)
# ----------------------------------------------------------------------------
def make_uet_kernel(*, L, C_in, CMAX, K, pad, n_layer, neg_slope,
                    pffn_residual, approx_softmax=True):
    E = CMAX                              # transformer width == emb_4 == CMAX
    tap_offsets = [k - pad for k in range(K)]
    f32 = jnp.float32
    bf16 = jnp.bfloat16

    def kernel(x_ref, convw_ref, convss_ref, trw_ref, trv_ref, o_ref):
        # ---- load this batch element, zero-pad channels to CMAX ----
        x = x_ref[...].astype(f32)                                     # (L, C_in)
        if C_in < CMAX:
            x = jnp.concatenate([x, jnp.zeros((L, CMAX - C_in), f32)], axis=-1)
        h = x                                                          # (L, CMAX)

        # row index within the sequence (for conv halo zeroing)
        pos = jax.lax.broadcasted_iota(jnp.int32, (L, 1), 0)
        tap_ok = {}
        for d in tap_offsets:
            if d < 0:
                tap_ok[d] = pos >= (-d)
            elif d > 0:
                tap_ok[d] = pos < (L - d)

        def shifted(hv, d):
            # result[i] = hv[i + d] inside the sequence, 0 outside (conv halo).
            if d == 0:
                return hv
            r = pltpu.roll(hv, shift=(-d) % L, axis=0)     # XLU sublane rotate
            return jnp.where(tap_ok[d], r, 0.0)

        def conv_stage(hv, stage):
            # Conv1d('same') + eval-mode BN + LeakyReLU as K accumulating bf16 matmuls.
            W = convw_ref[stage]                                       # (K*CMAX, CMAX) bf16
            ss = convss_ref[stage]                                     # (2, CMAX) f32
            y = jnp.zeros((L, CMAX), f32)
            for ki, d in enumerate(tap_offsets):
                Wd = W[ki * CMAX:(ki + 1) * CMAX, :]                   # (CMAX, CMAX) bf16
                y = y + jnp.dot(shifted(hv, d).astype(bf16), Wd,
                                preferred_element_type=f32)
            y = y * ss[0:1, :] + ss[1:2, :]        # conv bias folded into BN shift
            return jnp.where(y >= 0.0, y, neg_slope * y)               # LeakyReLU (f32)

        def layer_norm(v, g, b):
            mu = jnp.mean(v, axis=-1, keepdims=True)
            var = jnp.mean((v - mu) ** 2, axis=-1, keepdims=True)
            return (v - mu) * jax.lax.rsqrt(var + LN_EPS) * g + b

        # additive "causal" mask: tril of ONES (torch float attn_mask is additive)
        ri = jax.lax.broadcasted_iota(jnp.int32, (L, L), 0)
        ci = jax.lax.broadcasted_iota(jnp.int32, (L, L), 1)
        add_mask = jnp.where(ci <= ri, 1.0, 0.0).astype(f32)           # (L, L)

        def transformer_layer(hv, layer):
            Wl = trw_ref[layer]                                        # (E, 6E) bf16
            Vl = trv_ref[layer]                                        # (8, 3E) f32
            ln1g, ln1b = Vl[0:1, :E], Vl[1:2, :E]
            b_qkv = Vl[2:3, :]                    # (1, 3E); q part pre-scaled by 1/sqrt(E)
            bo = Vl[3:4, :E]
            ln2g, ln2b = Vl[4:5, :E], Vl[5:6, :E]
            bc1, bc2 = Vl[6:7, :E], Vl[7:8, :E]
            Wqkv = Wl[:, 0:3 * E]                 # q columns pre-scaled by 1/sqrt(E)
            Wo = Wl[:, 3 * E:4 * E]
            Wc1 = Wl[:, 4 * E:5 * E]
            Wc2 = Wl[:, 5 * E:6 * E]

            # ---- attention sub-layer ----
            hn = layer_norm(hv, ln1g, ln1b)
            qkv = jnp.dot(hn.astype(bf16), Wqkv, preferred_element_type=f32) + b_qkv
            q = qkv[:, 0:E].astype(bf16)
            k = qkv[:, E:2 * E].astype(bf16)
            v = qkv[:, 2 * E:3 * E].astype(bf16)
            s = jax.lax.dot_general(q, k, (((1,), (1,)), ((), ())),
                                    preferred_element_type=f32) + add_mask   # (L, L)
            s = s - jnp.max(s, axis=-1, keepdims=True)
            p = jnp.exp(s)
            denom = jnp.sum(p, axis=-1, keepdims=True)
            if approx_softmax:
                attn = p * pl.reciprocal(denom, approx=True)           # EUP slot
            else:
                attn = p / denom
            ao = jnp.dot(attn.astype(bf16), v, preferred_element_type=f32)
            ao = jnp.dot(ao.astype(bf16), Wo, preferred_element_type=f32) + bo
            hv = hv + ao

            # ---- pointwise feed-forward sub-layer (1x1 convs == matmuls) ----
            h2 = layer_norm(hv, ln2g, ln2b)
            y = jnp.dot(h2.astype(bf16), Wc1, preferred_element_type=f32) + bc1
            y = jnp.maximum(y, 0.0)
            y = jnp.dot(y.astype(bf16), Wc2, preferred_element_type=f32) + bc2
            if pffn_residual:
                y = y + h2
            return hv + y

        # ---- U-Net encoder ----
        x1 = h
        h = conv_stage(h, 0)
        x2 = h
        h = conv_stage(h, 1)
        x3 = h
        h = conv_stage(h, 2)

        # ---- transformer bottleneck ----
        if n_layer <= 4:
            for layer in range(n_layer):
                h = transformer_layer(h, layer)
        else:
            # bounded live ranges for deep stacks
            h = jax.lax.fori_loop(0, n_layer,
                                  lambda l, hv: transformer_layer(hv, l), h)

        # ---- U-Net decoder with skip connections ----
        h = conv_stage(h, 3) + x3
        h = conv_stage(h, 4) + x2
        h = conv_stage(h, 5) + x1

        # lane-dense store of the full CMAX channels; wrapper slices back to C_in
        o_ref[...] = h

    return kernel


# ----------------------------------------------------------------------------
# UET forward: pack params into slabs, run the fused kernel with a parallel B grid
# ----------------------------------------------------------------------------
def uet_forward(x, params, config, *, approx_softmax=True):
    B, L, C1 = x.shape
    K = int(config["kernel_size"])
    pad = int(config["padding"])
    assert config["stride"] == 1 and 2 * pad == K - 1, \
        "UET skip connections require stride=1 'same' convolutions"
    widths = (config["emb_1"], config["emb_2"], config["emb_3"], config["emb_4"])
    E = config["emb_4"]
    CMAX = E
    assert C1 == config["emb_1"] and max(widths) == CMAX, \
        "channel-padding scheme requires emb_4 >= emb_1, emb_2, emb_3"
    assert config["n_head"] == 1, "the (B,N,N) float mask implies single-head attention"
    n_layer = len(params["blocks"])

    # ----- pack the 6 conv stages into two slabs (zero-padded to CMAX channels) -----
    stage_defs = [
        (params["enc1"], widths[0], widths[1]),
        (params["enc2"], widths[1], widths[2]),
        (params["enc3"], widths[2], widths[3]),
        (params["dec1"], widths[3], widths[2]),
        (params["dec2"], widths[2], widths[1]),
        (params["dec3"], widths[1], widths[0]),
    ]
    conv_w, conv_ss = [], []
    for p, cin, cout in stage_defs:
        wt = jnp.transpose(p["w"].astype(jnp.float32), (2, 1, 0))       # (K, cin, cout)
        wt = jnp.pad(wt, ((0, 0), (0, CMAX - cin), (0, CMAX - cout)))
        conv_w.append(wt.reshape(K * CMAX, CMAX))                       # per-tap weights
        scale = p["gamma"] / jnp.sqrt(p["rvar"] + BN_EPS)               # eval-mode BN
        shift = p["beta"] - p["rmean"] * scale + p["b"] * scale         # + folded conv bias
        conv_ss.append(jnp.stack([jnp.pad(scale, (0, CMAX - cout)),
                                  jnp.pad(shift, (0, CMAX - cout))]))
    conv_w = jnp.stack(conv_w).astype(jnp.bfloat16)                     # (6, K*CMAX, CMAX)
    conv_ss = jnp.stack(conv_ss).astype(jnp.float32)                    # (6, 2, CMAX)

    # ----- pack per-layer transformer params (attn scale folded into q weight/bias) ----
    attn_scale = 1.0 / math.sqrt(E)                                     # n_head = 1
    q_scale = jnp.concatenate([jnp.full((E,), attn_scale, jnp.float32),
                               jnp.ones((2 * E,), jnp.float32)])
    trw, trv = [], []
    for lp in params["blocks"]:
        Wqkv = lp["in_proj_w"].astype(jnp.float32).T * q_scale[None, :]  # (E, 3E)
        Wo = lp["out_w"].astype(jnp.float32).T                           # (E, E)
        Wc1 = lp["c1_w"][:, :, 0].astype(jnp.float32).T                  # (E, E)
        Wc2 = lp["c2_w"][:, :, 0].astype(jnp.float32).T                  # (E, E)
        trw.append(jnp.concatenate([Wqkv, Wo, Wc1, Wc2], axis=1))        # (E, 6E)

        def vrow(v):
            v = v.astype(jnp.float32)
            return jnp.pad(v, (0, 3 * E - v.shape[0]))
        trv.append(jnp.stack([
            vrow(lp["ln1_g"]), vrow(lp["ln1_b"]),
            lp["in_proj_b"].astype(jnp.float32) * q_scale,               # scaled qkv bias
            vrow(lp["out_b"]),
            vrow(lp["ln2_g"]), vrow(lp["ln2_b"]),
            vrow(lp["c1_b"]), vrow(lp["c2_b"]),
        ]))                                                              # (8, 3E)
    trw = jnp.stack(trw).astype(jnp.bfloat16)                            # (n_layer, E, 6E)
    trv = jnp.stack(trv).astype(jnp.float32)                             # (n_layer, 8, 3E)

    kernel = make_uet_kernel(
        L=L, C_in=C1, CMAX=CMAX, K=K, pad=pad,
        n_layer=n_layer,
        neg_slope=float(config["negative_slope"]),
        pffn_residual=bool(config["pffn_residual"]),
        approx_softmax=approx_softmax,
    )

    # explicit scoped-VMEM budget sized from the problem (portable across 64/128 MiB parts)
    weight_bytes = (conv_w.size * 2 + conv_ss.size * 4 + trw.size * 2 + trv.size * 4)
    act_bytes = L * CMAX * 4
    need = (2 * weight_bytes                          # double-buffered param slabs
            + 2 * (L * C1 * 4 + L * CMAX * 4)         # double-buffered io blocks
            + 3 * L * L * 4                           # attention scores / probs / weights
            + 16 * act_bytes)                         # skips + per-layer temporaries
    vmem_limit = int(min(max(2 * need + (4 << 20), 32 << 20), 64 << 20))

    out = pl.pallas_call(
        kernel,
        out_shape=jax.ShapeDtypeStruct((B, L, CMAX), jnp.float32),
        grid=(B,),
        in_specs=[
            pl.BlockSpec((None, L, C1), lambda b: (b, 0, 0)),            # per-batch input
            pl.BlockSpec(conv_w.shape, lambda b: (0, 0, 0)),             # resident slabs
            pl.BlockSpec(conv_ss.shape, lambda b: (0, 0, 0)),
            pl.BlockSpec(trw.shape, lambda b: (0, 0, 0)),
            pl.BlockSpec(trv.shape, lambda b: (0, 0, 0)),
        ],
        out_specs=pl.BlockSpec((None, L, CMAX), lambda b: (b, 0, 0)),    # lane-dense store
        compiler_params=pltpu.CompilerParams(
            dimension_semantics=("parallel",),
            vmem_limit_bytes=vmem_limit,
        ),
    )(x.astype(jnp.float32), conv_w, conv_ss, trw, trv)

    # only the first C_in channels are real (rest are zero padding) — cheap XLA slice
    return out[:, :, :C1]


# ----------------------------------------------------------------------------
# Deterministic parameter initialization
# ----------------------------------------------------------------------------
def init_conv_block(key, cin, cout, K):
    ks = jax.random.split(key, 6)
    s = 1.0 / math.sqrt(cin * K)
    return dict(
        w=jax.random.normal(ks[0], (cout, cin, K), jnp.float32) * s,
        b=jax.random.normal(ks[1], (cout,), jnp.float32) * 0.05,
        gamma=1.0 + 0.1 * jax.random.normal(ks[2], (cout,), jnp.float32),
        beta=0.1 * jax.random.normal(ks[3], (cout,), jnp.float32),
        rmean=0.1 * jax.random.normal(ks[4], (cout,), jnp.float32),
        rvar=1.0 + 0.1 * jnp.abs(jax.random.normal(ks[5], (cout,), jnp.float32)),
    )


def init_transformer_layer(key, E):
    ks = jax.random.split(key, 12)
    s = 1.0 / math.sqrt(E)
    return dict(
        ln1_g=1.0 + 0.05 * jax.random.normal(ks[0], (E,), jnp.float32),
        ln1_b=0.05 * jax.random.normal(ks[1], (E,), jnp.float32),
        in_proj_w=jax.random.normal(ks[2], (3 * E, E), jnp.float32) * s,
        in_proj_b=0.02 * jax.random.normal(ks[3], (3 * E,), jnp.float32),
        out_w=jax.random.normal(ks[4], (E, E), jnp.float32) * s,
        out_b=0.02 * jax.random.normal(ks[5], (E,), jnp.float32),
        ln2_g=1.0 + 0.05 * jax.random.normal(ks[6], (E,), jnp.float32),
        ln2_b=0.05 * jax.random.normal(ks[7], (E,), jnp.float32),
        c1_w=jax.random.normal(ks[8], (E, E, 1), jnp.float32) * s,
        c1_b=0.02 * jax.random.normal(ks[9], (E,), jnp.float32),
        c2_w=jax.random.normal(ks[10], (E, E, 1), jnp.float32) * s,
        c2_b=0.02 * jax.random.normal(ks[11], (E,), jnp.float32),
    )


if __name__ == "__main__":
    config = dict(
        emb_1=8, emb_2=16, emb_3=32, emb_4=32,
        kernel_size=3, stride=1, padding=1,
        n_layer=2, n_head=1,                        # n_head=1 so the (B,N,N) float mask is valid
        unet_dropout=0.1, transformer_dropout=0.1,  # identity in eval mode
        negative_slope=0.01, pffn_residual=True,
    )
    B, L = 2, 16

    root = jax.random.PRNGKey(0)
    keys = jax.random.split(root, 17)
    params = dict(
        enc1=init_conv_block(keys[0], config["emb_1"], config["emb_2"], config["kernel_size"]),
        enc2=init_conv_block(keys[1], config["emb_2"], config["emb_3"], config["kernel_size"]),
        enc3=init_conv_block(keys[2], config["emb_3"], config["emb_4"], config["kernel_size"]),
        dec1=init_conv_block(keys[3], config["emb_4"], config["emb_3"], config["kernel_size"]),
        dec2=init_conv_block(keys[4], config["emb_3"], config["emb_2"], config["kernel_size"]),
        dec3=init_conv_block(keys[5], config["emb_2"], config["emb_1"], config["kernel_size"]),
        blocks=[init_transformer_layer(keys[6 + i], config["emb_4"])
                for i in range(config["n_layer"])],
    )

    x = jax.random.normal(keys[16], (B, L, config["emb_1"]), jnp.float32)

    fwd = jax.jit(lambda xx, pp: uet_forward(xx, pp, config))
    out = jax.block_until_ready(fwd(x, params))
    assert out.shape == (B, L, config["emb_1"]) and out.dtype == jnp.float32
    assert bool(jnp.all(jnp.isfinite(out)))
    print("KERNEL_OK")
</pallas_src>

<mosaic_0001>
module attributes {stable_mosaic.version = 11 : i64} {
  func.func @kernel(%arg0: i32, %arg1: memref<1x16x8xf32, #tpu.memory_space<vmem>>, %arg2: memref<6x96x32xbf16, #tpu.memory_space<vmem>>, %arg3: memref<6x2x32xf32, #tpu.memory_space<vmem>>, %arg4: memref<2x32x192xbf16, #tpu.memory_space<vmem>>, %arg5: memref<2x8x96xf32, #tpu.memory_space<vmem>>, %arg6: memref<1x16x32xf32, #tpu.memory_space<vmem>>) attributes {dimension_semantics = [#tpu.dimension_semantics<parallel>], iteration_bounds = array<i64: 2>, scalar_prefetch = 0 : i64, scratch_operands = 0 : i64, tpu.core_type = #tpu.core_type<tc>, window_params = [{transform_indices = @transform_0, window_bounds = array<i64: 1, 16, 8>}, {pipeline_mode = #tpu.pipeline_mode<synchronous>, transform_indices = @transform_1, window_bounds = array<i64: 6, 96, 32>}, {pipeline_mode = #tpu.pipeline_mode<synchronous>, transform_indices = @transform_2, window_bounds = array<i64: 6, 2, 32>}, {pipeline_mode = #tpu.pipeline_mode<synchronous>, transform_indices = @transform_3, window_bounds = array<i64: 2, 32, 192>}, {pipeline_mode = #tpu.pipeline_mode<synchronous>, transform_indices = @transform_4, window_bounds = array<i64: 2, 8, 96>}, {transform_indices = @transform_5, window_bounds = array<i64: 1, 16, 32>}]} {
    %c0 = arith.constant 0 : index
    %c0_0 = arith.constant 0 : index
    %c0_1 = arith.constant 0 : index
    %0 = vector.load %arg1[%c0, %c0_0, %c0_1] : memref<1x16x8xf32, #tpu.memory_space<vmem>>, vector<1x16x8xf32>
    %1 = vector.shape_cast %0 : vector<1x16x8xf32> to vector<16x8xf32>
    %cst = arith.constant 0.000000e+00 : f32
    %2 = vector.broadcast %cst : f32 to vector<16x24xf32>
    %3 = tpu.concatenate %1, %2 in 1 : vector<16x8xf32>, vector<16x24xf32> -> vector<16x32xf32>
    %4 = tpu.iota {dimensions = array<i32: 0>} : vector<16x1xi32>
    %c1_i32 = arith.constant 1 : i32
    %5 = vector.broadcast %c1_i32 : i32 to vector<16x1xi32>
    %6 = arith.cmpi sge, %4, %5 : vector<16x1xi32>
    %c15_i32 = arith.constant 15 : i32
    %7 = vector.broadcast %c15_i32 : i32 to vector<16x1xi32>
    %8 = arith.cmpi slt, %4, %7 : vector<16x1xi32>
    %9 = tpu.iota {dimensions = array<i32: 0>} : vector<16x16xi32>
    %10 = tpu.iota {dimensions = array<i32: 1>} : vector<16x16xi32>
    %11 = arith.cmpi sle, %10, %9 : vector<16x16xi32>
    %cst_2 = arith.constant 1.000000e+00 : f32
    %cst_3 = arith.constant 0.000000e+00 : f32
    %12 = vector.broadcast %cst_2 : f32 to vector<16x16xf32>
    %13 = vector.broadcast %cst_3 : f32 to vector<16x16xf32>
    %14 = arith.select %11, %12, %13 : vector<16x16xi1>, vector<16x16xf32>
    %c0_4 = arith.constant 0 : index
    %c0_5 = arith.constant 0 : index
    %c0_6 = arith.constant 0 : index
    %15 = vector.load %arg2[%c0_4, %c0_5, %c0_6] : memref<6x96x32xbf16, #tpu.memory_space<vmem>>, vector<1x96x32xbf16>
    %16 = vector.shape_cast %15 : vector<1x96x32xbf16> to vector<96x32xbf16>
    %c0_7 = arith.constant 0 : index
    %c0_8 = arith.constant 0 : index
    %c0_9 = arith.constant 0 : index
    %17 = vector.load %arg3[%c0_7, %c0_8, %c0_9] : memref<6x2x32xf32, #tpu.memory_space<vmem>>, vector<1x2x32xf32>
    %18 = vector.shape_cast %17 : vector<1x2x32xf32> to vector<2x32xf32>
    %cst_10 = arith.constant 0.000000e+00 : f32
    %19 = vector.broadcast %cst_10 : f32 to vector<16x32xf32>
    %20 = vector.extract_strided_slice %16 {offsets = [0, 0], sizes = [32, 32], strides = [1, 1]} : vector<96x32xbf16> to vector<32x32xbf16>
    %c1_i32_11 = arith.constant 1 : i32
    %21 = tpu.dynamic_rotate %3 by %c1_i32_11 dim 0 : vector<16x32xf32>, i32 -> vector<16x32xf32>
    %cst_12 = arith.constant 0.000000e+00 : f32
    %22 = vector.shape_cast %6 : vector<16x1xi1> to vector<16x1xi1>
    %23 = vector.broadcast %22 : vector<16x1xi1> to vector<16x32xi1>
    %24 = vector.broadcast %cst_12 : f32 to vector<16x32xf32>
    %25 = arith.select %23, %21, %24 : vector<16x32xi1>, vector<16x32xf32>
    %26 = arith.truncf %25 : vector<16x32xf32> to vector<16x32xbf16>
    %cst_13 = arith.constant dense<0.000000e+00> : vector<16x32xf32>
    %27 = tpu.matmul %26, %20, %cst_13 {dimension_numbers = #tpu.dot_dimension_numbers<[1], [0], [0], [1], [0, 0, 1, 1], [], []>} : vector<16x32xbf16>, vector<32x32xbf16>, vector<16x32xf32> -> vector<16x32xf32>
    %28 = arith.addf %19, %27 : vector<16x32xf32>
    %29 = vector.extract_strided_slice %16 {offsets = [32, 0], sizes = [32, 32], strides = [1, 1]} : vector<96x32xbf16> to vector<32x32xbf16>
    %30 = arith.truncf %3 : vector<16x32xf32> to vector<16x32xbf16>
    %cst_14 = arith.constant dense<0.000000e+00> : vector<16x32xf32>
    %31 = tpu.matmul %30, %29, %cst_14 {dimension_numbers = #tpu.dot_dimension_numbers<[1], [0], [0], [1], [0, 0, 1, 1], [], []>} : vector<16x32xbf16>, vector<32x32xbf16>, vector<16x32xf32> -> vector<16x32xf32>
    %32 = arith.addf %28, %31 : vector<16x32xf32>
    %33 = vector.extract_strided_slice %16 {offsets = [64, 0], sizes = [32, 32], strides = [1, 1]} : vector<96x32xbf16> to vector<32x32xbf16>
    %c15_i32_15 = arith.constant 15 : i32
    %34 = tpu.dynamic_rotate %3 by %c15_i32_15 dim 0 : vector<16x32xf32>, i32 -> vector<16x32xf32>
    %cst_16 = arith.constant 0.000000e+00 : f32
    %35 = vector.shape_cast %8 : vector<16x1xi1> to vector<16x1xi1>
    %36 = vector.broadcast %35 : vector<16x1xi1> to vector<16x32xi1>
    %37 = vector.broadcast %cst_16 : f32 to vector<16x32xf32>
    %38 = arith.select %36, %34, %37 : vector<16x32xi1>, vector<16x32xf32>
    %39 = arith.truncf %38 : vector<16x32xf32> to vector<16x32xbf16>
    %cst_17 = arith.constant dense<0.000000e+00> : vector<16x32xf32>
    %40 = tpu.matmul %39, %33, %cst_17 {dimension_numbers = #tpu.dot_dimension_numbers<[1], [0], [0], [1], [0, 0, 1, 1], [], []>} : vector<16x32xbf16>, vector<32x32xbf16>, vector<16x32xf32> -> vector<16x32xf32>
    %41 = arith.addf %32, %40 : vector<16x32xf32>
    %42 = vector.extract_strided_slice %18 {offsets = [0, 0], sizes = [1, 32], strides = [1, 1]} : vector<2x32xf32> to vector<1x32xf32>
    %43 = vector.broadcast %42 : vector<1x32xf32> to vector<16x32xf32>
    %44 = arith.mulf %41, %43 : vector<16x32xf32>
    %45 = vector.extract_strided_slice %18 {offsets = [1, 0], sizes = [1, 32], strides = [1, 1]} : vector<2x32xf32> to vector<1x32xf32>
    %46 = vector.broadcast %45 : vector<1x32xf32> to vector<16x32xf32>
    %47 = arith.addf %44, %46 : vector<16x32xf32>
    %cst_18 = arith.constant 0.000000e+00 : f32
    %48 = vector.broadcast %cst_18 : f32 to vector<16x32xf32>
    %49 = arith.cmpf oge, %47, %48 : vector<16x32xf32>
    %cst_19 = arith.constant 0.00999999977 : f32
    %50 = vector.broadcast %cst_19 : f32 to vector<16x32xf32>
    %51 = arith.mulf %50, %47 : vector<16x32xf32>
    %52 = arith.select %49, %47, %51 : vector<16x32xi1>, vector<16x32xf32>
    %c1 = arith.constant 1 : index
    %c0_20 = arith.constant 0 : index
    %c0_21 = arith.constant 0 : index
    %53 = vector.load %arg2[%c1, %c0_20, %c0_21] : memref<6x96x32xbf16, #tpu.memory_space<vmem>>, vector<1x96x32xbf16>
    %54 = vector.shape_cast %53 : vector<1x96x32xbf16> to vector<96x32xbf16>
    %c1_22 = arith.constant 1 : index
    %c0_23 = arith.constant 0 : index
    %c0_24 = arith.constant 0 : index
    %55 = vector.load %arg3[%c1_22, %c0_23, %c0_24] : memref<6x2x32xf32, #tpu.memory_space<vmem>>, vector<1x2x32xf32>
    %56 = vector.shape_cast %55 : vector<1x2x32xf32> to vector<2x32xf32>
    %cst_25 = arith.constant 0.000000e+00 : f32
    %57 = vector.broadcast %cst_25 : f32 to vector<16x32xf32>
    %58 = vector.extract_strided_slice %54 {offsets = [0, 0], sizes = [32, 32], strides = [1, 1]} : vector<96x32xbf16> to vector<32x32xbf16>
    %c1_i32_26 = arith.constant 1 : i32
    %59 = tpu.dynamic_rotate %52 by %c1_i32_26 dim 0 : vector<16x32xf32>, i32 -> vector<16x32xf32>
    %cst_27 = arith.constant 0.000000e+00 : f32
    %60 = vector.shape_cast %6 : vector<16x1xi1> to vector<16x1xi1>
    %61 = vector.broadcast %60 : vector<16x1xi1> to vector<16x32xi1>
    %62 = vector.broadcast %cst_27 : f32 to vector<16x32xf32>
    %63 = arith.select %61, %59, %62 : vector<16x32xi1>, vector<16x32xf32>
    %64 = arith.truncf %63 : vector<16x32xf32> to vector<16x32xbf16>
    %cst_28 = arith.constant dense<0.000000e+00> : vector<16x32xf32>
    %65 = tpu.matmul %64, %58, %cst_28 {dimension_numbers = #tpu.dot_dimension_numbers<[1], [0], [0], [1], [0, 0, 1, 1], [], []>} : vector<16x32xbf16>, vector<32x32xbf16>, vector<16x32xf32> -> vector<16x32xf32>
    %66 = arith.addf %57, %65 : vector<16x32xf32>
    %67 = vector.extract_strided_slice %54 {offsets = [32, 0], sizes = [32, 32], strides = [1, 1]} : vector<96x32xbf16> to vector<32x32xbf16>
    %68 = arith.truncf %52 : vector<16x32xf32> to vector<16x32xbf16>
    %cst_29 = arith.constant dense<0.000000e+00> : vector<16x32xf32>
    %69 = tpu.matmul %68, %67, %cst_29 {dimension_numbers = #tpu.dot_dimension_numbers<[1], [0], [0], [1], [0, 0, 1, 1], [], []>} : vector<16x32xbf16>, vector<32x32xbf16>, vector<16x32xf32> -> vector<16x32xf32>
    %70 = arith.addf %66, %69 : vector<16x32xf32>
    %71 = vector.extract_strided_slice %54 {offsets = [64, 0], sizes = [32, 32], strides = [1, 1]} : vector<96x32xbf16> to vector<32x32xbf16>
    %c15_i32_30 = arith.constant 15 : i32
    %72 = tpu.dynamic_rotate %52 by %c15_i32_30 dim 0 : vector<16x32xf32>, i32 -> vector<16x32xf32>
    %cst_31 = arith.constant 0.000000e+00 : f32
    %73 = vector.shape_cast %8 : vector<16x1xi1> to vector<16x1xi1>
    %74 = vector.broadcast %73 : vector<16x1xi1> to vector<16x32xi1>
    %75 = vector.broadcast %cst_31 : f32 to vector<16x32xf32>
    %76 = arith.select %74, %72, %75 : vector<16x32xi1>, vector<16x32xf32>
    %77 = arith.truncf %76 : vector<16x32xf32> to vector<16x32xbf16>
    %cst_32 = arith.constant dense<0.000000e+00> : vector<16x32xf32>
    %78 = tpu.matmul %77, %71, %cst_32 {dimension_numbers = #tpu.dot_dimension_numbers<[1], [0], [0], [1], [0, 0, 1, 1], [], []>} : vector<16x32xbf16>, vector<32x32xbf16>, vector<16x32xf32> -> vector<16x32xf32>
    %79 = arith.addf %70, %78 : vector<16x32xf32>
    %80 = vector.extract_strided_slice %56 {offsets = [0, 0], sizes = [1, 32], strides = [1, 1]} : vector<2x32xf32> to vector<1x32xf32>
    %81 = vector.broadcast %80 : vector<1x32xf32> to vector<16x32xf32>
    %82 = arith.mulf %79, %81 : vector<16x32xf32>
    %83 = vector.extract_strided_slice %56 {offsets = [1, 0], sizes = [1, 32], strides = [1, 1]} : vector<2x32xf32> to vector<1x32xf32>
    %84 = vector.broadcast %83 : vector<1x32xf32> to vector<16x32xf32>
    %85 = arith.addf %82, %84 : vector<16x32xf32>
    %cst_33 = arith.constant 0.000000e+00 : f32
    %86 = vector.broadcast %cst_33 : f32 to vector<16x32xf32>
    %87 = arith.cmpf oge, %85, %86 : vector<16x32xf32>
    %cst_34 = arith.constant 0.00999999977 : f32
    %88 = vector.broadcast %cst_34 : f32 to vector<16x32xf32>
    %89 = arith.mulf %88, %85 : vector<16x32xf32>
    %90 = arith.select %87, %85, %89 : vector<16x32xi1>, vector<16x32xf32>
    %c2 = arith.constant 2 : index
    %c0_35 = arith.constant 0 : index
    %c0_36 = arith.constant 0 : index
    %91 = vector.load %arg2[%c2, %c0_35, %c0_36] : memref<6x96x32xbf16, #tpu.memory_space<vmem>>, vector<1x96x32xbf16>
    %92 = vector.shape_cast %91 : vector<1x96x32xbf16> to vector<96x32xbf16>
    %c2_37 = arith.constant 2 : index
    %c0_38 = arith.constant 0 : index
    %c0_39 = arith.constant 0 : index
    %93 = vector.load %arg3[%c2_37, %c0_38, %c0_39] : memref<6x2x32xf32, #tpu.memory_space<vmem>>, vector<1x2x32xf32>
    %94 = vector.shape_cast %93 : vector<1x2x32xf32> to vector<2x32xf32>
    %cst_40 = arith.constant 0.000000e+00 : f32
    %95 = vector.broadcast %cst_40 : f32 to vector<16x32xf32>
    %96 = vector.extract_strided_slice %92 {offsets = [0, 0], sizes = [32, 32], strides = [1, 1]} : vector<96x32xbf16> to vector<32x32xbf16>
    %c1_i32_41 = arith.constant 1 : i32
    %97 = tpu.dynamic_rotate %90 by %c1_i32_41 dim 0 : vector<16x32xf32>, i32 -> vector<16x32xf32>
    %cst_42 = arith.constant 0.000000e+00 : f32
    %98 = vector.shape_cast %6 : vector<16x1xi1> to vector<16x1xi1>
    %99 = vector.broadcast %98 : vector<16x1xi1> to vector<16x32xi1>
    %100 = vector.broadcast %cst_42 : f32 to vector<16x32xf32>
    %101 = arith.select %99, %97, %100 : vector<16x32xi1>, vector<16x32xf32>
    %102 = arith.truncf %101 : vector<16x32xf32> to vector<16x32xbf16>
    %cst_43 = arith.constant dense<0.000000e+00> : vector<16x32xf32>
    %103 = tpu.matmul %102, %96, %cst_43 {dimension_numbers = #tpu.dot_dimension_numbers<[1], [0], [0], [1], [0, 0, 1, 1], [], []>} : vector<16x32xbf16>, vector<32x32xbf16>, vector<16x32xf32> -> vector<16x32xf32>
    %104 = arith.addf %95, %103 : vector<16x32xf32>
    %105 = vector.extract_strided_slice %92 {offsets = [32, 0], sizes = [32, 32], strides = [1, 1]} : vector<96x32xbf16> to vector<32x32xbf16>
    %106 = arith.truncf %90 : vector<16x32xf32> to vector<16x32xbf16>
    %cst_44 = arith.constant dense<0.000000e+00> : vector<16x32xf32>
    %107 = tpu.matmul %106, %105, %cst_44 {dimension_numbers = #tpu.dot_dimension_numbers<[1], [0], [0], [1], [0, 0, 1, 1], [], []>} : vector<16x32xbf16>, vector<32x32xbf16>, vector<16x32xf32> -> vector<16x32xf32>
    %108 = arith.addf %104, %107 : vector<16x32xf32>
    %109 = vector.extract_strided_slice %92 {offsets = [64, 0], sizes = [32, 32], strides = [1, 1]} : vector<96x32xbf16> to vector<32x32xbf16>
    %c15_i32_45 = arith.constant 15 : i32
    %110 = tpu.dynamic_rotate %90 by %c15_i32_45 dim 0 : vector<16x32xf32>, i32 -> vector<16x32xf32>
    %cst_46 = arith.constant 0.000000e+00 : f32
    %111 = vector.shape_cast %8 : vector<16x1xi1> to vector<16x1xi1>
    %112 = vector.broadcast %111 : vector<16x1xi1> to vector<16x32xi1>
    %113 = vector.broadcast %cst_46 : f32 to vector<16x32xf32>
    %114 = arith.select %112, %110, %113 : vector<16x32xi1>, vector<16x32xf32>
    %115 = arith.truncf %114 : vector<16x32xf32> to vector<16x32xbf16>
    %cst_47 = arith.constant dense<0.000000e+00> : vector<16x32xf32>
    %116 = tpu.matmul %115, %109, %cst_47 {dimension_numbers = #tpu.dot_dimension_numbers<[1], [0], [0], [1], [0, 0, 1, 1], [], []>} : vector<16x32xbf16>, vector<32x32xbf16>, vector<16x32xf32> -> vector<16x32xf32>
    %117 = arith.addf %108, %116 : vector<16x32xf32>
    %118 = vector.extract_strided_slice %94 {offsets = [0, 0], sizes = [1, 32], strides = [1, 1]} : vector<2x32xf32> to vector<1x32xf32>
    %119 = vector.broadcast %118 : vector<1x32xf32> to vector<16x32xf32>
    %120 = arith.mulf %117, %119 : vector<16x32xf32>
    %121 = vector.extract_strided_slice %94 {offsets = [1, 0], sizes = [1, 32], strides = [1, 1]} : vector<2x32xf32> to vector<1x32xf32>
    %122 = vector.broadcast %121 : vector<1x32xf32> to vector<16x32xf32>
    %123 = arith.addf %120, %122 : vector<16x32xf32>
    %cst_48 = arith.constant 0.000000e+00 : f32
    %124 = vector.broadcast %cst_48 : f32 to vector<16x32xf32>
    %125 = arith.cmpf oge, %123, %124 : vector<16x32xf32>
    %cst_49 = arith.constant 0.00999999977 : f32
    %126 = vector.broadcast %cst_49 : f32 to vector<16x32xf32>
    %127 = arith.mulf %126, %123 : vector<16x32xf32>
    %128 = arith.select %125, %123, %127 : vector<16x32xi1>, vector<16x32xf32>
    %c0_50 = arith.constant 0 : index
    %c0_51 = arith.constant 0 : index
    %c0_52 = arith.constant 0 : index
    %129 = vector.load %arg4[%c0_50, %c0_51, %c0_52] : memref<2x32x192xbf16, #tpu.memory_space<vmem>>, vector<1x32x192xbf16>
    %130 = vector.shape_cast %129 : vector<1x32x192xbf16> to vector<32x192xbf16>
    %c0_53 = arith.constant 0 : index
    %c0_54 = arith.constant 0 : index
    %c0_55 = arith.constant 0 : index
    %131 = vector.load %arg5[%c0_53, %c0_54, %c0_55] : memref<2x8x96xf32, #tpu.memory_space<vmem>>, vector<1x8x96xf32>
    %132 = vector.shape_cast %131 : vector<1x8x96xf32> to vector<8x96xf32>
    %133 = vector.extract_strided_slice %132 {offsets = [0, 0], sizes = [1, 32], strides = [1, 1]} : vector<8x96xf32> to vector<1x32xf32>
    %134 = vector.extract_strided_slice %132 {offsets = [1, 0], sizes = [1, 32], strides = [1, 1]} : vector<8x96xf32> to vector<1x32xf32>
    %135 = vector.extract_strided_slice %132 {offsets = [2, 0], sizes = [1, 96], strides = [1, 1]} : vector<8x96xf32> to vector<1x96xf32>
    %136 = vector.extract_strided_slice %132 {offsets = [3, 0], sizes = [1, 32], strides = [1, 1]} : vector<8x96xf32> to vector<1x32xf32>
    %137 = vector.extract_strided_slice %132 {offsets = [4, 0], sizes = [1, 32], strides = [1, 1]} : vector<8x96xf32> to vector<1x32xf32>
    %138 = vector.extract_strided_slice %132 {offsets = [5, 0], sizes = [1, 32], strides = [1, 1]} : vector<8x96xf32> to vector<1x32xf32>
    %139 = vector.extract_strided_slice %132 {offsets = [6, 0], sizes = [1, 32], strides = [1, 1]} : vector<8x96xf32> to vector<1x32xf32>
    %140 = vector.extract_strided_slice %132 {offsets = [7, 0], sizes = [1, 32], strides = [1, 1]} : vector<8x96xf32> to vector<1x32xf32>
    %141 = vector.extract_strided_slice %130 {offsets = [0, 0], sizes = [32, 96], strides = [1, 1]} : vector<32x192xbf16> to vector<32x96xbf16>
    %142 = vector.extract_strided_slice %130 {offsets = [0, 96], sizes = [32, 32], strides = [1, 1]} : vector<32x192xbf16> to vector<32x32xbf16>
    %143 = vector.extract_strided_slice %130 {offsets = [0, 128], sizes = [32, 32], strides = [1, 1]} : vector<32x192xbf16> to vector<32x32xbf16>
    %144 = vector.extract_strided_slice %130 {offsets = [0, 160], sizes = [32, 32], strides = [1, 1]} : vector<32x192xbf16> to vector<32x32xbf16>
    %cst_56 = arith.constant dense<0.000000e+00> : vector<16xf32>
    %145 = vector.multi_reduction <add>, %128, %cst_56 [1] : vector<16x32xf32> to vector<16xf32>
    %146 = vector.shape_cast %145 : vector<16xf32> to vector<16x1xf32>
    %cst_57 = arith.constant 3.200000e+01 : f32
    %147 = vector.broadcast %cst_57 : f32 to vector<16x1xf32>
    %148 = arith.divf %146, %147 : vector<16x1xf32>
    %149 = vector.broadcast %148 : vector<16x1xf32> to vector<16x32xf32>
    %150 = arith.subf %128, %149 : vector<16x32xf32>
    %151 = arith.mulf %150, %150 : vector<16x32xf32>
    %cst_58 = arith.constant dense<0.000000e+00> : vector<16xf32>
    %152 = vector.multi_reduction <add>, %151, %cst_58 [1] : vector<16x32xf32> to vector<16xf32>
    %153 = vector.shape_cast %152 : vector<16xf32> to vector<16x1xf32>
    %cst_59 = arith.constant 3.200000e+01 : f32
    %154 = vector.broadcast %cst_59 : f32 to vector<16x1xf32>
    %155 = arith.divf %153, %154 : vector<16x1xf32>
    %156 = vector.broadcast %148 : vector<16x1xf32> to vector<16x32xf32>
    %157 = arith.subf %128, %156 : vector<16x32xf32>
    %cst_60 = arith.constant 9.99999993E-9 : f32
    %158 = vector.broadcast %cst_60 : f32 to vector<16x1xf32>
    %159 = arith.addf %155, %158 : vector<16x1xf32>
    %160 = math.rsqrt %159 : vector<16x1xf32>
    %161 = vector.broadcast %160 : vector<16x1xf32> to vector<16x32xf32>
    %162 = arith.mulf %157, %161 : vector<16x32xf32>
    %163 = vector.broadcast %133 : vector<1x32xf32> to vector<16x32xf32>
    %164 = arith.mulf %162, %163 : vector<16x32xf32>
    %165 = vector.broadcast %134 : vector<1x32xf32> to vector<16x32xf32>
    %166 = arith.addf %164, %165 : vector<16x32xf32>
    %167 = arith.truncf %166 : vector<16x32xf32> to vector<16x32xbf16>
    %cst_61 = arith.constant dense<0.000000e+00> : vector<16x96xf32>
    %168 = tpu.matmul %167, %141, %cst_61 {dimension_numbers = #tpu.dot_dimension_numbers<[1], [0], [0], [1], [0, 0, 1, 1], [], []>} : vector<16x32xbf16>, vector<32x96xbf16>, vector<16x96xf32> -> vector<16x96xf32>
    %169 = vector.broadcast %135 : vector<1x96xf32> to vector<16x96xf32>
    %170 = arith.addf %168, %169 : vector<16x96xf32>
    %171 = vector.extract_strided_slice %170 {offsets = [0, 0], sizes = [16, 32], strides = [1, 1]} : vector<16x96xf32> to vector<16x32xf32>
    %172 = arith.truncf %171 : vector<16x32xf32> to vector<16x32xbf16>
    %173 = vector.extract_strided_slice %170 {offsets = [0, 32], sizes = [16, 32], strides = [1, 1]} : vector<16x96xf32> to vector<16x32xf32>
    %174 = arith.truncf %173 : vector<16x32xf32> to vector<16x32xbf16>
    %175 = vector.extract_strided_slice %170 {offsets = [0, 64], sizes = [16, 32], strides = [1, 1]} : vector<16x96xf32> to vector<16x32xf32>
    %176 = arith.truncf %175 : vector<16x32xf32> to vector<16x32xbf16>
    %cst_62 = arith.constant dense<0.000000e+00> : vector<16x16xf32>
    %177 = tpu.matmul %172, %174, %cst_62 {dimension_numbers = #tpu.dot_dimension_numbers<[1], [1], [0], [0], [0, 0, 1, 0], [], []>} : vector<16x32xbf16>, vector<16x32xbf16>, vector<16x16xf32> -> vector<16x16xf32>
    %178 = arith.addf %177, %14 : vector<16x16xf32>
    %cst_63 = arith.constant dense<0xFF800000> : vector<16xf32>
    %179 = vector.multi_reduction <maximumf>, %178, %cst_63 [1] : vector<16x16xf32> to vector<16xf32>
    %180 = vector.shape_cast %179 : vector<16xf32> to vector<16x1xf32>
    %181 = vector.broadcast %180 : vector<16x1xf32> to vector<16x16xf32>
    %182 = arith.subf %178, %181 : vector<16x16xf32>
    %183 = math.exp %182 : vector<16x16xf32>
    %cst_64 = arith.constant dense<0.000000e+00> : vector<16xf32>
    %184 = vector.multi_reduction <add>, %183, %cst_64 [1] : vector<16x16xf32> to vector<16xf32>
    %185 = vector.shape_cast %184 : vector<16xf32> to vector<16x1xf32>
    %186 = tpu.reciprocal %185 {approx = true} : vector<16x1xf32> -> vector<16x1xf32>
    %187 = vector.broadcast %186 : vector<16x1xf32> to vector<16x16xf32>
    %188 = arith.mulf %183, %187 : vector<16x16xf32>
    %189 = arith.truncf %188 : vector<16x16xf32> to vector<16x16xbf16>
    %cst_65 = arith.constant dense<0.000000e+00> : vector<16x32xf32>
    %190 = tpu.matmul %189, %176, %cst_65 {dimension_numbers = #tpu.dot_dimension_numbers<[1], [0], [0], [1], [0, 0, 1, 1], [], []>} : vector<16x16xbf16>, vector<16x32xbf16>, vector<16x32xf32> -> vector<16x32xf32>
    %191 = arith.truncf %190 : vector<16x32xf32> to vector<16x32xbf16>
    %cst_66 = arith.constant dense<0.000000e+00> : vector<16x32xf32>
    %192 = tpu.matmul %191, %142, %cst_66 {dimension_numbers = #tpu.dot_dimension_numbers<[1], [0], [0], [1], [0, 0, 1, 1], [], []>} : vector<16x32xbf16>, vector<32x32xbf16>, vector<16x32xf32> -> vector<16x32xf32>
    %193 = vector.broadcast %136 : vector<1x32xf32> to vector<16x32xf32>
    %194 = arith.addf %192, %193 : vector<16x32xf32>
    %195 = arith.addf %128, %194 : vector<16x32xf32>
    %cst_67 = arith.constant dense<0.000000e+00> : vector<16xf32>
    %196 = vector.multi_reduction <add>, %195, %cst_67 [1] : vector<16x32xf32> to vector<16xf32>
    %197 = vector.shape_cast %196 : vector<16xf32> to vector<16x1xf32>
    %cst_68 = arith.constant 3.200000e+01 : f32
    %198 = vector.broadcast %cst_68 : f32 to vector<16x1xf32>
    %199 = arith.divf %197, %198 : vector<16x1xf32>
    %200 = vector.broadcast %199 : vector<16x1xf32> to vector<16x32xf32>
    %201 = arith.subf %195, %200 : vector<16x32xf32>
    %202 = arith.mulf %201, %201 : vector<16x32xf32>
    %cst_69 = arith.constant dense<0.000000e+00> : vector<16xf32>
    %203 = vector.multi_reduction <add>, %202, %cst_69 [1] : vector<16x32xf32> to vector<16xf32>
    %204 = vector.shape_cast %203 : vector<16xf32> to vector<16x1xf32>
    %cst_70 = arith.constant 3.200000e+01 : f32
    %205 = vector.broadcast %cst_70 : f32 to vector<16x1xf32>
    %206 = arith.divf %204, %205 : vector<16x1xf32>
    %207 = vector.broadcast %199 : vector<16x1xf32> to vector<16x32xf32>
    %208 = arith.subf %195, %207 : vector<16x32xf32>
    %cst_71 = arith.constant 9.99999993E-9 : f32
    %209 = vector.broadcast %cst_71 : f32 to vector<16x1xf32>
    %210 = arith.addf %206, %209 : vector<16x1xf32>
    %211 = math.rsqrt %210 : vector<16x1xf32>
    %212 = vector.broadcast %211 : vector<16x1xf32> to vector<16x32xf32>
    %213 = arith.mulf %208, %212 : vector<16x32xf32>
    %214 = vector.broadcast %137 : vector<1x32xf32> to vector<16x32xf32>
    %215 = arith.mulf %213, %214 : vector<16x32xf32>
    %216 = vector.broadcast %138 : vector<1x32xf32> to vector<16x32xf32>
    %217 = arith.addf %215, %216 : vector<16x32xf32>
    %218 = arith.truncf %217 : vector<16x32xf32> to vector<16x32xbf16>
    %cst_72 = arith.constant dense<0.000000e+00> : vector<16x32xf32>
    %219 = tpu.matmul %218, %143, %cst_72 {dimension_numbers = #tpu.dot_dimension_numbers<[1], [0], [0], [1], [0, 0, 1, 1], [], []>} : vector<16x32xbf16>, vector<32x32xbf16>, vector<16x32xf32> -> vector<16x32xf32>
    %220 = vector.broadcast %139 : vector<1x32xf32> to vector<16x32xf32>
    %221 = arith.addf %219, %220 : vector<16x32xf32>
    %cst_73 = arith.constant 0.000000e+00 : f32
    %222 = vector.broadcast %cst_73 : f32 to vector<16x32xf32>
    %223 = arith.maximumf %221, %222 : vector<16x32xf32>
    %224 = arith.truncf %223 : vector<16x32xf32> to vector<16x32xbf16>
    %cst_74 = arith.constant dense<0.000000e+00> : vector<16x32xf32>
    %225 = tpu.matmul %224, %144, %cst_74 {dimension_numbers = #tpu.dot_dimension_numbers<[1], [0], [0], [1], [0, 0, 1, 1], [], []>} : vector<16x32xbf16>, vector<32x32xbf16>, vector<16x32xf32> -> vector<16x32xf32>
    %226 = vector.broadcast %140 : vector<1x32xf32> to vector<16x32xf32>
    %227 = arith.addf %225, %226 : vector<16x32xf32>
    %228 = arith.addf %227, %217 : vector<16x32xf32>
    %229 = arith.addf %195, %228 : vector<16x32xf32>
    %c1_75 = arith.constant 1 : index
    %c0_76 = arith.constant 0 : index
    %c0_77 = arith.constant 0 : index
    %230 = vector.load %arg4[%c1_75, %c0_76, %c0_77] : memref<2x32x192xbf16, #tpu.memory_space<vmem>>, vector<1x32x192xbf16>
    %231 = vector.shape_cast %230 : vector<1x32x192xbf16> to vector<32x192xbf16>
    %c1_78 = arith.constant 1 : index
    %c0_79 = arith.constant 0 : index
    %c0_80 = arith.constant 0 : index
    %232 = vector.load %arg5[%c1_78, %c0_79, %c0_80] : memref<2x8x96xf32, #tpu.memory_space<vmem>>, vector<1x8x96xf32>
    %233 = vector.shape_cast %232 : vector<1x8x96xf32> to vector<8x96xf32>
    %234 = vector.extract_strided_slice %233 {offsets = [0, 0], sizes = [1, 32], strides = [1, 1]} : vector<8x96xf32> to vector<1x32xf32>
    %235 = vector.extract_strided_slice %233 {offsets = [1, 0], sizes = [1, 32], strides = [1, 1]} : vector<8x96xf32> to vector<1x32xf32>
    %236 = vector.extract_strided_slice %233 {offsets = [2, 0], sizes = [1, 96], strides = [1, 1]} : vector<8x96xf32> to vector<1x96xf32>
    %237 = vector.extract_strided_slice %233 {offsets = [3, 0], sizes = [1, 32], strides = [1, 1]} : vector<8x96xf32> to vector<1x32xf32>
    %238 = vector.extract_strided_slice %233 {offsets = [4, 0], sizes = [1, 32], strides = [1, 1]} : vector<8x96xf32> to vector<1x32xf32>
    %239 = vector.extract_strided_slice %233 {offsets = [5, 0], sizes = [1, 32], strides = [1, 1]} : vector<8x96xf32> to vector<1x32xf32>
    %240 = vector.extract_strided_slice %233 {offsets = [6, 0], sizes = [1, 32], strides = [1, 1]} : vector<8x96xf32> to vector<1x32xf32>
    %241 = vector.extract_strided_slice %233 {offsets = [7, 0], sizes = [1, 32], strides = [1, 1]} : vector<8x96xf32> to vector<1x32xf32>
    %242 = vector.extract_strided_slice %231 {offsets = [0, 0], sizes = [32, 96], strides = [1, 1]} : vector<32x192xbf16> to vector<32x96xbf16>
    %243 = vector.extract_strided_slice %231 {offsets = [0, 96], sizes = [32, 32], strides = [1, 1]} : vector<32x192xbf16> to vector<32x32xbf16>
    %244 = vector.extract_strided_slice %231 {offsets = [0, 128], sizes = [32, 32], strides = [1, 1]} : vector<32x192xbf16> to vector<32x32xbf16>
    %245 = vector.extract_strided_slice %231 {offsets = [0, 160], sizes = [32, 32], strides = [1, 1]} : vector<32x192xbf16> to vector<32x32xbf16>
    %cst_81 = arith.constant dense<0.000000e+00> : vector<16xf32>
    %246 = vector.multi_reduction <add>, %229, %cst_81 [1] : vector<16x32xf32> to vector<16xf32>
    %247 = vector.shape_cast %246 : vector<16xf32> to vector<16x1xf32>
    %cst_82 = arith.constant 3.200000e+01 : f32
    %248 = vector.broadcast %cst_82 : f32 to vector<16x1xf32>
    %249 = arith.divf %247, %248 : vector<16x1xf32>
    %250 = vector.broadcast %249 : vector<16x1xf32> to vector<16x32xf32>
    %251 = arith.subf %229, %250 : vector<16x32xf32>
    %252 = arith.mulf %251, %251 : vector<16x32xf32>
    %cst_83 = arith.constant dense<0.000000e+00> : vector<16xf32>
    %253 = vector.multi_reduction <add>, %252, %cst_83 [1] : vector<16x32xf32> to vector<16xf32>
    %254 = vector.shape_cast %253 : vector<16xf32> to vector<16x1xf32>
    %cst_84 = arith.constant 3.200000e+01 : f32
    %255 = vector.broadcast %cst_84 : f32 to vector<16x1xf32>
    %256 = arith.divf %254, %255 : vector<16x1xf32>
    %257 = vector.broadcast %249 : vector<16x1xf32> to vector<16x32xf32>
    %258 = arith.subf %229, %257 : vector<16x32xf32>
    %cst_85 = arith.constant 9.99999993E-9 : f32
    %259 = vector.broadcast %cst_85 : f32 to vector<16x1xf32>
    %260 = arith.addf %256, %259 : vector<16x1xf32>
    %261 = math.rsqrt %260 : vector<16x1xf32>
    %262 = vector.broadcast %261 : vector<16x1xf32> to vector<16x32xf32>
    %263 = arith.mulf %258, %262 : vector<16x32xf32>
    %264 = vector.broadcast %234 : vector<1x32xf32> to vector<16x32xf32>
    %265 = arith.mulf %263, %264 : vector<16x32xf32>
    %266 = vector.broadcast %235 : vector<1x32xf32> to vector<16x32xf32>
    %267 = arith.addf %265, %266 : vector<16x32xf32>
    %268 = arith.truncf %267 : vector<16x32xf32> to vector<16x32xbf16>
    %cst_86 = arith.constant dense<0.000000e+00> : vector<16x96xf32>
    %269 = tpu.matmul %268, %242, %cst_86 {dimension_numbers = #tpu.dot_dimension_numbers<[1], [0], [0], [1], [0, 0, 1, 1], [], []>} : vector<16x32xbf16>, vector<32x96xbf16>, vector<16x96xf32> -> vector<16x96xf32>
    %270 = vector.broadcast %236 : vector<1x96xf32> to vector<16x96xf32>
    %271 = arith.addf %269, %270 : vector<16x96xf32>
    %272 = vector.extract_strided_slice %271 {offsets = [0, 0], sizes = [16, 32], strides = [1, 1]} : vector<16x96xf32> to vector<16x32xf32>
    %273 = arith.truncf %272 : vector<16x32xf32> to vector<16x32xbf16>
    %274 = vector.extract_strided_slice %271 {offsets = [0, 32], sizes = [16, 32], strides = [1, 1]} : vector<16x96xf32> to vector<16x32xf32>
    %275 = arith.truncf %274 : vector<16x32xf32> to vector<16x32xbf16>
    %276 = vector.extract_strided_slice %271 {offsets = [0, 64], sizes = [16, 32], strides = [1, 1]} : vector<16x96xf32> to vector<16x32xf32>
    %277 = arith.truncf %276 : vector<16x32xf32> to vector<16x32xbf16>
    %cst_87 = arith.constant dense<0.000000e+00> : vector<16x16xf32>
    %278 = tpu.matmul %273, %275, %cst_87 {dimension_numbers = #tpu.dot_dimension_numbers<[1], [1], [0], [0], [0, 0, 1, 0], [], []>} : vector<16x32xbf16>, vector<16x32xbf16>, vector<16x16xf32> -> vector<16x16xf32>
    %279 = arith.addf %278, %14 : vector<16x16xf32>
    %cst_88 = arith.constant dense<0xFF800000> : vector<16xf32>
    %280 = vector.multi_reduction <maximumf>, %279, %cst_88 [1] : vector<16x16xf32> to vector<16xf32>
    %281 = vector.shape_cast %280 : vector<16xf32> to vector<16x1xf32>
    %282 = vector.broadcast %281 : vector<16x1xf32> to vector<16x16xf32>
    %283 = arith.subf %279, %282 : vector<16x16xf32>
    %284 = math.exp %283 : vector<16x16xf32>
    %cst_89 = arith.constant dense<0.000000e+00> : vector<16xf32>
    %285 = vector.multi_reduction <add>, %284, %cst_89 [1] : vector<16x16xf32> to vector<16xf32>
    %286 = vector.shape_cast %285 : vector<16xf32> to vector<16x1xf32>
    %287 = tpu.reciprocal %286 {approx = true} : vector<16x1xf32> -> vector<16x1xf32>
    %288 = vector.broadcast %287 : vector<16x1xf32> to vector<16x16xf32>
    %289 = arith.mulf %284, %288 : vector<16x16xf32>
    %290 = arith.truncf %289 : vector<16x16xf32> to vector<16x16xbf16>
    %cst_90 = arith.constant dense<0.000000e+00> : vector<16x32xf32>
    %291 = tpu.matmul %290, %277, %cst_90 {dimension_numbers = #tpu.dot_dimension_numbers<[1], [0], [0], [1], [0, 0, 1, 1], [], []>} : vector<16x16xbf16>, vector<16x32xbf16>, vector<16x32xf32> -> vector<16x32xf32>
    %292 = arith.truncf %291 : vector<16x32xf32> to vector<16x32xbf16>
    %cst_91 = arith.constant dense<0.000000e+00> : vector<16x32xf32>
    %293 = tpu.matmul %292, %243, %cst_91 {dimension_numbers = #tpu.dot_dimension_numbers<[1], [0], [0], [1], [0, 0, 1, 1], [], []>} : vector<16x32xbf16>, vector<32x32xbf16>, vector<16x32xf32> -> vector<16x32xf32>
    %294 = vector.broadcast %237 : vector<1x32xf32> to vector<16x32xf32>
    %295 = arith.addf %293, %294 : vector<16x32xf32>
    %296 = arith.addf %229, %295 : vector<16x32xf32>
    %cst_92 = arith.constant dense<0.000000e+00> : vector<16xf32>
    %297 = vector.multi_reduction <add>, %296, %cst_92 [1] : vector<16x32xf32> to vector<16xf32>
    %298 = vector.shape_cast %297 : vector<16xf32> to vector<16x1xf32>
    %cst_93 = arith.constant 3.200000e+01 : f32
    %299 = vector.broadcast %cst_93 : f32 to vector<16x1xf32>
    %300 = arith.divf %298, %299 : vector<16x1xf32>
    %301 = vector.broadcast %300 : vector<16x1xf32> to vector<16x32xf32>
    %302 = arith.subf %296, %301 : vector<16x32xf32>
    %303 = arith.mulf %302, %302 : vector<16x32xf32>
    %cst_94 = arith.constant dense<0.000000e+00> : vector<16xf32>
    %304 = vector.multi_reduction <add>, %303, %cst_94 [1] : vector<16x32xf32> to vector<16xf32>
    %305 = vector.shape_cast %304 : vector<16xf32> to vector<16x1xf32>
    %cst_95 = arith.constant 3.200000e+01 : f32
    %306 = vector.broadcast %cst_95 : f32 to vector<16x1xf32>
    %307 = arith.divf %305, %306 : vector<16x1xf32>
    %308 = vector.broadcast %300 : vector<16x1xf32> to vector<16x32xf32>
    %309 = arith.subf %296, %308 : vector<16x32xf32>
    %cst_96 = arith.constant 9.99999993E-9 : f32
    %310 = vector.broadcast %cst_96 : f32 to vector<16x1xf32>
    %311 = arith.addf %307, %310 : vector<16x1xf32>
    %312 = math.rsqrt %311 : vector<16x1xf32>
    %313 = vector.broadcast %312 : vector<16x1xf32> to vector<16x32xf32>
    %314 = arith.mulf %309, %313 : vector<16x32xf32>
    %315 = vector.broadcast %238 : vector<1x32xf32> to vector<16x32xf32>
    %316 = arith.mulf %314, %315 : vector<16x32xf32>
    %317 = vector.broadcast %239 : vector<1x32xf32> to vector<16x32xf32>
    %318 = arith.addf %316, %317 : vector<16x32xf32>
    %319 = arith.truncf %318 : vector<16x32xf32> to vector<16x32xbf16>
    %cst_97 = arith.constant dense<0.000000e+00> : vector<16x32xf32>
    %320 = tpu.matmul %319, %244, %cst_97 {dimension_numbers = #tpu.dot_dimension_numbers<[1], [0], [0], [1], [0, 0, 1, 1], [], []>} : vector<16x32xbf16>, vector<32x32xbf16>, vector<16x32xf32> -> vector<16x32xf32>
    %321 = vector.broadcast %240 : vector<1x32xf32> to vector<16x32xf32>
    %322 = arith.addf %320, %321 : vector<16x32xf32>
    %cst_98 = arith.constant 0.000000e+00 : f32
    %323 = vector.broadcast %cst_98 : f32 to vector<16x32xf32>
    %324 = arith.maximumf %322, %323 : vector<16x32xf32>
    %325 = arith.truncf %324 : vector<16x32xf32> to vector<16x32xbf16>
    %cst_99 = arith.constant dense<0.000000e+00> : vector<16x32xf32>
    %326 = tpu.matmul %325, %245, %cst_99 {dimension_numbers = #tpu.dot_dimension_numbers<[1], [0], [0], [1], [0, 0, 1, 1], [], []>} : vector<16x32xbf16>, vector<32x32xbf16>, vector<16x32xf32> -> vector<16x32xf32>
    %327 = vector.broadcast %241 : vector<1x32xf32> to vector<16x32xf32>
    %328 = arith.addf %326, %327 : vector<16x32xf32>
    %329 = arith.addf %328, %318 : vector<16x32xf32>
    %330 = arith.addf %296, %329 : vector<16x32xf32>
    %c3 = arith.constant 3 : index
    %c0_100 = arith.constant 0 : index
    %c0_101 = arith.constant 0 : index
    %331 = vector.load %arg2[%c3, %c0_100, %c0_101] : memref<6x96x32xbf16, #tpu.memory_space<vmem>>, vector<1x96x32xbf16>
    %332 = vector.shape_cast %331 : vector<1x96x32xbf16> to vector<96x32xbf16>
    %c3_102 = arith.constant 3 : index
    %c0_103 = arith.constant 0 : index
    %c0_104 = arith.constant 0 : index
    %333 = vector.load %arg3[%c3_102, %c0_103, %c0_104] : memref<6x2x32xf32, #tpu.memory_space<vmem>>, vector<1x2x32xf32>
    %334 = vector.shape_cast %333 : vector<1x2x32xf32> to vector<2x32xf32>
    %cst_105 = arith.constant 0.000000e+00 : f32
    %335 = vector.broadcast %cst_105 : f32 to vector<16x32xf32>
    %336 = vector.extract_strided_slice %332 {offsets = [0, 0], sizes = [32, 32], strides = [1, 1]} : vector<96x32xbf16> to vector<32x32xbf16>
    %c1_i32_106 = arith.constant 1 : i32
    %337 = tpu.dynamic_rotate %330 by %c1_i32_106 dim 0 : vector<16x32xf32>, i32 -> vector<16x32xf32>
    %cst_107 = arith.constant 0.000000e+00 : f32
    %338 = vector.shape_cast %6 : vector<16x1xi1> to vector<16x1xi1>
    %339 = vector.broadcast %338 : vector<16x1xi1> to vector<16x32xi1>
    %340 = vector.broadcast %cst_107 : f32 to vector<16x32xf32>
    %341 = arith.select %339, %337, %340 : vector<16x32xi1>, vector<16x32xf32>
    %342 = arith.truncf %341 : vector<16x32xf32> to vector<16x32xbf16>
    %cst_108 = arith.constant dense<0.000000e+00> : vector<16x32xf32>
    %343 = tpu.matmul %342, %336, %cst_108 {dimension_numbers = #tpu.dot_dimension_numbers<[1], [0], [0], [1], [0, 0, 1, 1], [], []>} : vector<16x32xbf16>, vector<32x32xbf16>, vector<16x32xf32> -> vector<16x32xf32>
    %344 = arith.addf %335, %343 : vector<16x32xf32>
    %345 = vector.extract_strided_slice %332 {offsets = [32, 0], sizes = [32, 32], strides = [1, 1]} : vector<96x32xbf16> to vector<32x32xbf16>
    %346 = arith.truncf %330 : vector<16x32xf32> to vector<16x32xbf16>
    %cst_109 = arith.constant dense<0.000000e+00> : vector<16x32xf32>
    %347 = tpu.matmul %346, %345, %cst_109 {dimension_numbers = #tpu.dot_dimension_numbers<[1], [0], [0], [1], [0, 0, 1, 1], [], []>} : vector<16x32xbf16>, vector<32x32xbf16>, vector<16x32xf32> -> vector<16x32xf32>
    %348 = arith.addf %344, %347 : vector<16x32xf32>
    %349 = vector.extract_strided_slice %332 {offsets = [64, 0], sizes = [32, 32], strides = [1, 1]} : vector<96x32xbf16> to vector<32x32xbf16>
    %c15_i32_110 = arith.constant 15 : i32
    %350 = tpu.dynamic_rotate %330 by %c15_i32_110 dim 0 : vector<16x32xf32>, i32 -> vector<16x32xf32>
    %cst_111 = arith.constant 0.000000e+00 : f32
    %351 = vector.shape_cast %8 : vector<16x1xi1> to vector<16x1xi1>
    %352 = vector.broadcast %351 : vector<16x1xi1> to vector<16x32xi1>
    %353 = vector.broadcast %cst_111 : f32 to vector<16x32xf32>
    %354 = arith.select %352, %350, %353 : vector<16x32xi1>, vector<16x32xf32>
    %355 = arith.truncf %354 : vector<16x32xf32> to vector<16x32xbf16>
    %cst_112 = arith.constant dense<0.000000e+00> : vector<16x32xf32>
    %356 = tpu.matmul %355, %349, %cst_112 {dimension_numbers = #tpu.dot_dimension_numbers<[1], [0], [0], [1], [0, 0, 1, 1], [], []>} : vector<16x32xbf16>, vector<32x32xbf16>, vector<16x32xf32> -> vector<16x32xf32>
    %357 = arith.addf %348, %356 : vector<16x32xf32>
    %358 = vector.extract_strided_slice %334 {offsets = [0, 0], sizes = [1, 32], strides = [1, 1]} : vector<2x32xf32> to vector<1x32xf32>
    %359 = vector.broadcast %358 : vector<1x32xf32> to vector<16x32xf32>
    %360 = arith.mulf %357, %359 : vector<16x32xf32>
    %361 = vector.extract_strided_slice %334 {offsets = [1, 0], sizes = [1, 32], strides = [1, 1]} : vector<2x32xf32> to vector<1x32xf32>
    %362 = vector.broadcast %361 : vector<1x32xf32> to vector<16x32xf32>
    %363 = arith.addf %360, %362 : vector<16x32xf32>
    %cst_113 = arith.constant 0.000000e+00 : f32
    %364 = vector.broadcast %cst_113 : f32 to vector<16x32xf32>
    %365 = arith.cmpf oge, %363, %364 : vector<16x32xf32>
    %cst_114 = arith.constant 0.00999999977 : f32
    %366 = vector.broadcast %cst_114 : f32 to vector<16x32xf32>
    %367 = arith.mulf %366, %363 : vector<16x32xf32>
    %368 = arith.select %365, %363, %367 : vector<16x32xi1>, vector<16x32xf32>
    %369 = arith.addf %368, %90 : vector<16x32xf32>
    %c4 = arith.constant 4 : index
    %c0_115 = arith.constant 0 : index
    %c0_116 = arith.constant 0 : index
    %370 = vector.load %arg2[%c4, %c0_115, %c0_116] : memref<6x96x32xbf16, #tpu.memory_space<vmem>>, vector<1x96x32xbf16>
    %371 = vector.shape_cast %370 : vector<1x96x32xbf16> to vector<96x32xbf16>
    %c4_117 = arith.constant 4 : index
    %c0_118 = arith.constant 0 : index
    %c0_119 = arith.constant 0 : index
    %372 = vector.load %arg3[%c4_117, %c0_118, %c0_119] : memref<6x2x32xf32, #tpu.memory_space<vmem>>, vector<1x2x32xf32>
    %373 = vector.shape_cast %372 : vector<1x2x32xf32> to vector<2x32xf32>
    %cst_120 = arith.constant 0.000000e+00 : f32
    %374 = vector.broadcast %cst_120 : f32 to vector<16x32xf32>
    %375 = vector.extract_strided_slice %371 {offsets = [0, 0], sizes = [32, 32], strides = [1, 1]} : vector<96x32xbf16> to vector<32x32xbf16>
    %c1_i32_121 = arith.constant 1 : i32
    %376 = tpu.dynamic_rotate %369 by %c1_i32_121 dim 0 : vector<16x32xf32>, i32 -> vector<16x32xf32>
    %cst_122 = arith.constant 0.000000e+00 : f32
    %377 = vector.shape_cast %6 : vector<16x1xi1> to vector<16x1xi1>
    %378 = vector.broadcast %377 : vector<16x1xi1> to vector<16x32xi1>
    %379 = vector.broadcast %cst_122 : f32 to vector<16x32xf32>
    %380 = arith.select %378, %376, %379 : vector<16x32xi1>, vector<16x32xf32>
    %381 = arith.truncf %380 : vector<16x32xf32> to vector<16x32xbf16>
    %cst_123 = arith.constant dense<0.000000e+00> : vector<16x32xf32>
    %382 = tpu.matmul %381, %375, %cst_123 {dimension_numbers = #tpu.dot_dimension_numbers<[1], [0], [0], [1], [0, 0, 1, 1], [], []>} : vector<16x32xbf16>, vector<32x32xbf16>, vector<16x32xf32> -> vector<16x32xf32>
    %383 = arith.addf %374, %382 : vector<16x32xf32>
    %384 = vector.extract_strided_slice %371 {offsets = [32, 0], sizes = [32, 32], strides = [1, 1]} : vector<96x32xbf16> to vector<32x32xbf16>
    %385 = arith.truncf %369 : vector<16x32xf32> to vector<16x32xbf16>
    %cst_124 = arith.constant dense<0.000000e+00> : vector<16x32xf32>
    %386 = tpu.matmul %385, %384, %cst_124 {dimension_numbers = #tpu.dot_dimension_numbers<[1], [0], [0], [1], [0, 0, 1, 1], [], []>} : vector<16x32xbf16>, vector<32x32xbf16>, vector<16x32xf32> -> vector<16x32xf32>
    %387 = arith.addf %383, %386 : vector<16x32xf32>
    %388 = vector.extract_strided_slice %371 {offsets = [64, 0], sizes = [32, 32], strides = [1, 1]} : vector<96x32xbf16> to vector<32x32xbf16>
    %c15_i32_125 = arith.constant 15 : i32
    %389 = tpu.dynamic_rotate %369 by %c15_i32_125 dim 0 : vector<16x32xf32>, i32 -> vector<16x32xf32>
    %cst_126 = arith.constant 0.000000e+00 : f32
    %390 = vector.shape_cast %8 : vector<16x1xi1> to vector<16x1xi1>
    %391 = vector.broadcast %390 : vector<16x1xi1> to vector<16x32xi1>
    %392 = vector.broadcast %cst_126 : f32 to vector<16x32xf32>
    %393 = arith.select %391, %389, %392 : vector<16x32xi1>, vector<16x32xf32>
    %394 = arith.truncf %393 : vector<16x32xf32> to vector<16x32xbf16>
    %cst_127 = arith.constant dense<0.000000e+00> : vector<16x32xf32>
    %395 = tpu.matmul %394, %388, %cst_127 {dimension_numbers = #tpu.dot_dimension_numbers<[1], [0], [0], [1], [0, 0, 1, 1], [], []>} : vector<16x32xbf16>, vector<32x32xbf16>, vector<16x32xf32> -> vector<16x32xf32>
    %396 = arith.addf %387, %395 : vector<16x32xf32>
    %397 = vector.extract_strided_slice %373 {offsets = [0, 0], sizes = [1, 32], strides = [1, 1]} : vector<2x32xf32> to vector<1x32xf32>
    %398 = vector.broadcast %397 : vector<1x32xf32> to vector<16x32xf32>
    %399 = arith.mulf %396, %398 : vector<16x32xf32>
    %400 = vector.extract_strided_slice %373 {offsets = [1, 0], sizes = [1, 32], strides = [1, 1]} : vector<2x32xf32> to vector<1x32xf32>
    %401 = vector.broadcast %400 : vector<1x32xf32> to vector<16x32xf32>
    %402 = arith.addf %399, %401 : vector<16x32xf32>
    %cst_128 = arith.constant 0.000000e+00 : f32
    %403 = vector.broadcast %cst_128 : f32 to vector<16x32xf32>
    %404 = arith.cmpf oge, %402, %403 : vector<16x32xf32>
    %cst_129 = arith.constant 0.00999999977 : f32
    %405 = vector.broadcast %cst_129 : f32 to vector<16x32xf32>
    %406 = arith.mulf %405, %402 : vector<16x32xf32>
    %407 = arith.select %404, %402, %406 : vector<16x32xi1>, vector<16x32xf32>
    %408 = arith.addf %407, %52 : vector<16x32xf32>
    %c5 = arith.constant 5 : index
    %c0_130 = arith.constant 0 : index
    %c0_131 = arith.constant 0 : index
    %409 = vector.load %arg2[%c5, %c0_130, %c0_131] : memref<6x96x32xbf16, #tpu.memory_space<vmem>>, vector<1x96x32xbf16>
    %410 = vector.shape_cast %409 : vector<1x96x32xbf16> to vector<96x32xbf16>
    %c5_132 = arith.constant 5 : index
    %c0_133 = arith.constant 0 : index
    %c0_134 = arith.constant 0 : index
    %411 = vector.load %arg3[%c5_132, %c0_133, %c0_134] : memref<6x2x32xf32, #tpu.memory_space<vmem>>, vector<1x2x32xf32>
    %412 = vector.shape_cast %411 : vector<1x2x32xf32> to vector<2x32xf32>
    %cst_135 = arith.constant 0.000000e+00 : f32
    %413 = vector.broadcast %cst_135 : f32 to vector<16x32xf32>
    %414 = vector.extract_strided_slice %410 {offsets = [0, 0], sizes = [32, 32], strides = [1, 1]} : vector<96x32xbf16> to vector<32x32xbf16>
    %c1_i32_136 = arith.constant 1 : i32
    %415 = tpu.dynamic_rotate %408 by %c1_i32_136 dim 0 : vector<16x32xf32>, i32 -> vector<16x32xf32>
    %cst_137 = arith.constant 0.000000e+00 : f32
    %416 = vector.shape_cast %6 : vector<16x1xi1> to vector<16x1xi1>
    %417 = vector.broadcast %416 : vector<16x1xi1> to vector<16x32xi1>
    %418 = vector.broadcast %cst_137 : f32 to vector<16x32xf32>
    %419 = arith.select %417, %415, %418 : vector<16x32xi1>, vector<16x32xf32>
    %420 = arith.truncf %419 : vector<16x32xf32> to vector<16x32xbf16>
    %cst_138 = arith.constant dense<0.000000e+00> : vector<16x32xf32>
    %421 = tpu.matmul %420, %414, %cst_138 {dimension_numbers = #tpu.dot_dimension_numbers<[1], [0], [0], [1], [0, 0, 1, 1], [], []>} : vector<16x32xbf16>, vector<32x32xbf16>, vector<16x32xf32> -> vector<16x32xf32>
    %422 = arith.addf %413, %421 : vector<16x32xf32>
    %423 = vector.extract_strided_slice %410 {offsets = [32, 0], sizes = [32, 32], strides = [1, 1]} : vector<96x32xbf16> to vector<32x32xbf16>
    %424 = arith.truncf %408 : vector<16x32xf32> to vector<16x32xbf16>
    %cst_139 = arith.constant dense<0.000000e+00> : vector<16x32xf32>
    %425 = tpu.matmul %424, %423, %cst_139 {dimension_numbers = #tpu.dot_dimension_numbers<[1], [0], [0], [1], [0, 0, 1, 1], [], []>} : vector<16x32xbf16>, vector<32x32xbf16>, vector<16x32xf32> -> vector<16x32xf32>
    %426 = arith.addf %422, %425 : vector<16x32xf32>
    %427 = vector.extract_strided_slice %410 {offsets = [64, 0], sizes = [32, 32], strides = [1, 1]} : vector<96x32xbf16> to vector<32x32xbf16>
    %c15_i32_140 = arith.constant 15 : i32
    %428 = tpu.dynamic_rotate %408 by %c15_i32_140 dim 0 : vector<16x32xf32>, i32 -> vector<16x32xf32>
    %cst_141 = arith.constant 0.000000e+00 : f32
    %429 = vector.shape_cast %8 : vector<16x1xi1> to vector<16x1xi1>
    %430 = vector.broadcast %429 : vector<16x1xi1> to vector<16x32xi1>
    %431 = vector.broadcast %cst_141 : f32 to vector<16x32xf32>
    %432 = arith.select %430, %428, %431 : vector<16x32xi1>, vector<16x32xf32>
    %433 = arith.truncf %432 : vector<16x32xf32> to vector<16x32xbf16>
    %cst_142 = arith.constant dense<0.000000e+00> : vector<16x32xf32>
    %434 = tpu.matmul %433, %427, %cst_142 {dimension_numbers = #tpu.dot_dimension_numbers<[1], [0], [0], [1], [0, 0, 1, 1], [], []>} : vector<16x32xbf16>, vector<32x32xbf16>, vector<16x32xf32> -> vector<16x32xf32>
    %435 = arith.addf %426, %434 : vector<16x32xf32>
    %436 = vector.extract_strided_slice %412 {offsets = [0, 0], sizes = [1, 32], strides = [1, 1]} : vector<2x32xf32> to vector<1x32xf32>
    %437 = vector.broadcast %436 : vector<1x32xf32> to vector<16x32xf32>
    %438 = arith.mulf %435, %437 : vector<16x32xf32>
    %439 = vector.extract_strided_slice %412 {offsets = [1, 0], sizes = [1, 32], strides = [1, 1]} : vector<2x32xf32> to vector<1x32xf32>
    %440 = vector.broadcast %439 : vector<1x32xf32> to vector<16x32xf32>
    %441 = arith.addf %438, %440 : vector<16x32xf32>
    %cst_143 = arith.constant 0.000000e+00 : f32
    %442 = vector.broadcast %cst_143 : f32 to vector<16x32xf32>
    %443 = arith.cmpf oge, %441, %442 : vector<16x32xf32>
    %cst_144 = arith.constant 0.00999999977 : f32
    %444 = vector.broadcast %cst_144 : f32 to vector<16x32xf32>
    %445 = arith.mulf %444, %441 : vector<16x32xf32>
    %446 = arith.select %443, %441, %445 : vector<16x32xi1>, vector<16x32xf32>
    %447 = arith.addf %446, %3 : vector<16x32xf32>
    %c0_145 = arith.constant 0 : index
    %c0_146 = arith.constant 0 : index
    %c0_147 = arith.constant 0 : index
    %448 = vector.load %arg6[%c0_145, %c0_146, %c0_147] : memref<1x16x32xf32, #tpu.memory_space<vmem>>, vector<1x16x32xf32>
    %449 = vector.shape_cast %448 : vector<1x16x32xf32> to vector<16x32xf32>
    %450 = vector.shape_cast %447 : vector<16x32xf32> to vector<1x16x32xf32>
    tpu.vector_store %arg6[%c0_145, %c0_146, %c0_147], %450 {strides = array<i32>} : memref<1x16x32xf32, #tpu.memory_space<vmem>>, vector<1x16x32xf32>,
    return
  }
  func.func @transform_0(%arg0: i32) -> (i32, i32, i32) {
    %c0_i32 = arith.constant 0 : i32
    %c0_i32_0 = arith.constant 0 : i32
    %c0_i32_1 = arith.constant 0 : i32
    return %arg0, %c0_i32, %c0_i32_0 : i32, i32, i32
  }
  func.func @transform_1(%arg0: i32) -> (i32, i32, i32) {
    %c0_i32 = arith.constant 0 : i32
    %c0_i32_0 = arith.constant 0 : i32
    %c0_i32_1 = arith.constant 0 : i32
    %c0_i32_2 = arith.constant 0 : i32
    return %c0_i32, %c0_i32_0, %c0_i32_1 : i32, i32, i32
  }
  func.func @transform_2(%arg0: i32) -> (i32, i32, i32) {
    %c0_i32 = arith.constant 0 : i32
    %c0_i32_0 = arith.constant 0 : i32
    %c0_i32_1 = arith.constant 0 : i32
    %c0_i32_2 = arith.constant 0 : i32
    return %c0_i32, %c0_i32_0, %c0_i32_1 : i32, i32, i32
  }
  func.func @transform_3(%arg0: i32) -> (i32, i32, i32) {
    %c0_i32 = arith.constant 0 : i32
    %c0_i32_0 = arith.constant 0 : i32
    %c0_i32_1 = arith.constant 0 : i32
    %c0_i32_2 = arith.constant 0 : i32
    return %c0_i32, %c0_i32_0, %c0_i32_1 : i32, i32, i32
  }
  func.func @transform_4(%arg0: i32) -> (i32, i32, i32) {
    %c0_i32 = arith.constant 0 : i32
    %c0_i32_0 = arith.constant 0 : i32
    %c0_i32_1 = arith.constant 0 : i32
    %c0_i32_2 = arith.constant 0 : i32
    return %c0_i32, %c0_i32_0, %c0_i32_1 : i32, i32, i32
  }
  func.func @transform_5(%arg0: i32) -> (i32, i32, i32) {
    %c0_i32 = arith.constant 0 : i32
    %c0_i32_0 = arith.constant 0 : i32
    %c0_i32_1 = arith.constant 0 : i32
    return %arg0, %c0_i32, %c0_i32_0 : i32, i32, i32
  }
}

</mosaic_0001>

<llo_original>
// kernel: _lambda_.1
$region0: #{_lambda_.1}
  #allocation0 [shape = 'u32[]', space=smem, size = 0x4, offset = 0x4, fixed_abs, tag = 'smem constant byte address 0x4 - core index']
  #allocation1 [shape = 'u32[144,128]{1,0:T(1,128)}', space=vmem, size = 0x12000, scoped, tag = 'internal scratch']
  %s0 = inlined_call_operand.vmem [shape: f32[2,16,8], index: 0, kind: input, shape index: {}]
  %s1 = inlined_call_operand.vmem [shape: bf16[6,96,32], index: 1, kind: input, shape index: {}]
  %s2 = inlined_call_operand.vmem [shape: f32[6,2,32], index: 2, kind: input, shape index: {}]
  %s3 = inlined_call_operand.vmem [shape: bf16[2,32,192], index: 3, kind: input, shape index: {}]
  %s4 = inlined_call_operand.vmem [shape: f32[2,8,96], index: 4, kind: input, shape index: {}]
  %s5 = inlined_call_operand.vmem [shape: f32[2,16,32], index: 5, kind: output, shape index: {}]
  %s6 = sld [smem:[#allocation0]]
  $region53: #{_lambda_.1} parent=0
    _
  %s8 = ssub.s32 1, %s6
  %s9 = scalar_select 0, %s8, %s6
  loop: start=0, step=1, limit=4
  $region2: #{_lambda_.1} parent=0 // loop_pre_header
    _
  $region3: #{_lambda_.1} parent=0 // loop_header
    %s11 = sphi 0, %s15
    %p12 = scmp.ge.s32.totalorder %s11, 4
    %s21 = sphi 0, %s23
    %s24 = sphi 0, %s21
    %s25 = sphi 0, %s24
    %s41 = sphi 0, %s25
    %s45 = sphi 0, %s45
    %s47 = sphi 0, %s45
    %s48 = sphi 0, %s47
    %s62 = sphi 0, %s48
    %s66 = sphi 0, %s66
    %s68 = sphi 0, %s66
    %s69 = sphi 0, %s68
    %s83 = sphi 0, %s69
    %s87 = sphi 0, %s87
    %s89 = sphi 0, %s87
    %s90 = sphi 0, %s89
    %s104 = sphi 0, %s90
    %s108 = sphi 0, %s108
    %s110 = sphi 0, %s108
    %s111 = sphi 0, %s110
    %s125 = sphi 0, %s111
    %s131 = sphi 0, %s133
    %s134 = sphi 0, %s131
    %s135 = sphi 0, %s134
    %s151 = sphi 0, %s135
  $region4: #{_lambda_.1} parent=0 // loop_header_branch
    %14 = sbr.rel (%p12) target = $region8
  $region5: #{_lambda_.1} parent=0 // loop_body
    %s16 = ssub.s32 %s11, 1
    %s17 = ssub.s32 %s11, 2
    %s18 = sadd.s32 %s11, 1
    %s19 = ssub.s32 %s11, %s18
    %p20 = scmp.eq.s32.totalorder %s19, 0
    %s22 = sadd.s32 %s21, 1
    %s23 = scalar_select %p20, %s21, %s22
    %p26 = pneg %p20
    %p27 = scmp.eq.s32.totalorder %s11, 1
    %p28 = por %p26, %p27
    %p29 = scmp.ne.s32.totalorder %s21, %s24
    %p30 = scmp.eq.s32.totalorder %s11, 0
    %p31 = por %p29, %p30
    %p32 = scmp.ne.s32.totalorder %s21, %s24
    %p33 = scmp.eq.s32.totalorder %s16, 1
    %p34 = por %p32, %p33
    %p35 = scmp.ne.s32.totalorder %s24, %s25
    %p36 = scmp.eq.s32.totalorder %s16, 0
    %p37 = por %p35, %p36
    %p38 = scmp.ne.s32.totalorder %s24, %s25
    %p39 = scmp.eq.s32.totalorder %s17, 1
    %p40 = por %p38, %p39
    %p42 = scmp.ne.s32.totalorder %s25, %s41
    %p43 = scmp.eq.s32.totalorder %s17, 0
    %p44 = por %p42, %p43
    %s46 = sadd.s32 %s45, 1
    %p49 = scmp.eq.s32.totalorder %s11, 1
    %p50 = scmp.ne.s32.totalorder %s45, %s47
    %p51 = scmp.eq.s32.totalorder %s11, 0
    %p52 = por %p50, %p51
    %p53 = scmp.ne.s32.totalorder %s45, %s47
    %p54 = scmp.eq.s32.totalorder %s16, 1
    %p55 = por %p53, %p54
    %p56 = scmp.ne.s32.totalorder %s47, %s48
    %p57 = scmp.eq.s32.totalorder %s16, 0
    %p58 = por %p56, %p57
    %p59 = scmp.ne.s32.totalorder %s47, %s48
    %p60 = scmp.eq.s32.totalorder %s17, 1
    %p61 = por %p59, %p60
    %p63 = scmp.ne.s32.totalorder %s48, %s62
    %p64 = scmp.eq.s32.totalorder %s17, 0
    %p65 = por %p63, %p64
    %s67 = sadd.s32 %s66, 1
    %p70 = scmp.eq.s32.totalorder %s11, 1
    %p71 = scmp.ne.s32.totalorder %s66, %s68
    %p72 = scmp.eq.s32.totalorder %s11, 0
    %p73 = por %p71, %p72
    %p74 = scmp.ne.s32.totalorder %s66, %s68
    %p75 = scmp.eq.s32.totalorder %s16, 1
    %p76 = por %p74, %p75
    %p77 = scmp.ne.s32.totalorder %s68, %s69
    %p78 = scmp.eq.s32.totalorder %s16, 0
    %p79 = por %p77, %p78
    %p80 = scmp.ne.s32.totalorder %s68, %s69
    %p81 = scmp.eq.s32.totalorder %s17, 1
    %p82 = por %p80, %p81
    %p84 = scmp.ne.s32.totalorder %s69, %s83
    %p85 = scmp.eq.s32.totalorder %s17, 0
    %p86 = por %p84, %p85
    %s88 = sadd.s32 %s87, 1
    %p91 = scmp.eq.s32.totalorder %s11, 1
    %p92 = scmp.ne.s32.totalorder %s87, %s89
    %p93 = scmp.eq.s32.totalorder %s11, 0
    %p94 = por %p92, %p93
    %p95 = scmp.ne.s32.totalorder %s87, %s89
    %p96 = scmp.eq.s32.totalorder %s16, 1
    %p97 = por %p95, %p96
    %p98 = scmp.ne.s32.totalorder %s89, %s90
    %p99 = scmp.eq.s32.totalorder %s16, 0
    %p100 = por %p98, %p99
    %p101 = scmp.ne.s32.totalorder %s89, %s90
    %p102 = scmp.eq.s32.totalorder %s17, 1
    %p103 = por %p101, %p102
    %p105 = scmp.ne.s32.totalorder %s90, %s104
    %p106 = scmp.eq.s32.totalorder %s17, 0
    %p107 = por %p105, %p106
    %s109 = sadd.s32 %s108, 1
    %p112 = scmp.eq.s32.totalorder %s11, 1
    %p113 = scmp.ne.s32.totalorder %s108, %s110
    %p114 = scmp.eq.s32.totalorder %s11, 0
    %p115 = por %p113, %p114
    %p116 = scmp.ne.s32.totalorder %s108, %s110
    %p117 = scmp.eq.s32.totalorder %s16, 1
    %p118 = por %p116, %p117
    %p119 = scmp.ne.s32.totalorder %s110, %s111
    %p120 = scmp.eq.s32.totalorder %s16, 0
    %p121 = por %p119, %p120
    %p122 = scmp.ne.s32.totalorder %s110, %s111
    %p123 = scmp.eq.s32.totalorder %s17, 1
    %p124 = por %p122, %p123
    %p126 = scmp.ne.s32.totalorder %s111, %s125
    %p127 = scmp.eq.s32.totalorder %s17, 0
    %p128 = por %p126, %p127
    %s129 = ssub.s32 %s11, %s18
    %p130 = scmp.eq.s32.totalorder %s129, 0
    %s132 = sadd.s32 %s131, 1
    %s133 = scalar_select %p130, %s131, %s132
    %p136 = pneg %p130
    %p137 = scmp.eq.s32.totalorder %s11, 1
    %p138 = por %p136, %p137
    %p139 = scmp.ne.s32.totalorder %s131, %s134
    %p140 = scmp.eq.s32.totalorder %s11, 0
    %p141 = por %p139, %p140
    %p142 = scmp.ne.s32.totalorder %s131, %s134
    %p143 = scmp.eq.s32.totalorder %s16, 1
    %p144 = por %p142, %p143
    %p145 = scmp.ne.s32.totalorder %s134, %s135
    %p146 = scmp.eq.s32.totalorder %s16, 0
    %p147 = por %p145, %p146
    %p148 = scmp.ne.s32.totalorder %s134, %s135
    %p149 = scmp.eq.s32.totalorder %s17, 1
    %p150 = por %p148, %p149
    %p152 = scmp.ne.s32.totalorder %s135, %s151
    %p153 = scmp.eq.s32.totalorder %s17, 0
    %p154 = por %p152, %p153
    %p155 = scmp.le.s32.totalorder 1, %s11
    %p156 = scmp.lt.s32.totalorder %s11, 3
    %p157 = pnand %p155, %p156
    %p158 = pneg %p157
    // Predicated region
    $region9: #{_lambda_.1} parent=5 // pred_check
      _
    $region10: #{_lambda_.1} parent=5 // pred_check_branch
      %160 = sbr.rel (%p157) target = $region12
    $region11: #{_lambda_.1} parent=5 // pred_region
      %s161 = ssub.s32 %s11, 1
      // Predicated region
      $region13: #{_lambda_.1} parent=11 // pred_check
        %p162 = pneg %p58
      $region14: #{_lambda_.1} parent=11 // pred_check_branch
        %164 = sbr.rel (%p162) target = $region16
      $region15: #{_lambda_.1} parent=11 // pred_region
        _
      $region16: #{_lambda_.1} parent=11 // pred_fallthru
        _
      // Predicated region
      $region17: #{_lambda_.1} parent=11 // pred_check
        %p165 = pneg %p79
      $region18: #{_lambda_.1} parent=11 // pred_check_branch
        %167 = sbr.rel (%p165) target = $region20
      $region19: #{_lambda_.1} parent=11 // pred_region
        _
      $region20: #{_lambda_.1} parent=11 // pred_fallthru
        _
      // Predicated region
      $region21: #{_lambda_.1} parent=11 // pred_check
        %p168 = pneg %p100
      $region22: #{_lambda_.1} parent=11 // pred_check_branch
        %170 = sbr.rel (%p168) target = $region24
      $region23: #{_lambda_.1} parent=11 // pred_region
        _
      $region24: #{_lambda_.1} parent=11 // pred_fallthru
        _
      // Predicated region
      $region25: #{_lambda_.1} parent=11 // pred_check
        %p171 = pneg %p121
      $region26: #{_lambda_.1} parent=11 // pred_check_branch
        %173 = sbr.rel (%p171) target = $region28
      $region27: #{_lambda_.1} parent=11 // pred_region
        _
      $region28: #{_lambda_.1} parent=11 // pred_fallthru
        _
    $region12: #{_lambda_.1} parent=5 // pred_fallthru
      _
    %p174 = scmp.lt.s32.totalorder %s11, 2
    // Predicated region
    $region29: #{_lambda_.1} parent=5 // pred_check
      %p175 = pneg %p174
    $region30: #{_lambda_.1} parent=5 // pred_check_branch
      %177 = sbr.rel (%p175) target = $region32
    $region31: #{_lambda_.1} parent=5 // pred_region
      // Predicated region
      $region33: #{_lambda_.1} parent=31 // pred_check
        %p178 = pneg %p31
      $region34: #{_lambda_.1} parent=31 // pred_check_branch
        %180 = sbr.rel (%p178) target = $region36
      $region35: #{_lambda_.1} parent=31 // pred_region
        %p181 = scmp.lt.s32.totalorder %s11, 1
        %s182 = scalar_select %p181, %s11, 1
        %s183 = smul.addr %s182, 2
        %s184 = smul.addr %s183, 8
        %s185 = scalar_lea.vmem %s0, %s184
      $region36: #{_lambda_.1} parent=31 // pred_fallthru
        _
    $region32: #{_lambda_.1} parent=5 // pred_fallthru
      _
    %p186 = scmp.le.s32.totalorder 1, %s11
    %p187 = scmp.lt.s32.totalorder %s11, 3
    %p188 = pnand %p186, %p187
    %p189 = pneg %p188
    // Predicated region
    $region37: #{_lambda_.1} parent=5 // pred_check
      _
    $region38: #{_lambda_.1} parent=5 // pred_check_branch
      %191 = sbr.rel (%p188) target = $region40
    $region39: #{_lambda_.1} parent=5 // pred_region
      %s192 = ssub.s32 %s11, 1
      %p193 = scmp.lt.s32.totalorder %s16, 1
      %s194 = scalar_select %p193, %s16, 1
      %s195 = smul.addr %s194, 2
      %s196 = smul.addr %s195, 8
      %s197 = scalar_lea.vmem %s0, %s196
      %p198 = pneg %p37
      %p199 = pneg %p34
      %p200 = pneg %p58
      %p201 = pneg %p55
      %p202 = pneg %p79
      %p203 = pneg %p76
      %p204 = pneg %p100
      %p205 = pneg %p97
      %p206 = pneg %p121
      %p207 = pneg %p118
      %p208 = pneg %p147
      %p209 = pneg %p144
      %p210 = scmp.lt.s32.totalorder %s16, 1
      %s211 = scalar_select %p210, %s16, 1
      %s212 = smul.addr %s211, 2
      %s213 = smul.addr %s212, 8
      %s214 = scalar_lea.vmem %s5, %s213
      %p215 = scmp.lt.s32.totalorder %s16, 1
      %s216 = scalar_select %p215, %s16, 1
      %s217 = smul.addr %s216, 2
      %s218 = smul.addr %s217, 8
      %s219 = scalar_lea.vmem %s0, %s218
      %p220 = scmp.lt.s32.totalorder %s16, 1
      %s221 = scalar_select %p220, %s16, 1
      %s222 = smul.addr %s221, 2
      %s223 = smul.addr %s222, 8
      %s224 = scalar_lea.vmem %s5, %s223
      %v226 = vld [vmem:[%s219] sm:$0xff]
      %v227 = vld [vmem:[%s219 + $0x8] sm:$0xff]
      %vm228 = vcmask 64512
      %v229 = vsel %vm228, %v226, 0.0
      %v230 = vsel %vm228, %v227, 0.0
      %v231 = vlaneseq
      %v232 = vshrl.u32 %v231, 7
      %v233 = vadd.s32 %v232, 8
      %vm234 = vcmp.ge.s32.totalorder %v232, 1
      %vm235 = vcmp.ge.s32.totalorder %v233, 1
      %vm236 = vcmp.lt.s32.totalorder %v232, 15
      %vm237 = vcmp.lt.s32.totalorder %v233, 15
      %v238 = vlaneseq
      %v239 = vand.u32 %v238, 127
      %vm240 = vcmp.le.s32.totalorder %v239, %v232
      %vm241 = vcmp.le.s32.totalorder %v239, %v233
      %v242 = vsel %vm240, 1.0, 0.0
      %v243 = vsel %vm241, 1.0, 0.0
      %v244 = vld [vmem:[%s1] sm:$0xf]
      %v245 = vld [vmem:[%s1 + $0x4] sm:$0xf]
      %v246 = vld [vmem:[%s1 + $0x8] sm:$0xf]
      %v247 = vld [vmem:[%s1 + $0xc] sm:$0xf]
      %v248 = vld [vmem:[%s1 + $0x10] sm:$0xf]
      %v249 = vld [vmem:[%s1 + $0x14] sm:$0xf]
      %v250 = vld [vmem:[%s1 + $0x18] sm:$0xf]
      %v251 = vld [vmem:[%s1 + $0x1c] sm:$0xf]
      %v252 = vld [vmem:[%s1 + $0x20] sm:$0xf]
      %v253 = vld [vmem:[%s1 + $0x24] sm:$0xf]
      %v254 = vld [vmem:[%s1 + $0x28] sm:$0xf]
      %v255 = vld [vmem:[%s1 + $0x2c] sm:$0xf]
      %v256 = vld [vmem:[%s2] sm:$0x3]
      %v257 = vrot.slane %v229, 7
      %v258 = vrot.slane %v230, 7
      %vm259 = vcmp.lt.s32.totalorder %v232, 1
      %v260 = vsel %vm259, %v257, %v258
      %v261 = vsel %vm259, %v258, %v257
      %v262 = vsel %vm234, 1, 0
      %v263 = vsel %vm235, 1, 0
      %vm264 = vcmp.eq.s32.totalorder %v262, 1
      %vm265 = vcmp.eq.s32.totalorder %v263, 1
      %v266 = vsel %vm264, %v261, 0.0
      %v267 = vsel %vm265, %v260, 0.0
      %v268 = vpack.c.bf16 %v267, %v266
      %v269 = vpack.c.bf16 %v230, %v229
      %v274 = vunpack.c.l.b16 %v248
      %v275 = vunpack.c.l.b16 %v249
      %v276 = vunpack.c.l.b16 %v250
      %v277 = vunpack.c.l.b16 %v251
      %v278 = vpack.c.b16 %v275, %v274
      %v279 = vpack.c.b16 %v277, %v276
      %vm282 = vcmask 261120
      %v284 = vsel %vm282, %v269, 0
      %286 = vmatprep.subr.bf16.mxu0 0
      %287 = vmatpush1.bf16.msra.mxu0 0
      %288 = vmatprep.subr.bf16.mxu0 0
      %289 = vmatpush1.bf16.msra.mxu0 0
      %290 = vmatprep.subr.bf16.mxu0 0
      %291 = vmatpush1.bf16.msra.mxu0 0
      %292 = vmatprep.subr.bf16.mxu0 0
      %293 = vmatpush1.bf16.msra.mxu0 0
      %294 = vmatprep.subr.bf16.mxu0 0
      %295 = vmatpush1.bf16.msra.mxu0 0
      %296 = vmatprep.subr.bf16.mxu0 0
      %297 = vmatpush1.bf16.msra.mxu0 0
      %298 = vmatprep.subr.bf16.mxu0 0
      %299 = vmatpush1.bf16.msra.mxu0 %v279
      %300 = vmatprep.subr.bf16.mxu0 0
      %301 = vmatpush1.bf16.msra.mxu0 %v278
      %302 = vmatprep.subr.bf16.mxu0 0
      %303 = vmatpush2.bf16.msra.mxu0 0
      %304 = vmatprep.subr.bf16.mxu0 0
      %305 = vmatpush2.bf16.msra.mxu0 0
      %306 = vmatprep.subr.bf16.mxu0 0
      %307 = vmatpush2.bf16.msra.mxu0 0
      %308 = vmatprep.subr.bf16.mxu0 0
      %309 = vmatpush2.bf16.msra.mxu0 0
      %310 = vmatprep.subr.bf16.mxu0 0
      %311 = vmatpush2.bf16.msra.mxu0 0
      %312 = vmatprep.subr.bf16.mxu0 0
      %313 = vmatpush2.bf16.msra.mxu0 0
      %314 = vmatprep.subr.bf16.mxu0 0
      %315 = vmatpush2.bf16.msra.mxu0 0
      %316 = vmatprep.subr.bf16.mxu0 0
      %317 = vmatpush2.bf16.msra.mxu0 0
      %318 = vmatprep.mubr.bf16.mxu0 0
      %319 = vmatmul.mubr.bf16.gmra.mxu0 %v284
      %v320 = vpop.f32.mrf.mxu0
      %v321 = vadd.f32 0.0, %v320
      %v322 = vpop.f32.mrf.mxu0
      %v323 = vpop.f32.mrf.mxu0
      %v324 = vadd.f32 0.0, %v323
      %v325 = vpop.f32.mrf.mxu0
      %326 = vdwg.mxu0
      %v331 = vunpack.c.l.b16 %v244
      %v332 = vunpack.c.l.b16 %v245
      %v333 = vunpack.c.l.b16 %v246
      %v334 = vunpack.c.l.b16 %v247
      %v335 = vpack.c.b16 %v332, %v331
      %v336 = vpack.c.b16 %v334, %v333
      %v340 = vsel %vm282, %v268, 0
      %342 = vmatprep.subr.bf16.mxu0 0
      %343 = vmatpush1.bf16.msra.mxu0 0
      %344 = vmatprep.subr.bf16.mxu0 0
      %345 = vmatpush1.bf16.msra.mxu0 0
      %346 = vmatprep.subr.bf16.mxu0 0
      %347 = vmatpush1.bf16.msra.mxu0 0
      %348 = vmatprep.subr.bf16.mxu0 0
      %349 = vmatpush1.bf16.msra.mxu0 0
      %350 = vmatprep.subr.bf16.mxu0 0
      %351 = vmatpush1.bf16.msra.mxu0 0
      %352 = vmatprep.subr.bf16.mxu0 0
      %353 = vmatpush1.bf16.msra.mxu0 0
      %354 = vmatprep.subr.bf16.mxu0 0
      %355 = vmatpush1.bf16.msra.mxu0 %v336
      %356 = vmatprep.subr.bf16.mxu0 0
      %357 = vmatpush1.bf16.msra.mxu0 %v335
      %358 = vmatprep.subr.bf16.mxu0 0
      %359 = vmatpush2.bf16.msra.mxu0 0
      %360 = vmatprep.subr.bf16.mxu0 0
      %361 = vmatpush2.bf16.msra.mxu0 0
      %362 = vmatprep.subr.bf16.mxu0 0
      %363 = vmatpush2.bf16.msra.mxu0 0
      %364 = vmatprep.subr.bf16.mxu0 0
      %365 = vmatpush2.bf16.msra.mxu0 0
      %366 = vmatprep.subr.bf16.mxu0 0
      %367 = vmatpush2.bf16.msra.mxu0 0
      %368 = vmatprep.subr.bf16.mxu0 0
      %369 = vmatpush2.bf16.msra.mxu0 0
      %370 = vmatprep.subr.bf16.mxu0 0
      %371 = vmatpush2.bf16.msra.mxu0 0
      %372 = vmatprep.subr.bf16.mxu0 0
      %373 = vmatpush2.bf16.msra.mxu0 0
      %374 = vmatprep.mubr.bf16.mxu0 0
      %375 = vmatmul.mubr.bf16.gmra.mxu0 %v340
      %v376 = vpop.f32.mrf.mxu0
      %v377 = vadd.f32 %v321, %v376
      %v378 = vpop.f32.mrf.mxu0
      %v379 = vpop.f32.mrf.mxu0
      %v380 = vadd.f32 %v324, %v379
      %v381 = vpop.f32.mrf.mxu0
      %382 = vdwg.mxu0
      %v383 = vrot.slane %v229, 1
      %v384 = vrot.slane %v230, 1
      %vm385 = vcmp.lt.s32.totalorder %v232, 7
      %v386 = vsel %vm385, %v383, %v384
      %v387 = vsel %vm385, %v384, %v383
      %v388 = vsel %vm236, 1, 0
      %v389 = vsel %vm237, 1, 0
      %vm390 = vcmp.eq.s32.totalorder %v388, 1
      %vm391 = vcmp.eq.s32.totalorder %v389, 1
      %v392 = vsel %vm390, %v386, 0.0
      %v393 = vsel %vm391, %v387, 0.0
      %v394 = vpack.c.bf16 %v393, %v392
      %v399 = vunpack.c.l.b16 %v252
      %v400 = vunpack.c.l.b16 %v253
      %v401 = vunpack.c.l.b16 %v254
      %v402 = vunpack.c.l.b16 %v255
      %v403 = vpack.c.b16 %v400, %v399
      %v404 = vpack.c.b16 %v402, %v401
      %v408 = vsel %vm282, %v394, 0
      %410 = vmatprep.subr.bf16.mxu0 0
      %411 = vmatpush1.bf16.msra.mxu0 0
      %412 = vmatprep.subr.bf16.mxu0 0
      %413 = vmatpush1.bf16.msra.mxu0 0
      %414 = vmatprep.subr.bf16.mxu0 0
      %415 = vmatpush1.bf16.msra.mxu0 0
      %416 = vmatprep.subr.bf16.mxu0 0
      %417 = vmatpush1.bf16.msra.mxu0 0
      %418 = vmatprep.subr.bf16.mxu0 0
      %419 = vmatpush1.bf16.msra.mxu0 0
      %420 = vmatprep.subr.bf16.mxu0 0
      %421 = vmatpush1.bf16.msra.mxu0 0
      %422 = vmatprep.subr.bf16.mxu0 0
      %423 = vmatpush1.bf16.msra.mxu0 %v404
      %424 = vmatprep.subr.bf16.mxu0 0
      %425 = vmatpush1.bf16.msra.mxu0 %v403
      %426 = vmatprep.subr.bf16.mxu0 0
      %427 = vmatpush2.bf16.msra.mxu0 0
      %428 = vmatprep.subr.bf16.mxu0 0
      %429 = vmatpush2.bf16.msra.mxu0 0
      %430 = vmatprep.subr.bf16.mxu0 0
      %431 = vmatpush2.bf16.msra.mxu0 0
      %432 = vmatprep.subr.bf16.mxu0 0
      %433 = vmatpush2.bf16.msra.mxu0 0
      %434 = vmatprep.subr.bf16.mxu0 0
      %435 = vmatpush2.bf16.msra.mxu0 0
      %436 = vmatprep.subr.bf16.mxu0 0
      %437 = vmatpush2.bf16.msra.mxu0 0
      %438 = vmatprep.subr.bf16.mxu0 0
      %439 = vmatpush2.bf16.msra.mxu0 0
      %440 = vmatprep.subr.bf16.mxu0 0
      %441 = vmatpush2.bf16.msra.mxu0 0
      %442 = vmatprep.mubr.bf16.mxu0 0
      %443 = vmatmul.mubr.bf16.gmra.mxu0 %v408
      %v444 = vpop.f32.mrf.mxu0
      %v445 = vadd.f32 0.0, %v444
      %v446 = vpop.f32.mrf.mxu0
      %v447 = vpop.f32.mrf.mxu0
      %v448 = vadd.f32 0.0, %v447
      %v449 = vpop.f32.mrf.mxu0
      %450 = vdwg.mxu0
      %v451 = vadd.f32 %v377, %v445
      %v452 = vadd.f32 %v380, %v448
      %v453 = vlaneseq
      %v454 = vshrl.u32 %v453, 7
      %v455 = vsub.s32 0, %v454
      %v456 = vrot.slane %v256, %v455
      %v457 = vmul.f32 %v451, %v456
      %v458 = vmul.f32 %v452, %v456
      %v459 = vlaneseq
      %v460 = vshrl.u32 %v459, 7
      %v461 = vsub.s32 1, %v460
      %v462 = vrot.slane %v256, %v461
      %v463 = vadd.f32 %v457, %v462
      %v464 = vadd.f32 %v458, %v462
      %vm465 = vcmp.ge.f32.partialorder %v463, 0.0
      %vm466 = vcmp.ge.f32.partialorder %v464, 0.0
      %v467 = vmul.f32 %v463, 0.01
      %v468 = vmul.f32 %v464, 0.01
      %v469 = vsel %vm465, %v463, %v467
      %v470 = vsel %vm466, %v464, %v468
      %s471 = scalar_lea.vmem %s1, 48
      %v472 = vld [vmem:[%s471] sm:$0xf]
      %v473 = vld [vmem:[%s471 + $0x4] sm:$0xf]
      %v474 = vld [vmem:[%s471 + $0x8] sm:$0xf]
      %v475 = vld [vmem:[%s471 + $0xc] sm:$0xf]
      %v476 = vld [vmem:[%s471 + $0x10] sm:$0xf]
      %v477 = vld [vmem:[%s471 + $0x14] sm:$0xf]
      %v478 = vld [vmem:[%s471 + $0x18] sm:$0xf]
      %v479 = vld [vmem:[%s471 + $0x1c] sm:$0xf]
      %v480 = vld [vmem:[%s471 + $0x20] sm:$0xf]
      %v481 = vld [vmem:[%s471 + $0x24] sm:$0xf]
      %v482 = vld [vmem:[%s471 + $0x28] sm:$0xf]
      %v483 = vld [vmem:[%s471 + $0x2c] sm:$0xf]
      %s484 = scalar_lea.vmem %s2, 2
      %v485 = vld [vmem:[%s484] sm:$0x3]
      %v486 = vrot.slane %v469, 7
      %v487 = vrot.slane %v470, 7
      %v488 = vsel %vm259, %v486, %v487
      %v489 = vsel %vm259, %v487, %v486
      %v490 = vsel %vm264, %v489, 0.0
      %v491 = vsel %vm265, %v488, 0.0
      %v492 = vpack.c.bf16 %v491, %v490
      %v493 = vpack.c.bf16 %v470, %v469
      %v498 = vunpack.c.l.b16 %v476
      %v499 = vunpack.c.l.b16 %v477
      %v500 = vunpack.c.l.b16 %v478
      %v501 = vunpack.c.l.b16 %v479
      %v502 = vpack.c.b16 %v499, %v498
      %v503 = vpack.c.b16 %v501, %v500
      %v507 = vsel %vm282, %v493, 0
      %509 = vmatprep.subr.bf16.mxu0 0
      %510 = vmatpush1.bf16.msra.mxu0 0
      %511 = vmatprep.subr.bf16.mxu0 0
      %512 = vmatpush1.bf16.msra.mxu0 0
      %513 = vmatprep.subr.bf16.mxu0 0
      %514 = vmatpush1.bf16.msra.mxu0 0
      %515 = vmatprep.subr.bf16.mxu0 0
      %516 = vmatpush1.bf16.msra.mxu0 0
      %517 = vmatprep.subr.bf16.mxu0 0
      %518 = vmatpush1.bf16.msra.mxu0 0
      %519 = vmatprep.subr.bf16.mxu0 0
      %520 = vmatpush1.bf16.msra.mxu0 0
      %521 = vmatprep.subr.bf16.mxu0 0
      %522 = vmatpush1.bf16.msra.mxu0 %v503
      %523 = vmatprep.subr.bf16.mxu0 0
      %524 = vmatpush1.bf16.msra.mxu0 %v502
      %525 = vmatprep.subr.bf16.mxu0 0
      %526 = vmatpush2.bf16.msra.mxu0 0
      %527 = vmatprep.subr.bf16.mxu0 0
      %528 = vmatpush2.bf16.msra.mxu0 0
      %529 = vmatprep.subr.bf16.mxu0 0
      %530 = vmatpush2.bf16.msra.mxu0 0
      %531 = vmatprep.subr.bf16.mxu0 0
      %532 = vmatpush2.bf16.msra.mxu0 0
      %533 = vmatprep.subr.bf16.mxu0 0
      %534 = vmatpush2.bf16.msra.mxu0 0
      %535 = vmatprep.subr.bf16.mxu0 0
      %536 = vmatpush2.bf16.msra.mxu0 0
      %537 = vmatprep.subr.bf16.mxu0 0
      %538 = vmatpush2.bf16.msra.mxu0 0
      %539 = vmatprep.subr.bf16.mxu0 0
      %540 = vmatpush2.bf16.msra.mxu0 0
      %541 = vmatprep.mubr.bf16.mxu0 0
      %542 = vmatmul.mubr.bf16.gmra.mxu0 %v507
      %v543 = vpop.f32.mrf.mxu0
      %v544 = vadd.f32 0.0, %v543
      %v545 = vpop.f32.mrf.mxu0
      %v546 = vpop.f32.mrf.mxu0
      %v547 = vadd.f32 0.0, %v546
      %v548 = vpop.f32.mrf.mxu0
      %549 = vdwg.mxu0
      %v554 = vunpack.c.l.b16 %v472
      %v555 = vunpack.c.l.b16 %v473
      %v556 = vunpack.c.l.b16 %v474
      %v557 = vunpack.c.l.b16 %v475
      %v558 = vpack.c.b16 %v555, %v554
      %v559 = vpack.c.b16 %v557, %v556
      %v563 = vsel %vm282, %v492, 0
      %565 = vmatprep.subr.bf16.mxu0 0
      %566 = vmatpush1.bf16.msra.mxu0 0
      %567 = vmatprep.subr.bf16.mxu0 0
      %568 = vmatpush1.bf16.msra.mxu0 0
      %569 = vmatprep.subr.bf16.mxu0 0
      %570 = vmatpush1.bf16.msra.mxu0 0
      %571 = vmatprep.subr.bf16.mxu0 0
      %572 = vmatpush1.bf16.msra.mxu0 0
      %573 = vmatprep.subr.bf16.mxu0 0
      %574 = vmatpush1.bf16.msra.mxu0 0
      %575 = vmatprep.subr.bf16.mxu0 0
      %576 = vmatpush1.bf16.msra.mxu0 0
      %577 = vmatprep.subr.bf16.mxu0 0
      %578 = vmatpush1.bf16.msra.mxu0 %v559
      %579 = vmatprep.subr.bf16.mxu0 0
      %580 = vmatpush1.bf16.msra.mxu0 %v558
      %581 = vmatprep.subr.bf16.mxu0 0
      %582 = vmatpush2.bf16.msra.mxu0 0
      %583 = vmatprep.subr.bf16.mxu0 0
      %584 = vmatpush2.bf16.msra.mxu0 0
      %585 = vmatprep.subr.bf16.mxu0 0
      %586 = vmatpush2.bf16.msra.mxu0 0
      %587 = vmatprep.subr.bf16.mxu0 0
      %588 = vmatpush2.bf16.msra.mxu0 0
      %589 = vmatprep.subr.bf16.mxu0 0
      %590 = vmatpush2.bf16.msra.mxu0 0
      %591 = vmatprep.subr.bf16.mxu0 0
      %592 = vmatpush2.bf16.msra.mxu0 0
      %593 = vmatprep.subr.bf16.mxu0 0
      %594 = vmatpush2.bf16.msra.mxu0 0
      %595 = vmatprep.subr.bf16.mxu0 0
      %596 = vmatpush2.bf16.msra.mxu0 0
      %597 = vmatprep.mubr.bf16.mxu0 0
      %598 = vmatmul.mubr.bf16.gmra.mxu0 %v563
      %v599 = vpop.f32.mrf.mxu0
      %v600 = vadd.f32 %v544, %v599
      %v601 = vpop.f32.mrf.mxu0
      %v602 = vpop.f32.mrf.mxu0
      %v603 = vadd.f32 %v547, %v602
      %v604 = vpop.f32.mrf.mxu0
      %605 = vdwg.mxu0
      %v606 = vrot.slane %v469, 1
      %v607 = vrot.slane %v470, 1
      %v608 = vsel %vm385, %v606, %v607
      %v609 = vsel %vm385, %v607, %v606
      %v610 = vsel %vm390, %v608, 0.0
      %v611 = vsel %vm391, %v609, 0.0
      %v612 = vpack.c.bf16 %v611, %v610
      %v617 = vunpack.c.l.b16 %v480
      %v618 = vunpack.c.l.b16 %v481
      %v619 = vunpack.c.l.b16 %v482
      %v620 = vunpack.c.l.b16 %v483
      %v621 = vpack.c.b16 %v618, %v617
      %v622 = vpack.c.b16 %v620, %v619
      %v626 = vsel %vm282, %v612, 0
      %628 = vmatprep.subr.bf16.mxu0 0
      %629 = vmatpush1.bf16.msra.mxu0 0
      %630 = vmatprep.subr.bf16.mxu0 0
      %631 = vmatpush1.bf16.msra.mxu0 0
      %632 = vmatprep.subr.bf16.mxu0 0
      %633 = vmatpush1.bf16.msra.mxu0 0
      %634 = vmatprep.subr.bf16.mxu0 0
      %635 = vmatpush1.bf16.msra.mxu0 0
      %636 = vmatprep.subr.bf16.mxu0 0
      %637 = vmatpush1.bf16.msra.mxu0 0
      %638 = vmatprep.subr.bf16.mxu0 0
      %639 = vmatpush1.bf16.msra.mxu0 0
      %640 = vmatprep.subr.bf16.mxu0 0
      %641 = vmatpush1.bf16.msra.mxu0 %v622
      %642 = vmatprep.subr.bf16.mxu0 0
      %643 = vmatpush1.bf16.msra.mxu0 %v621
      %644 = vmatprep.subr.bf16.mxu0 0
      %645 = vmatpush2.bf16.msra.mxu0 0
      %646 = vmatprep.subr.bf16.mxu0 0
      %647 = vmatpush2.bf16.msra.mxu0 0
      %648 = vmatprep.subr.bf16.mxu0 0
      %649 = vmatpush2.bf16.msra.mxu0 0
      %650 = vmatprep.subr.bf16.mxu0 0
      %651 = vmatpush2.bf16.msra.mxu0 0
      %652 = vmatprep.subr.bf16.mxu0 0
      %653 = vmatpush2.bf16.msra.mxu0 0
      %654 = vmatprep.subr.bf16.mxu0 0
      %655 = vmatpush2.bf16.msra.mxu0 0
      %656 = vmatprep.subr.bf16.mxu0 0
      %657 = vmatpush2.bf16.msra.mxu0 0
      %658 = vmatprep.subr.bf16.mxu0 0
      %659 = vmatpush2.bf16.msra.mxu0 0
      %660 = vmatprep.mubr.bf16.mxu0 0
      %661 = vmatmul.mubr.bf16.gmra.mxu0 %v626
      %v662 = vpop.f32.mrf.mxu0
      %v663 = vadd.f32 0.0, %v662
      %v664 = vpop.f32.mrf.mxu0
      %v665 = vpop.f32.mrf.mxu0
      %v666 = vadd.f32 0.0, %v665
      %v667 = vpop.f32.mrf.mxu0
      %668 = vdwg.mxu0
      %v669 = vadd.f32 %v600, %v663
      %v670 = vadd.f32 %v603, %v666
      %v671 = vlaneseq
      %v672 = vshrl.u32 %v671, 7
      %v673 = vsub.s32 0, %v672
      %v674 = vrot.slane %v485, %v673
      %v675 = vmul.f32 %v669, %v674
      %v676 = vmul.f32 %v670, %v674
      %v677 = vlaneseq
      %v678 = vshrl.u32 %v677, 7
      %v679 = vsub.s32 1, %v678
      %v680 = vrot.slane %v485, %v679
      %v681 = vadd.f32 %v675, %v680
      %v682 = vadd.f32 %v676, %v680
      %vm683 = vcmp.ge.f32.partialorder %v681, 0.0
      %vm684 = vcmp.ge.f32.partialorder %v682, 0.0
      %v685 = vmul.f32 %v681, 0.01
      %v686 = vmul.f32 %v682, 0.01
      %v687 = vsel %vm683, %v681, %v685
      %v688 = vsel %vm684, %v682, %v686
      %s689 = scalar_lea.vmem %s1, 96
      %v690 = vld [vmem:[%s689] sm:$0xf]
      %v691 = vld [vmem:[%s689 + $0x4] sm:$0xf]
      %v692 = vld [vmem:[%s689 + $0x8] sm:$0xf]
      %v693 = vld [vmem:[%s689 + $0xc] sm:$0xf]
      %v694 = vld [vmem:[%s689 + $0x10] sm:$0xf]
      %v695 = vld [vmem:[%s689 + $0x14] sm:$0xf]
      %v696 = vld [vmem:[%s689 + $0x18] sm:$0xf]
      %v697 = vld [vmem:[%s689 + $0x1c] sm:$0xf]
      %v698 = vld [vmem:[%s689 + $0x20] sm:$0xf]
      %v699 = vld [vmem:[%s689 + $0x24] sm:$0xf]
      %v700 = vld [vmem:[%s689 + $0x28] sm:$0xf]
      %v701 = vld [vmem:[%s689 + $0x2c] sm:$0xf]
      %s702 = scalar_lea.vmem %s2, 4
      %v703 = vld [vmem:[%s702] sm:$0x3]
      %v704 = vrot.slane %v687, 7
      %v705 = vrot.slane %v688, 7
      %v706 = vsel %vm259, %v704, %v705
      %v707 = vsel %vm259, %v705, %v704
      %v708 = vsel %vm264, %v707, 0.0
      %v709 = vsel %vm265, %v706, 0.0
      %v710 = vpack.c.bf16 %v709, %v708
      %v711 = vpack.c.bf16 %v688, %v687
      %v716 = vunpack.c.l.b16 %v694
      %v717 = vunpack.c.l.b16 %v695
      %v718 = vunpack.c.l.b16 %v696
      %v719 = vunpack.c.l.b16 %v697
      %v720 = vpack.c.b16 %v717, %v716
      %v721 = vpack.c.b16 %v719, %v718
      %v725 = vsel %vm282, %v711, 0
      %727 = vmatprep.subr.bf16.mxu0 0
      %728 = vmatpush1.bf16.msra.mxu0 0
      %729 = vmatprep.subr.bf16.mxu0 0
      %730 = vmatpush1.bf16.msra.mxu0 0
      %731 = vmatprep.subr.bf16.mxu0 0
      %732 = vmatpush1.bf16.msra.mxu0 0
      %733 = vmatprep.subr.bf16.mxu0 0
      %734 = vmatpush1.bf16.msra.mxu0 0
      %735 = vmatprep.subr.bf16.mxu0 0
      %736 = vmatpush1.bf16.msra.mxu0 0
      %737 = vmatprep.subr.bf16.mxu0 0
      %738 = vmatpush1.bf16.msra.mxu0 0
      %739 = vmatprep.subr.bf16.mxu0 0
      %740 = vmatpush1.bf16.msra.mxu0 %v721
      %741 = vmatprep.subr.bf16.mxu0 0
      %742 = vmatpush1.bf16.msra.mxu0 %v720
      %743 = vmatprep.subr.bf16.mxu0 0
      %744 = vmatpush2.bf16.msra.mxu0 0
      %745 = vmatprep.subr.bf16.mxu0 0
      %746 = vmatpush2.bf16.msra.mxu0 0
      %747 = vmatprep.subr.bf16.mxu0 0
      %748 = vmatpush2.bf16.msra.mxu0 0
      %749 = vmatprep.subr.bf16.mxu0 0
      %750 = vmatpush2.bf16.msra.mxu0 0
      %751 = vmatprep.subr.bf16.mxu0 0
      %752 = vmatpush2.bf16.msra.mxu0 0
      %753 = vmatprep.subr.bf16.mxu0 0
      %754 = vmatpush2.bf16.msra.mxu0 0
      %755 = vmatprep.subr.bf16.mxu0 0
      %756 = vmatpush2.bf16.msra.mxu0 0
      %757 = vmatprep.subr.bf16.mxu0 0
      %758 = vmatpush2.bf16.msra.mxu0 0
      %759 = vmatprep.mubr.bf16.mxu0 0
      %760 = vmatmul.mubr.bf16.gmra.mxu0 %v725
      %v761 = vpop.f32.mrf.mxu0
      %v762 = vadd.f32 0.0, %v761
      %v763 = vpop.f32.mrf.mxu0
      %v764 = vpop.f32.mrf.mxu0
      %v765 = vadd.f32 0.0, %v764
      %v766 = vpop.f32.mrf.mxu0
      %767 = vdwg.mxu0
      %v772 = vunpack.c.l.b16 %v690
      %v773 = vunpack.c.l.b16 %v691
      %v774 = vunpack.c.l.b16 %v692
      %v775 = vunpack.c.l.b16 %v693
      %v776 = vpack.c.b16 %v773, %v772
      %v777 = vpack.c.b16 %v775, %v774
      %v781 = vsel %vm282, %v710, 0
      %783 = vmatprep.subr.bf16.mxu0 0
      %784 = vmatpush1.bf16.msra.mxu0 0
      %785 = vmatprep.subr.bf16.mxu0 0
      %786 = vmatpush1.bf16.msra.mxu0 0
      %787 = vmatprep.subr.bf16.mxu0 0
      %788 = vmatpush1.bf16.msra.mxu0 0
      %789 = vmatprep.subr.bf16.mxu0 0
      %790 = vmatpush1.bf16.msra.mxu0 0
      %791 = vmatprep.subr.bf16.mxu0 0
      %792 = vmatpush1.bf16.msra.mxu0 0
      %793 = vmatprep.subr.bf16.mxu0 0
      %794 = vmatpush1.bf16.msra.mxu0 0
      %795 = vmatprep.subr.bf16.mxu0 0
      %796 = vmatpush1.bf16.msra.mxu0 %v777
      %797 = vmatprep.subr.bf16.mxu0 0
      %798 = vmatpush1.bf16.msra.mxu0 %v776
      %799 = vmatprep.subr.bf16.mxu0 0
      %800 = vmatpush2.bf16.msra.mxu0 0
      %801 = vmatprep.subr.bf16.mxu0 0
      %802 = vmatpush2.bf16.msra.mxu0 0
      %803 = vmatprep.subr.bf16.mxu0 0
      %804 = vmatpush2.bf16.msra.mxu0 0
      %805 = vmatprep.subr.bf16.mxu0 0
      %806 = vmatpush2.bf16.msra.mxu0 0
      %807 = vmatprep.subr.bf16.mxu0 0
      %808 = vmatpush2.bf16.msra.mxu0 0
      %809 = vmatprep.subr.bf16.mxu0 0
      %810 = vmatpush2.bf16.msra.mxu0 0
      %811 = vmatprep.subr.bf16.mxu0 0
      %812 = vmatpush2.bf16.msra.mxu0 0
      %813 = vmatprep.subr.bf16.mxu0 0
      %814 = vmatpush2.bf16.msra.mxu0 0
      %815 = vmatprep.mubr.bf16.mxu0 0
      %816 = vmatmul.mubr.bf16.gmra.mxu0 %v781
      %v817 = vpop.f32.mrf.mxu0
      %v818 = vadd.f32 %v762, %v817
      %v819 = vpop.f32.mrf.mxu0
      %v820 = vpop.f32.mrf.mxu0
      %v821 = vadd.f32 %v765, %v820
      %v822 = vpop.f32.mrf.mxu0
      %823 = vdwg.mxu0
      %v824 = vrot.slane %v687, 1
      %v825 = vrot.slane %v688, 1
      %v826 = vsel %vm385, %v824, %v825
      %v827 = vsel %vm385, %v825, %v824
      %v828 = vsel %vm390, %v826, 0.0
      %v829 = vsel %vm391, %v827, 0.0
      %v830 = vpack.c.bf16 %v829, %v828
      %v835 = vunpack.c.l.b16 %v698
      %v836 = vunpack.c.l.b16 %v699
      %v837 = vunpack.c.l.b16 %v700
      %v838 = vunpack.c.l.b16 %v701
      %v839 = vpack.c.b16 %v836, %v835
      %v840 = vpack.c.b16 %v838, %v837
      %v844 = vsel %vm282, %v830, 0
      %846 = vmatprep.subr.bf16.mxu0 0
      %847 = vmatpush1.bf16.msra.mxu0 0
      %848 = vmatprep.subr.bf16.mxu0 0
      %849 = vmatpush1.bf16.msra.mxu0 0
      %850 = vmatprep.subr.bf16.mxu0 0
      %851 = vmatpush1.bf16.msra.mxu0 0
      %852 = vmatprep.subr.bf16.mxu0 0
      %853 = vmatpush1.bf16.msra.mxu0 0
      %854 = vmatprep.subr.bf16.mxu0 0
      %855 = vmatpush1.bf16.msra.mxu0 0
      %856 = vmatprep.subr.bf16.mxu0 0
      %857 = vmatpush1.bf16.msra.mxu0 0
      %858 = vmatprep.subr.bf16.mxu0 0
      %859 = vmatpush1.bf16.msra.mxu0 %v840
      %860 = vmatprep.subr.bf16.mxu0 0
      %861 = vmatpush1.bf16.msra.mxu0 %v839
      %862 = vmatprep.subr.bf16.mxu0 0
      %863 = vmatpush2.bf16.msra.mxu0 0
      %864 = vmatprep.subr.bf16.mxu0 0
      %865 = vmatpush2.bf16.msra.mxu0 0
      %866 = vmatprep.subr.bf16.mxu0 0
      %867 = vmatpush2.bf16.msra.mxu0 0
      %868 = vmatprep.subr.bf16.mxu0 0
      %869 = vmatpush2.bf16.msra.mxu0 0
      %870 = vmatprep.subr.bf16.mxu0 0
      %871 = vmatpush2.bf16.msra.mxu0 0
      %872 = vmatprep.subr.bf16.mxu0 0
      %873 = vmatpush2.bf16.msra.mxu0 0
      %874 = vmatprep.subr.bf16.mxu0 0
      %875 = vmatpush2.bf16.msra.mxu0 0
      %876 = vmatprep.subr.bf16.mxu0 0
      %877 = vmatpush2.bf16.msra.mxu0 0
      %878 = vmatprep.mubr.bf16.mxu0 0
      %879 = vmatmul.mubr.bf16.gmra.mxu0 %v844
      %v880 = vpop.f32.mrf.mxu0
      %v881 = vadd.f32 0.0, %v880
      %v882 = vpop.f32.mrf.mxu0
      %v883 = vpop.f32.mrf.mxu0
      %v884 = vadd.f32 0.0, %v883
      %v885 = vpop.f32.mrf.mxu0
      %886 = vdwg.mxu0
      %v887 = vadd.f32 %v818, %v881
      %v888 = vadd.f32 %v821, %v884
      %v889 = vlaneseq
      %v890 = vshrl.u32 %v889, 7
      %v891 = vsub.s32 0, %v890
      %v892 = vrot.slane %v703, %v891
      %v893 = vmul.f32 %v887, %v892
      %v894 = vmul.f32 %v888, %v892
      %v895 = vlaneseq
      %v896 = vshrl.u32 %v895, 7
      %v897 = vsub.s32 1, %v896
      %v898 = vrot.slane %v703, %v897
      %v899 = vadd.f32 %v893, %v898
      %v900 = vadd.f32 %v894, %v898
      %vm901 = vcmp.ge.f32.partialorder %v899, 0.0
      %vm902 = vcmp.ge.f32.partialorder %v900, 0.0
      %v903 = vmul.f32 %v899, 0.01
      %v904 = vmul.f32 %v900, 0.01
      %v905 = vsel %vm901, %v899, %v903
      %v906 = vsel %vm902, %v900, %v904
      %v907 = vld [vmem:[%s3] sm:$0xff]
      %v908 = vld [vmem:[%s3 + $0x8] sm:$0xff]
      %v909 = vld [vmem:[%s3 + $0x10] sm:$0xff]
      %v910 = vld [vmem:[%s3 + $0x18] sm:$0xff]
      %v911 = vld [vmem:[%s4] sm:$0xff]
      %v912 = vsel %vm282, %v905, 0.0
      %913 = vadd.xlane.f32.xlu0 %v912
      %v914 = vpop.xlane.xlu0 %913
      %v915 = vsel %vm282, %v906, 0.0
      %916 = vadd.xlane.f32.xlu0 %v915
      %v917 = vpop.xlane.xlu0 %916
      %v918 = vrcp.pop 32.0
      %v919 = vmul.f32 %v914, %v918
      %v920 = vmul.f32 %v917, %v918
      %v921 = vsub.f32 %v905, %v919
      %v922 = vsub.f32 %v906, %v920
      %v923 = vmul.f32 %v921, %v921
      %v924 = vmul.f32 %v922, %v922
      %v925 = vsel %vm282, %v923, 0.0
      %926 = vadd.xlane.f32.xlu0 %v925
      %v927 = vpop.xlane.xlu0 %926
      %v928 = vsel %vm282, %v924, 0.0
      %929 = vadd.xlane.f32.xlu0 %v928
      %v930 = vpop.xlane.xlu0 %929
      %v931 = vmul.f32 %v927, %v918
      %v932 = vmul.f32 %v930, %v918
      %v933 = vadd.f32 %v931, 1e-08
      %v934 = vadd.f32 %v932, 1e-08
      %v935 = vrsqrt.pop %v933
      %v936 = vrsqrt.pop %v934
      %v937 = vmul.f32 %v921, %v935
      %v938 = vmul.f32 %v922, %v936
      %v939 = vlaneseq
      %v940 = vshrl.u32 %v939, 7
      %v941 = vsub.s32 0, %v940
      %v942 = vrot.slane %v911, %v941
      %v943 = vmul.f32 %v937, %v942
      %v944 = vmul.f32 %v938, %v942
      %v945 = vlaneseq
      %v946 = vshrl.u32 %v945, 7
      %v947 = vsub.s32 1, %v946
      %v948 = vrot.slane %v911, %v947
      %v949 = vadd.f32 %v943, %v948
      %v950 = vadd.f32 %v944, %v948
      %v951 = vpack.c.bf16 %v950, %v949
      %v952 = vlaneseq
      %v953 = vshrl.u32 %v952, 7
      %v954 = vsub.s32 2, %v953
      %v955 = vrot.slane %v911, %v954
      %v960 = vunpack.c.l.b16 %v907
      %v961 = vunpack.c.l.b16 %v908
      %v962 = vunpack.c.l.b16 %v909
      %v963 = vunpack.c.l.b16 %v910
      %v964 = vpack.c.b16 %v961, %v960
      %v965 = vpack.c.b16 %v963, %v962
      %v969 = vsel %vm282, %v951, 0
      %971 = vmatprep.subr.bf16.mxu0 0
      %972 = vmatpush1.bf16.msra.mxu0 0
      %973 = vmatprep.subr.bf16.mxu0 0
      %974 = vmatpush1.bf16.msra.mxu0 0
      %975 = vmatprep.subr.bf16.mxu0 0
      %976 = vmatpush1.bf16.msra.mxu0 0
      %977 = vmatprep.subr.bf16.mxu0 0
      %978 = vmatpush1.bf16.msra.mxu0 0
      %979 = vmatprep.subr.bf16.mxu0 0
      %980 = vmatpush1.bf16.msra.mxu0 0
      %981 = vmatprep.subr.bf16.mxu0 0
      %982 = vmatpush1.bf16.msra.mxu0 0
      %983 = vmatprep.subr.bf16.mxu0 0
      %984 = vmatpush1.bf16.msra.mxu0 %v965
      %985 = vmatprep.subr.bf16.mxu0 0
      %986 = vmatpush1.bf16.msra.mxu0 %v964
      %987 = vmatprep.subr.bf16.mxu0 0
      %988 = vmatpush2.bf16.msra.mxu0 0
      %989 = vmatprep.subr.bf16.mxu0 0
      %990 = vmatpush2.bf16.msra.mxu0 0
      %991 = vmatprep.subr.bf16.mxu0 0
      %992 = vmatpush2.bf16.msra.mxu0 0
      %993 = vmatprep.subr.bf16.mxu0 0
      %994 = vmatpush2.bf16.msra.mxu0 0
      %995 = vmatprep.subr.bf16.mxu0 0
      %996 = vmatpush2.bf16.msra.mxu0 0
      %997 = vmatprep.subr.bf16.mxu0 0
      %998 = vmatpush2.bf16.msra.mxu0 0
      %999 = vmatprep.subr.bf16.mxu0 0
      %1000 = vmatpush2.bf16.msra.mxu0 0
      %1001 = vmatprep.subr.bf16.mxu0 0
      %1002 = vmatpush2.bf16.msra.mxu0 0
      %1003 = vmatprep.mubr.bf16.mxu0 0
      %1004 = vmatmul.mubr.bf16.gmra.mxu0 %v969
      %v1005 = vpop.f32.mrf.mxu0
      %v1006 = vadd.f32 %v955, %v1005
      %v1007 = vpop.f32.mrf.mxu0
      %v1008 = vpop.f32.mrf.mxu0
      %v1009 = vadd.f32 %v955, %v1008
      %v1010 = vpop.f32.mrf.mxu0
      %1011 = vdwg.mxu0
      %v1012 = vpack.c.bf16 %v1009, %v1006
      %1014 = vrot.lane.b32.xlu0 %v1012, 96
      %v1015 = vpop.permute.xlu0 %1014
      %v1017 = vsel %vm282, %v1012, 0
      %v1020 = vsel %vm282, %v1015, 0
      %1022 = vmatprep.subr.bf16.mxu0 0
      %1023 = vmatpush1.bf16.xpose.msra.mxu0 0
      %1024 = vmatprep.subr.bf16.mxu0 0
      %1025 = vmatpush1.bf16.xpose.msra.mxu0 0
      %1026 = vmatprep.subr.bf16.mxu0 0
      %1027 = vmatpush1.bf16.xpose.msra.mxu0 0
      %1028 = vmatprep.subr.bf16.mxu0 0
      %1029 = vmatpush1.bf16.xpose.msra.mxu0 0
      %1030 = vmatprep.subr.bf16.mxu0 0
      %1031 = vmatpush1.bf16.xpose.msra.mxu0 0
      %1032 = vmatprep.subr.bf16.mxu0 0
      %1033 = vmatpush1.bf16.xpose.msra.mxu0 0
      %1034 = vmatprep.subr.bf16.mxu0 0
      %1035 = vmatpush1.bf16.xpose.msra.mxu0 0
      %1036 = vmatprep.subr.bf16.mxu0 0
      %1037 = vmatpush1.bf16.xpose.msra.mxu0 %v1020
      %1038 = vmatprep.subr.bf16.mxu0 0
      %1039 = vmatpush2.bf16.xpose.msra.mxu0 0
      %1040 = vmatprep.subr.bf16.mxu0 0
      %1041 = vmatpush2.bf16.xpose.msra.mxu0 0
      %1042 = vmatprep.subr.bf16.mxu0 0
      %1043 = vmatpush2.bf16.xpose.msra.mxu0 0
      %1044 = vmatprep.subr.bf16.mxu0 0
      %1045 = vmatpush2.bf16.xpose.msra.mxu0 0
      %1046 = vmatprep.subr.bf16.mxu0 0
      %1047 = vmatpush2.bf16.xpose.msra.mxu0 0
      %1048 = vmatprep.subr.bf16.mxu0 0
      %1049 = vmatpush2.bf16.xpose.msra.mxu0 0
      %1050 = vmatprep.subr.bf16.mxu0 0
      %1051 = vmatpush2.bf16.xpose.msra.mxu0 0
      %1052 = vmatprep.subr.bf16.mxu0 0
      %1053 = vmatpush2.bf16.xpose.msra.mxu0 0
      %1054 = vmatprep.mubr.bf16.mxu0 0
      %1055 = vmatmul.mubr.bf16.gmra.mxu0 %v1017
      %v1056 = vpop.f32.mrf.mxu0
      %v1057 = vadd.f32 %v242, %v1056
      %v1058 = vpop.f32.mrf.mxu0
      %v1059 = vpop.f32.mrf.mxu0
      %v1060 = vadd.f32 %v243, %v1059
      %v1061 = vpop.f32.mrf.mxu0
      %1062 = vdwg.mxu0
      %vm1063 = vcmask 130048
      %v1064 = vsel %vm1063, %v1057, -inf
      %1065 = vmax.xlane.f32.xlu0 %v1064
      %v1066 = vpop.xlane.xlu0 %1065
      %v1067 = vsel %vm1063, %v1060, -inf
      %1068 = vmax.xlane.f32.xlu0 %v1067
      %v1069 = vpop.xlane.xlu0 %1068
      %v1070 = vsub.f32 %v1057, %v1066
      %v1071 = vsub.f32 %v1060, %v1069
      %v1072 = vmul.f32 %v1070, 1.442695
      %v1073 = vpow.pop %v1072
      %v1074 = vmul.f32 %v1071, 1.442695
      %v1075 = vpow.pop %v1074
      %v1076 = vsel %vm1063, %v1073, 0.0
      %1077 = vadd.xlane.f32.xlu0 %v1076
      %v1078 = vpop.xlane.xlu0 %1077
      %v1079 = vsel %vm1063, %v1075, 0.0
      %1080 = vadd.xlane.f32.xlu0 %v1079
      %v1081 = vpop.xlane.xlu0 %1080
      %v1082 = vrcp.pop %v1078
      %v1083 = vrcp.pop %v1081
      %v1084 = vmul.f32 %v1073, %v1082
      %v1085 = vmul.f32 %v1075, %v1083
      %v1086 = vpack.c.bf16 %v1085, %v1084
      %1087 = vrot.lane.b32.xlu0 %v1012, 64
      %v1088 = vpop.permute.xlu0 %1087
      %v1091 = vsel %vm1063, %v1086, 0
      %1093 = vmatprep.subr.bf16.mxu0 0
      %1094 = vmatpush1.bf16.msra.mxu0 0
      %1095 = vmatprep.subr.bf16.mxu0 0
      %1096 = vmatpush1.bf16.msra.mxu0 0
      %1097 = vmatprep.subr.bf16.mxu0 0
      %1098 = vmatpush1.bf16.msra.mxu0 0
      %1099 = vmatprep.subr.bf16.mxu0 0
      %1100 = vmatpush1.bf16.msra.mxu0 0
      %1101 = vmatprep.subr.bf16.mxu0 0
      %1102 = vmatpush1.bf16.msra.mxu0 0
      %1103 = vmatprep.subr.bf16.mxu0 0
      %1104 = vmatpush1.bf16.msra.mxu0 0
      %1105 = vmatprep.subr.bf16.mxu0 0
      %1106 = vmatpush1.bf16.msra.mxu0 0
      %1107 = vmatprep.subr.bf16.mxu0 0
      %1108 = vmatpush1.bf16.msra.mxu0 %v1088
      %1109 = vmatprep.subr.bf16.mxu0 0
      %1110 = vmatpush2.bf16.msra.mxu0 0
      %1111 = vmatprep.subr.bf16.mxu0 0
      %1112 = vmatpush2.bf16.msra.mxu0 0
      %1113 = vmatprep.subr.bf16.mxu0 0
      %1114 = vmatpush2.bf16.msra.mxu0 0
      %1115 = vmatprep.subr.bf16.mxu0 0
      %1116 = vmatpush2.bf16.msra.mxu0 0
      %1117 = vmatprep.subr.bf16.mxu0 0
      %1118 = vmatpush2.bf16.msra.mxu0 0
      %1119 = vmatprep.subr.bf16.mxu0 0
      %1120 = vmatpush2.bf16.msra.mxu0 0
      %1121 = vmatprep.subr.bf16.mxu0 0
      %1122 = vmatpush2.bf16.msra.mxu0 0
      %1123 = vmatprep.subr.bf16.mxu0 0
      %1124 = vmatpush2.bf16.msra.mxu0 0
      %1125 = vmatprep.mubr.bf16.mxu0 0
      %1126 = vmatmul.mubr.bf16.gmra.mxu0 %v1091
      %v1127 = vpop.f32.mrf.mxu0
      %v1128 = vadd.f32 0.0, %v1127
      %v1129 = vpop.f32.mrf.mxu0
      %v1130 = vpop.f32.mrf.mxu0
      %v1131 = vadd.f32 0.0, %v1130
      %v1132 = vpop.f32.mrf.mxu0
      %1133 = vdwg.mxu0
      %v1134 = vpack.c.bf16 %v1131, %v1128
      %v1135 = vlaneseq
      %v1136 = vshrl.u32 %v1135, 7
      %v1137 = vsub.s32 3, %v1136
      %v1138 = vrot.slane %v911, %v1137
      %1139 = vrot.lane.b32.xlu0 %v964, 32
      %v1140 = vpop.permute.xlu0 %1139
      %1141 = vrot.lane.b32.xlu0 %v965, 32
      %v1142 = vpop.permute.xlu0 %1141
      %v1146 = vsel %vm282, %v1134, 0
      %1148 = vmatprep.subr.bf16.mxu0 0
      %1149 = vmatpush1.bf16.msra.mxu0 0
      %1150 = vmatprep.subr.bf16.mxu0 0
      %1151 = vmatpush1.bf16.msra.mxu0 0
      %1152 = vmatprep.subr.bf16.mxu0 0
      %1153 = vmatpush1.bf16.msra.mxu0 0
      %1154 = vmatprep.subr.bf16.mxu0 0
      %1155 = vmatpush1.bf16.msra.mxu0 0
      %1156 = vmatprep.subr.bf16.mxu0 0
      %1157 = vmatpush1.bf16.msra.mxu0 0
      %1158 = vmatprep.subr.bf16.mxu0 0
      %1159 = vmatpush1.bf16.msra.mxu0 0
      %1160 = vmatprep.subr.bf16.mxu0 0
      %1161 = vmatpush1.bf16.msra.mxu0 %v1142
      %1162 = vmatprep.subr.bf16.mxu0 0
      %1163 = vmatpush1.bf16.msra.mxu0 %v1140
      %1164 = vmatprep.subr.bf16.mxu0 0
      %1165 = vmatpush2.bf16.msra.mxu0 0
      %1166 = vmatprep.subr.bf16.mxu0 0
      %1167 = vmatpush2.bf16.msra.mxu0 0
      %1168 = vmatprep.subr.bf16.mxu0 0
      %1169 = vmatpush2.bf16.msra.mxu0 0
      %1170 = vmatprep.subr.bf16.mxu0 0
      %1171 = vmatpush2.bf16.msra.mxu0 0
      %1172 = vmatprep.subr.bf16.mxu0 0
      %1173 = vmatpush2.bf16.msra.mxu0 0
      %1174 = vmatprep.subr.bf16.mxu0 0
      %1175 = vmatpush2.bf16.msra.mxu0 0
      %1176 = vmatprep.subr.bf16.mxu0 0
      %1177 = vmatpush2.bf16.msra.mxu0 0
      %1178 = vmatprep.subr.bf16.mxu0 0
      %1179 = vmatpush2.bf16.msra.mxu0 0
      %1180 = vmatprep.mubr.bf16.mxu0 0
      %1181 = vmatmul.mubr.bf16.gmra.mxu0 %v1146
      %v1182 = vpop.f32.mrf.mxu0
      %v1183 = vadd.f32 %v1138, %v1182
      %v1184 = vpop.f32.mrf.mxu0
      %v1185 = vpop.f32.mrf.mxu0
      %v1186 = vadd.f32 %v1138, %v1185
      %v1187 = vpop.f32.mrf.mxu0
      %1188 = vdwg.mxu0
      %v1189 = vadd.f32 %v905, %v1183
      %v1190 = vadd.f32 %v906, %v1186
      %v1191 = vsel %vm282, %v1189, 0.0
      %1192 = vadd.xlane.f32.xlu0 %v1191
      %v1193 = vpop.xlane.xlu0 %1192
      %v1194 = vsel %vm282, %v1190, 0.0
      %1195 = vadd.xlane.f32.xlu0 %v1194
      %v1196 = vpop.xlane.xlu0 %1195
      %v1197 = vmul.f32 %v1193, %v918
      %v1198 = vmul.f32 %v1196, %v918
      %v1199 = vsub.f32 %v1189, %v1197
      %v1200 = vsub.f32 %v1190, %v1198
      %v1201 = vmul.f32 %v1199, %v1199
      %v1202 = vmul.f32 %v1200, %v1200
      %v1203 = vsel %vm282, %v1201, 0.0
      %1204 = vadd.xlane.f32.xlu0 %v1203
      %v1205 = vpop.xlane.xlu0 %1204
      %v1206 = vsel %vm282, %v1202, 0.0
      %1207 = vadd.xlane.f32.xlu0 %v1206
      %v1208 = vpop.xlane.xlu0 %1207
      %v1209 = vmul.f32 %v1205, %v918
      %v1210 = vmul.f32 %v1208, %v918
      %v1211 = vadd.f32 %v1209, 1e-08
      %v1212 = vadd.f32 %v1210, 1e-08
      %v1213 = vrsqrt.pop %v1211
      %v1214 = vrsqrt.pop %v1212
      %v1215 = vmul.f32 %v1199, %v1213
      %v1216 = vmul.f32 %v1200, %v1214
      %v1217 = vlaneseq
      %v1218 = vshrl.u32 %v1217, 7
      %v1219 = vsub.s32 4, %v1218
      %v1220 = vrot.slane %v911, %v1219
      %v1221 = vmul.f32 %v1215, %v1220
      %v1222 = vmul.f32 %v1216, %v1220
      %v1223 = vlaneseq
      %v1224 = vshrl.u32 %v1223, 7
      %v1225 = vsub.s32 5, %v1224
      %v1226 = vrot.slane %v911, %v1225
      %v1227 = vadd.f32 %v1221, %v1226
      %v1228 = vadd.f32 %v1222, %v1226
      %v1229 = vpack.c.bf16 %v1228, %v1227
      %v1230 = vlaneseq
      %v1231 = vshrl.u32 %v1230, 7
      %v1232 = vsub.s32 6, %v1231
      %v1233 = vrot.slane %v911, %v1232
      %v1234 = vunpack.c.h.b16 %v907
      %v1235 = vunpack.c.h.b16 %v908
      %v1236 = vunpack.c.h.b16 %v909
      %v1237 = vunpack.c.h.b16 %v910
      %v1238 = vpack.c.b16 %v1235, %v1234
      %v1239 = vpack.c.b16 %v1237, %v1236
      %v1243 = vsel %vm282, %v1229, 0
      %1245 = vmatprep.subr.bf16.mxu0 0
      %1246 = vmatpush1.bf16.msra.mxu0 0
      %1247 = vmatprep.subr.bf16.mxu0 0
      %1248 = vmatpush1.bf16.msra.mxu0 0
      %1249 = vmatprep.subr.bf16.mxu0 0
      %1250 = vmatpush1.bf16.msra.mxu0 0
      %1251 = vmatprep.subr.bf16.mxu0 0
      %1252 = vmatpush1.bf16.msra.mxu0 0
      %1253 = vmatprep.subr.bf16.mxu0 0
      %1254 = vmatpush1.bf16.msra.mxu0 0
      %1255 = vmatprep.subr.bf16.mxu0 0
      %1256 = vmatpush1.bf16.msra.mxu0 0
      %1257 = vmatprep.subr.bf16.mxu0 0
      %1258 = vmatpush1.bf16.msra.mxu0 %v1239
      %1259 = vmatprep.subr.bf16.mxu0 0
      %1260 = vmatpush1.bf16.msra.mxu0 %v1238
      %1261 = vmatprep.subr.bf16.mxu0 0
      %1262 = vmatpush2.bf16.msra.mxu0 0
      %1263 = vmatprep.subr.bf16.mxu0 0
      %1264 = vmatpush2.bf16.msra.mxu0 0
      %1265 = vmatprep.subr.bf16.mxu0 0
      %1266 = vmatpush2.bf16.msra.mxu0 0
      %1267 = vmatprep.subr.bf16.mxu0 0
      %1268 = vmatpush2.bf16.msra.mxu0 0
      %1269 = vmatprep.subr.bf16.mxu0 0
      %1270 = vmatpush2.bf16.msra.mxu0 0
      %1271 = vmatprep.subr.bf16.mxu0 0
      %1272 = vmatpush2.bf16.msra.mxu0 0
      %1273 = vmatprep.subr.bf16.mxu0 0
      %1274 = vmatpush2.bf16.msra.mxu0 0
      %1275 = vmatprep.subr.bf16.mxu0 0
      %1276 = vmatpush2.bf16.msra.mxu0 0
      %1277 = vmatprep.mubr.bf16.mxu0 0
      %1278 = vmatmul.mubr.bf16.gmra.mxu0 %v1243
      %v1279 = vpop.f32.mrf.mxu0
      %v1280 = vadd.f32 %v1233, %v1279
      %v1281 = vpop.f32.mrf.mxu0
      %v1282 = vpop.f32.mrf.mxu0
      %v1283 = vadd.f32 %v1233, %v1282
      %v1284 = vpop.f32.mrf.mxu0
      %1285 = vdwg.mxu0
      %v1286 = vmax.f32 %v1280, 0.0
      %v1287 = vmax.f32 %v1283, 0.0
      %v1288 = vpack.c.bf16 %v1287, %v1286
      %v1289 = vlaneseq
      %v1290 = vshrl.u32 %v1289, 7
      %v1291 = vsub.s32 7, %v1290
      %v1292 = vrot.slane %v911, %v1291
      %1293 = vrot.lane.b32.xlu0 %v1238, 96
      %v1294 = vpop.permute.xlu0 %1293
      %1295 = vrot.lane.b32.xlu0 %v1239, 96
      %v1296 = vpop.permute.xlu0 %1295
      %v1300 = vsel %vm282, %v1288, 0
      %1302 = vmatprep.subr.bf16.mxu0 0
      %1303 = vmatpush1.bf16.msra.mxu0 0
      %1304 = vmatprep.subr.bf16.mxu0 0
      %1305 = vmatpush1.bf16.msra.mxu0 0
      %1306 = vmatprep.subr.bf16.mxu0 0
      %1307 = vmatpush1.bf16.msra.mxu0 0
      %1308 = vmatprep.subr.bf16.mxu0 0
      %1309 = vmatpush1.bf16.msra.mxu0 0
      %1310 = vmatprep.subr.bf16.mxu0 0
      %1311 = vmatpush1.bf16.msra.mxu0 0
      %1312 = vmatprep.subr.bf16.mxu0 0
      %1313 = vmatpush1.bf16.msra.mxu0 0
      %1314 = vmatprep.subr.bf16.mxu0 0
      %1315 = vmatpush1.bf16.msra.mxu0 %v1296
      %1316 = vmatprep.subr.bf16.mxu0 0
      %1317 = vmatpush1.bf16.msra.mxu0 %v1294
      %1318 = vmatprep.subr.bf16.mxu0 0
      %1319 = vmatpush2.bf16.msra.mxu0 0
      %1320 = vmatprep.subr.bf16.mxu0 0
      %1321 = vmatpush2.bf16.msra.mxu0 0
      %1322 = vmatprep.subr.bf16.mxu0 0
      %1323 = vmatpush2.bf16.msra.mxu0 0
      %1324 = vmatprep.subr.bf16.mxu0 0
      %1325 = vmatpush2.bf16.msra.mxu0 0
      %1326 = vmatprep.subr.bf16.mxu0 0
      %1327 = vmatpush2.bf16.msra.mxu0 0
      %1328 = vmatprep.subr.bf16.mxu0 0
      %1329 = vmatpush2.bf16.msra.mxu0 0
      %1330 = vmatprep.subr.bf16.mxu0 0
      %1331 = vmatpush2.bf16.msra.mxu0 0
      %1332 = vmatprep.subr.bf16.mxu0 0
      %1333 = vmatpush2.bf16.msra.mxu0 0
      %1334 = vmatprep.mubr.bf16.mxu0 0
      %1335 = vmatmul.mubr.bf16.gmra.mxu0 %v1300
      %v1336 = vpop.f32.mrf.mxu0
      %v1337 = vadd.f32 %v1292, %v1336
      %v1338 = vpop.f32.mrf.mxu0
      %v1339 = vpop.f32.mrf.mxu0
      %v1340 = vadd.f32 %v1292, %v1339
      %v1341 = vpop.f32.mrf.mxu0
      %1342 = vdwg.mxu0
      %v1343 = vadd.f32 %v1337, %v1227
      %v1344 = vadd.f32 %v1340, %v1228
      %v1345 = vadd.f32 %v1189, %v1343
      %v1346 = vadd.f32 %v1190, %v1344
      %s1347 = scalar_lea.vmem %s3, 32
      %v1348 = vld [vmem:[%s1347] sm:$0xff]
      %v1349 = vld [vmem:[%s1347 + $0x8] sm:$0xff]
      %v1350 = vld [vmem:[%s1347 + $0x10] sm:$0xff]
      %v1351 = vld [vmem:[%s1347 + $0x18] sm:$0xff]
      %s1352 = scalar_lea.vmem %s4, 8
      %v1353 = vld [vmem:[%s1352] sm:$0xff]
      %v1354 = vsel %vm282, %v1345, 0.0
      %1355 = vadd.xlane.f32.xlu0 %v1354
      %v1356 = vpop.xlane.xlu0 %1355
      %v1357 = vsel %vm282, %v1346, 0.0
      %1358 = vadd.xlane.f32.xlu0 %v1357
      %v1359 = vpop.xlane.xlu0 %1358
      %v1360 = vmul.f32 %v1356, %v918
      %v1361 = vmul.f32 %v1359, %v918
      %v1362 = vsub.f32 %v1345, %v1360
      %v1363 = vsub.f32 %v1346, %v1361
      %v1364 = vmul.f32 %v1362, %v1362
      %v1365 = vmul.f32 %v1363, %v1363
      %v1366 = vsel %vm282, %v1364, 0.0
      %1367 = vadd.xlane.f32.xlu0 %v1366
      %v1368 = vpop.xlane.xlu0 %1367
      %v1369 = vsel %vm282, %v1365, 0.0
      %1370 = vadd.xlane.f32.xlu0 %v1369
      %v1371 = vpop.xlane.xlu0 %1370
      %v1372 = vmul.f32 %v1368, %v918
      %v1373 = vmul.f32 %v1371, %v918
      %v1374 = vadd.f32 %v1372, 1e-08
      %v1375 = vadd.f32 %v1373, 1e-08
      %v1376 = vrsqrt.pop %v1374
      %v1377 = vrsqrt.pop %v1375
      %v1378 = vmul.f32 %v1362, %v1376
      %v1379 = vmul.f32 %v1363, %v1377
      %v1380 = vlaneseq
      %v1381 = vshrl.u32 %v1380, 7
      %v1382 = vsub.s32 0, %v1381
      %v1383 = vrot.slane %v1353, %v1382
      %v1384 = vmul.f32 %v1378, %v1383
      %v1385 = vmul.f32 %v1379, %v1383
      %v1386 = vlaneseq
      %v1387 = vshrl.u32 %v1386, 7
      %v1388 = vsub.s32 1, %v1387
      %v1389 = vrot.slane %v1353, %v1388
      %v1390 = vadd.f32 %v1384, %v1389
      %v1391 = vadd.f32 %v1385, %v1389
      %v1392 = vpack.c.bf16 %v1391, %v1390
      %v1393 = vlaneseq
      %v1394 = vshrl.u32 %v1393, 7
      %v1395 = vsub.s32 2, %v1394
      %v1396 = vrot.slane %v1353, %v1395
      %v1401 = vunpack.c.l.b16 %v1348
      %v1402 = vunpack.c.l.b16 %v1349
      %v1403 = vunpack.c.l.b16 %v1350
      %v1404 = vunpack.c.l.b16 %v1351
      %v1405 = vpack.c.b16 %v1402, %v1401
      %v1406 = vpack.c.b16 %v1404, %v1403
      %v1410 = vsel %vm282, %v1392, 0
      %1412 = vmatprep.subr.bf16.mxu0 0
      %1413 = vmatpush1.bf16.msra.mxu0 0
      %1414 = vmatprep.subr.bf16.mxu0 0
      %1415 = vmatpush1.bf16.msra.mxu0 0
      %1416 = vmatprep.subr.bf16.mxu0 0
      %1417 = vmatpush1.bf16.msra.mxu0 0
      %1418 = vmatprep.subr.bf16.mxu0 0
      %1419 = vmatpush1.bf16.msra.mxu0 0
      %1420 = vmatprep.subr.bf16.mxu0 0
      %1421 = vmatpush1.bf16.msra.mxu0 0
      %1422 = vmatprep.subr.bf16.mxu0 0
      %1423 = vmatpush1.bf16.msra.mxu0 0
      %1424 = vmatprep.subr.bf16.mxu0 0
      %1425 = vmatpush1.bf16.msra.mxu0 %v1406
      %1426 = vmatprep.subr.bf16.mxu0 0
      %1427 = vmatpush1.bf16.msra.mxu0 %v1405
      %1428 = vmatprep.subr.bf16.mxu0 0
      %1429 = vmatpush2.bf16.msra.mxu0 0
      %1430 = vmatprep.subr.bf16.mxu0 0
      %1431 = vmatpush2.bf16.msra.mxu0 0
      %1432 = vmatprep.subr.bf16.mxu0 0
      %1433 = vmatpush2.bf16.msra.mxu0 0
      %1434 = vmatprep.subr.bf16.mxu0 0
      %1435 = vmatpush2.bf16.msra.mxu0 0
      %1436 = vmatprep.subr.bf16.mxu0 0
      %1437 = vmatpush2.bf16.msra.mxu0 0
      %1438 = vmatprep.subr.bf16.mxu0 0
      %1439 = vmatpush2.bf16.msra.mxu0 0
      %1440 = vmatprep.subr.bf16.mxu0 0
      %1441 = vmatpush2.bf16.msra.mxu0 0
      %1442 = vmatprep.subr.bf16.mxu0 0
      %1443 = vmatpush2.bf16.msra.mxu0 0
      %1444 = vmatprep.mubr.bf16.mxu0 0
      %1445 = vmatmul.mubr.bf16.gmra.mxu0 %v1410
      %v1446 = vpop.f32.mrf.mxu0
      %v1447 = vadd.f32 %v1396, %v1446
      %v1448 = vpop.f32.mrf.mxu0
      %v1449 = vpop.f32.mrf.mxu0
      %v1450 = vadd.f32 %v1396, %v1449
      %v1451 = vpop.f32.mrf.mxu0
      %1452 = vdwg.mxu0
      %v1453 = vpack.c.bf16 %v1450, %v1447
      %1455 = vrot.lane.b32.xlu0 %v1453, 96
      %v1456 = vpop.permute.xlu0 %1455
      %v1458 = vsel %vm282, %v1453, 0
      %v1461 = vsel %vm282, %v1456, 0
      %1463 = vmatprep.subr.bf16.mxu0 0
      %1464 = vmatpush1.bf16.xpose.msra.mxu0 0
      %1465 = vmatprep.subr.bf16.mxu0 0
      %1466 = vmatpush1.bf16.xpose.msra.mxu0 0
      %1467 = vmatprep.subr.bf16.mxu0 0
      %1468 = vmatpush1.bf16.xpose.msra.mxu0 0
      %1469 = vmatprep.subr.bf16.mxu0 0
      %1470 = vmatpush1.bf16.xpose.msra.mxu0 0
      %1471 = vmatprep.subr.bf16.mxu0 0
      %1472 = vmatpush1.bf16.xpose.msra.mxu0 0
      %1473 = vmatprep.subr.bf16.mxu0 0
      %1474 = vmatpush1.bf16.xpose.msra.mxu0 0
      %1475 = vmatprep.subr.bf16.mxu0 0
      %1476 = vmatpush1.bf16.xpose.msra.mxu0 0
      %1477 = vmatprep.subr.bf16.mxu0 0
      %1478 = vmatpush1.bf16.xpose.msra.mxu0 %v1461
      %1479 = vmatprep.subr.bf16.mxu0 0
      %1480 = vmatpush2.bf16.xpose.msra.mxu0 0
      %1481 = vmatprep.subr.bf16.mxu0 0
      %1482 = vmatpush2.bf16.xpose.msra.mxu0 0
      %1483 = vmatprep.subr.bf16.mxu0 0
      %1484 = vmatpush2.bf16.xpose.msra.mxu0 0
      %1485 = vmatprep.subr.bf16.mxu0 0
      %1486 = vmatpush2.bf16.xpose.msra.mxu0 0
      %1487 = vmatprep.subr.bf16.mxu0 0
      %1488 = vmatpush2.bf16.xpose.msra.mxu0 0
      %1489 = vmatprep.subr.bf16.mxu0 0
      %1490 = vmatpush2.bf16.xpose.msra.mxu0 0
      %1491 = vmatprep.subr.bf16.mxu0 0
      %1492 = vmatpush2.bf16.xpose.msra.mxu0 0
      %1493 = vmatprep.subr.bf16.mxu0 0
      %1494 = vmatpush2.bf16.xpose.msra.mxu0 0
      %1495 = vmatprep.mubr.bf16.mxu0 0
      %1496 = vmatmul.mubr.bf16.gmra.mxu0 %v1458
      %v1497 = vpop.f32.mrf.mxu0
      %v1498 = vadd.f32 %v242, %v1497
      %v1499 = vpop.f32.mrf.mxu0
      %v1500 = vpop.f32.mrf.mxu0
      %v1501 = vadd.f32 %v243, %v1500
      %v1502 = vpop.f32.mrf.mxu0
      %1503 = vdwg.mxu0
      %v1504 = vsel %vm1063, %v1498, -inf
      %1505 = vmax.xlane.f32.xlu0 %v1504
      %v1506 = vpop.xlane.xlu0 %1505
      %v1507 = vsel %vm1063, %v1501, -inf
      %1508 = vmax.xlane.f32.xlu0 %v1507
      %v1509 = vpop.xlane.xlu0 %1508
      %v1510 = vsub.f32 %v1498, %v1506
      %v1511 = vsub.f32 %v1501, %v1509
      %v1512 = vmul.f32 %v1510, 1.442695
      %v1513 = vpow.pop %v1512
      %v1514 = vmul.f32 %v1511, 1.442695
      %v1515 = vpow.pop %v1514
      %v1516 = vsel %vm1063, %v1513, 0.0
      %1517 = vadd.xlane.f32.xlu0 %v1516
      %v1518 = vpop.xlane.xlu0 %1517
      %v1519 = vsel %vm1063, %v1515, 0.0
      %1520 = vadd.xlane.f32.xlu0 %v1519
      %v1521 = vpop.xlane.xlu0 %1520
      %v1522 = vrcp.pop %v1518
      %v1523 = vrcp.pop %v1521
      %v1524 = vmul.f32 %v1513, %v1522
      %v1525 = vmul.f32 %v1515, %v1523
      %v1526 = vpack.c.bf16 %v1525, %v1524
      %1527 = vrot.lane.b32.xlu0 %v1453, 64
      %v1528 = vpop.permute.xlu0 %1527
      %v1531 = vsel %vm1063, %v1526, 0
      %1533 = vmatprep.subr.bf16.mxu0 0
      %1534 = vmatpush1.bf16.msra.mxu0 0
      %1535 = vmatprep.subr.bf16.mxu0 0
      %1536 = vmatpush1.bf16.msra.mxu0 0
      %1537 = vmatprep.subr.bf16.mxu0 0
      %1538 = vmatpush1.bf16.msra.mxu0 0
      %1539 = vmatprep.subr.bf16.mxu0 0
      %1540 = vmatpush1.bf16.msra.mxu0 0
      %1541 = vmatprep.subr.bf16.mxu0 0
      %1542 = vmatpush1.bf16.msra.mxu0 0
      %1543 = vmatprep.subr.bf16.mxu0 0
      %1544 = vmatpush1.bf16.msra.mxu0 0
      %1545 = vmatprep.subr.bf16.mxu0 0
      %1546 = vmatpush1.bf16.msra.mxu0 0
      %1547 = vmatprep.subr.bf16.mxu0 0
      %1548 = vmatpush1.bf16.msra.mxu0 %v1528
      %1549 = vmatprep.subr.bf16.mxu0 0
      %1550 = vmatpush2.bf16.msra.mxu0 0
      %1551 = vmatprep.subr.bf16.mxu0 0
      %1552 = vmatpush2.bf16.msra.mxu0 0
      %1553 = vmatprep.subr.bf16.mxu0 0
      %1554 = vmatpush2.bf16.msra.mxu0 0
      %1555 = vmatprep.subr.bf16.mxu0 0
      %1556 = vmatpush2.bf16.msra.mxu0 0
      %1557 = vmatprep.subr.bf16.mxu0 0
      %1558 = vmatpush2.bf16.msra.mxu0 0
      %1559 = vmatprep.subr.bf16.mxu0 0
      %1560 = vmatpush2.bf16.msra.mxu0 0
      %1561 = vmatprep.subr.bf16.mxu0 0
      %1562 = vmatpush2.bf16.msra.mxu0 0
      %1563 = vmatprep.subr.bf16.mxu0 0
      %1564 = vmatpush2.bf16.msra.mxu0 0
      %1565 = vmatprep.mubr.bf16.mxu0 0
      %1566 = vmatmul.mubr.bf16.gmra.mxu0 %v1531
      %v1567 = vpop.f32.mrf.mxu0
      %v1568 = vadd.f32 0.0, %v1567
      %v1569 = vpop.f32.mrf.mxu0
      %v1570 = vpop.f32.mrf.mxu0
      %v1571 = vadd.f32 0.0, %v1570
      %v1572 = vpop.f32.mrf.mxu0
      %1573 = vdwg.mxu0
      %v1574 = vpack.c.bf16 %v1571, %v1568
      %v1575 = vlaneseq
      %v1576 = vshrl.u32 %v1575, 7
      %v1577 = vsub.s32 3, %v1576
      %v1578 = vrot.slane %v1353, %v1577
      %1579 = vrot.lane.b32.xlu0 %v1405, 32
      %v1580 = vpop.permute.xlu0 %1579
      %1581 = vrot.lane.b32.xlu0 %v1406, 32
      %v1582 = vpop.permute.xlu0 %1581
      %v1586 = vsel %vm282, %v1574, 0
      %1588 = vmatprep.subr.bf16.mxu0 0
      %1589 = vmatpush1.bf16.msra.mxu0 0
      %1590 = vmatprep.subr.bf16.mxu0 0
      %1591 = vmatpush1.bf16.msra.mxu0 0
      %1592 = vmatprep.subr.bf16.mxu0 0
      %1593 = vmatpush1.bf16.msra.mxu0 0
      %1594 = vmatprep.subr.bf16.mxu0 0
      %1595 = vmatpush1.bf16.msra.mxu0 0
      %1596 = vmatprep.subr.bf16.mxu0 0
      %1597 = vmatpush1.bf16.msra.mxu0 0
      %1598 = vmatprep.subr.bf16.mxu0 0
      %1599 = vmatpush1.bf16.msra.mxu0 0
      %1600 = vmatprep.subr.bf16.mxu0 0
      %1601 = vmatpush1.bf16.msra.mxu0 %v1582
      %1602 = vmatprep.subr.bf16.mxu0 0
      %1603 = vmatpush1.bf16.msra.mxu0 %v1580
      %1604 = vmatprep.subr.bf16.mxu0 0
      %1605 = vmatpush2.bf16.msra.mxu0 0
      %1606 = vmatprep.subr.bf16.mxu0 0
      %1607 = vmatpush2.bf16.msra.mxu0 0
      %1608 = vmatprep.subr.bf16.mxu0 0
      %1609 = vmatpush2.bf16.msra.mxu0 0
      %1610 = vmatprep.subr.bf16.mxu0 0
      %1611 = vmatpush2.bf16.msra.mxu0 0
      %1612 = vmatprep.subr.bf16.mxu0 0
      %1613 = vmatpush2.bf16.msra.mxu0 0
      %1614 = vmatprep.subr.bf16.mxu0 0
      %1615 = vmatpush2.bf16.msra.mxu0 0
      %1616 = vmatprep.subr.bf16.mxu0 0
      %1617 = vmatpush2.bf16.msra.mxu0 0
      %1618 = vmatprep.subr.bf16.mxu0 0
      %1619 = vmatpush2.bf16.msra.mxu0 0
      %1620 = vmatprep.mubr.bf16.mxu0 0
      %1621 = vmatmul.mubr.bf16.gmra.mxu0 %v1586
      %v1622 = vpop.f32.mrf.mxu0
      %v1623 = vadd.f32 %v1578, %v1622
      %v1624 = vpop.f32.mrf.mxu0
      %v1625 = vpop.f32.mrf.mxu0
      %v1626 = vadd.f32 %v1578, %v1625
      %v1627 = vpop.f32.mrf.mxu0
      %1628 = vdwg.mxu0
      %v1629 = vadd.f32 %v1345, %v1623
      %v1630 = vadd.f32 %v1346, %v1626
      %v1631 = vsel %vm282, %v1629, 0.0
      %1632 = vadd.xlane.f32.xlu0 %v1631
      %v1633 = vpop.xlane.xlu0 %1632
      %v1634 = vsel %vm282, %v1630, 0.0
      %1635 = vadd.xlane.f32.xlu0 %v1634
      %v1636 = vpop.xlane.xlu0 %1635
      %v1637 = vmul.f32 %v1633, %v918
      %v1638 = vmul.f32 %v1636, %v918
      %v1639 = vsub.f32 %v1629, %v1637
      %v1640 = vsub.f32 %v1630, %v1638
      %v1641 = vmul.f32 %v1639, %v1639
      %v1642 = vmul.f32 %v1640, %v1640
      %v1643 = vsel %vm282, %v1641, 0.0
      %1644 = vadd.xlane.f32.xlu0 %v1643
      %v1645 = vpop.xlane.xlu0 %1644
      %v1646 = vsel %vm282, %v1642, 0.0
      %1647 = vadd.xlane.f32.xlu0 %v1646
      %v1648 = vpop.xlane.xlu0 %1647
      %v1649 = vmul.f32 %v1645, %v918
      %v1650 = vmul.f32 %v1648, %v918
      %v1651 = vadd.f32 %v1649, 1e-08
      %v1652 = vadd.f32 %v1650, 1e-08
      %v1653 = vrsqrt.pop %v1651
      %v1654 = vrsqrt.pop %v1652
      %v1655 = vmul.f32 %v1639, %v1653
      %v1656 = vmul.f32 %v1640, %v1654
      %v1657 = vlaneseq
      %v1658 = vshrl.u32 %v1657, 7
      %v1659 = vsub.s32 4, %v1658
      %v1660 = vrot.slane %v1353, %v1659
      %v1661 = vmul.f32 %v1655, %v1660
      %v1662 = vmul.f32 %v1656, %v1660
      %v1663 = vlaneseq
      %v1664 = vshrl.u32 %v1663, 7
      %v1665 = vsub.s32 5, %v1664
      %v1666 = vrot.slane %v1353, %v1665
      %v1667 = vadd.f32 %v1661, %v1666
      %v1668 = vadd.f32 %v1662, %v1666
      %v1669 = vpack.c.bf16 %v1668, %v1667
      %v1670 = vlaneseq
      %v1671 = vshrl.u32 %v1670, 7
      %v1672 = vsub.s32 6, %v1671
      %v1673 = vrot.slane %v1353, %v1672
      %v1674 = vunpack.c.h.b16 %v1348
      %v1675 = vunpack.c.h.b16 %v1349
      %v1676 = vunpack.c.h.b16 %v1350
      %v1677 = vunpack.c.h.b16 %v1351
      %v1678 = vpack.c.b16 %v1675, %v1674
      %v1679 = vpack.c.b16 %v1677, %v1676
      %v1683 = vsel %vm282, %v1669, 0
      %1685 = vmatprep.subr.bf16.mxu0 0
      %1686 = vmatpush1.bf16.msra.mxu0 0
      %1687 = vmatprep.subr.bf16.mxu0 0
      %1688 = vmatpush1.bf16.msra.mxu0 0
      %1689 = vmatprep.subr.bf16.mxu0 0
      %1690 = vmatpush1.bf16.msra.mxu0 0
      %1691 = vmatprep.subr.bf16.mxu0 0
      %1692 = vmatpush1.bf16.msra.mxu0 0
      %1693 = vmatprep.subr.bf16.mxu0 0
      %1694 = vmatpush1.bf16.msra.mxu0 0
      %1695 = vmatprep.subr.bf16.mxu0 0
      %1696 = vmatpush1.bf16.msra.mxu0 0
      %1697 = vmatprep.subr.bf16.mxu0 0
      %1698 = vmatpush1.bf16.msra.mxu0 %v1679
      %1699 = vmatprep.subr.bf16.mxu0 0
      %1700 = vmatpush1.bf16.msra.mxu0 %v1678
      %1701 = vmatprep.subr.bf16.mxu0 0
      %1702 = vmatpush2.bf16.msra.mxu0 0
      %1703 = vmatprep.subr.bf16.mxu0 0
      %1704 = vmatpush2.bf16.msra.mxu0 0
      %1705 = vmatprep.subr.bf16.mxu0 0
      %1706 = vmatpush2.bf16.msra.mxu0 0
      %1707 = vmatprep.subr.bf16.mxu0 0
      %1708 = vmatpush2.bf16.msra.mxu0 0
      %1709 = vmatprep.subr.bf16.mxu0 0
      %1710 = vmatpush2.bf16.msra.mxu0 0
      %1711 = vmatprep.subr.bf16.mxu0 0
      %1712 = vmatpush2.bf16.msra.mxu0 0
      %1713 = vmatprep.subr.bf16.mxu0 0
      %1714 = vmatpush2.bf16.msra.mxu0 0
      %1715 = vmatprep.subr.bf16.mxu0 0
      %1716 = vmatpush2.bf16.msra.mxu0 0
      %1717 = vmatprep.mubr.bf16.mxu0 0
      %1718 = vmatmul.mubr.bf16.gmra.mxu0 %v1683
      %v1719 = vpop.f32.mrf.mxu0
      %v1720 = vadd.f32 %v1673, %v1719
      %v1721 = vpop.f32.mrf.mxu0
      %v1722 = vpop.f32.mrf.mxu0
      %v1723 = vadd.f32 %v1673, %v1722
      %v1724 = vpop.f32.mrf.mxu0
      %1725 = vdwg.mxu0
      %v1726 = vmax.f32 %v1720, 0.0
      %v1727 = vmax.f32 %v1723, 0.0
      %v1728 = vpack.c.bf16 %v1727, %v1726
      %v1729 = vlaneseq
      %v1730 = vshrl.u32 %v1729, 7
      %v1731 = vsub.s32 7, %v1730
      %v1732 = vrot.slane %v1353, %v1731
      %1733 = vrot.lane.b32.xlu0 %v1678, 96
      %v1734 = vpop.permute.xlu0 %1733
      %1735 = vrot.lane.b32.xlu0 %v1679, 96
      %v1736 = vpop.permute.xlu0 %1735
      %v1740 = vsel %vm282, %v1728, 0
      %1742 = vmatprep.subr.bf16.mxu0 0
      %1743 = vmatpush1.bf16.msra.mxu0 0
      %1744 = vmatprep.subr.bf16.mxu0 0
      %1745 = vmatpush1.bf16.msra.mxu0 0
      %1746 = vmatprep.subr.bf16.mxu0 0
      %1747 = vmatpush1.bf16.msra.mxu0 0
      %1748 = vmatprep.subr.bf16.mxu0 0
      %1749 = vmatpush1.bf16.msra.mxu0 0
      %1750 = vmatprep.subr.bf16.mxu0 0
      %1751 = vmatpush1.bf16.msra.mxu0 0
      %1752 = vmatprep.subr.bf16.mxu0 0
      %1753 = vmatpush1.bf16.msra.mxu0 0
      %1754 = vmatprep.subr.bf16.mxu0 0
      %1755 = vmatpush1.bf16.msra.mxu0 %v1736
      %1756 = vmatprep.subr.bf16.mxu0 0
      %1757 = vmatpush1.bf16.msra.mxu0 %v1734
      %1758 = vmatprep.subr.bf16.mxu0 0
      %1759 = vmatpush2.bf16.msra.mxu0 0
      %1760 = vmatprep.subr.bf16.mxu0 0
      %1761 = vmatpush2.bf16.msra.mxu0 0
      %1762 = vmatprep.subr.bf16.mxu0 0
      %1763 = vmatpush2.bf16.msra.mxu0 0
      %1764 = vmatprep.subr.bf16.mxu0 0
      %1765 = vmatpush2.bf16.msra.mxu0 0
      %1766 = vmatprep.subr.bf16.mxu0 0
      %1767 = vmatpush2.bf16.msra.mxu0 0
      %1768 = vmatprep.subr.bf16.mxu0 0
      %1769 = vmatpush2.bf16.msra.mxu0 0
      %1770 = vmatprep.subr.bf16.mxu0 0
      %1771 = vmatpush2.bf16.msra.mxu0 0
      %1772 = vmatprep.subr.bf16.mxu0 0
      %1773 = vmatpush2.bf16.msra.mxu0 0
      %1774 = vmatprep.mubr.bf16.mxu0 0
      %1775 = vmatmul.mubr.bf16.gmra.mxu0 %v1740
      %v1776 = vpop.f32.mrf.mxu0
      %v1777 = vadd.f32 %v1732, %v1776
      %v1778 = vpop.f32.mrf.mxu0
      %v1779 = vpop.f32.mrf.mxu0
      %v1780 = vadd.f32 %v1732, %v1779
      %v1781 = vpop.f32.mrf.mxu0
      %1782 = vdwg.mxu0
      %v1783 = vadd.f32 %v1777, %v1667
      %v1784 = vadd.f32 %v1780, %v1668
      %v1785 = vadd.f32 %v1629, %v1783
      %v1786 = vadd.f32 %v1630, %v1784
      %s1787 = scalar_lea.vmem %s1, 144
      %v1788 = vld [vmem:[%s1787] sm:$0xf]
      %v1789 = vld [vmem:[%s1787 + $0x4] sm:$0xf]
      %v1790 = vld [vmem:[%s1787 + $0x8] sm:$0xf]
      %v1791 = vld [vmem:[%s1787 + $0xc] sm:$0xf]
      %v1792 = vld [vmem:[%s1787 + $0x10] sm:$0xf]
      %v1793 = vld [vmem:[%s1787 + $0x14] sm:$0xf]
      %v1794 = vld [vmem:[%s1787 + $0x18] sm:$0xf]
      %v1795 = vld [vmem:[%s1787 + $0x1c] sm:$0xf]
      %v1796 = vld [vmem:[%s1787 + $0x20] sm:$0xf]
      %v1797 = vld [vmem:[%s1787 + $0x24] sm:$0xf]
      %v1798 = vld [vmem:[%s1787 + $0x28] sm:$0xf]
      %v1799 = vld [vmem:[%s1787 + $0x2c] sm:$0xf]
      %s1800 = scalar_lea.vmem %s2, 6
      %v1801 = vld [vmem:[%s1800] sm:$0x3]
      %v1802 = vrot.slane %v1785, 7
      %v1803 = vrot.slane %v1786, 7
      %v1804 = vsel %vm259, %v1802, %v1803
      %v1805 = vsel %vm259, %v1803, %v1802
      %v1806 = vsel %vm264, %v1805, 0.0
      %v1807 = vsel %vm265, %v1804, 0.0
      %v1808 = vpack.c.bf16 %v1807, %v1806
      %v1809 = vpack.c.bf16 %v1786, %v1785
      %v1814 = vunpack.c.l.b16 %v1792
      %v1815 = vunpack.c.l.b16 %v1793
      %v1816 = vunpack.c.l.b16 %v1794
      %v1817 = vunpack.c.l.b16 %v1795
      %v1818 = vpack.c.b16 %v1815, %v1814
      %v1819 = vpack.c.b16 %v1817, %v1816
      %v1823 = vsel %vm282, %v1809, 0
      %1825 = vmatprep.subr.bf16.mxu0 0
      %1826 = vmatpush1.bf16.msra.mxu0 0
      %1827 = vmatprep.subr.bf16.mxu0 0
      %1828 = vmatpush1.bf16.msra.mxu0 0
      %1829 = vmatprep.subr.bf16.mxu0 0
      %1830 = vmatpush1.bf16.msra.mxu0 0
      %1831 = vmatprep.subr.bf16.mxu0 0
      %1832 = vmatpush1.bf16.msra.mxu0 0
      %1833 = vmatprep.subr.bf16.mxu0 0
      %1834 = vmatpush1.bf16.msra.mxu0 0
      %1835 = vmatprep.subr.bf16.mxu0 0
      %1836 = vmatpush1.bf16.msra.mxu0 0
      %1837 = vmatprep.subr.bf16.mxu0 0
      %1838 = vmatpush1.bf16.msra.mxu0 %v1819
      %1839 = vmatprep.subr.bf16.mxu0 0
      %1840 = vmatpush1.bf16.msra.mxu0 %v1818
      %1841 = vmatprep.subr.bf16.mxu0 0
      %1842 = vmatpush2.bf16.msra.mxu0 0
      %1843 = vmatprep.subr.bf16.mxu0 0
      %1844 = vmatpush2.bf16.msra.mxu0 0
      %1845 = vmatprep.subr.bf16.mxu0 0
      %1846 = vmatpush2.bf16.msra.mxu0 0
      %1847 = vmatprep.subr.bf16.mxu0 0
      %1848 = vmatpush2.bf16.msra.mxu0 0
      %1849 = vmatprep.subr.bf16.mxu0 0
      %1850 = vmatpush2.bf16.msra.mxu0 0
      %1851 = vmatprep.subr.bf16.mxu0 0
      %1852 = vmatpush2.bf16.msra.mxu0 0
      %1853 = vmatprep.subr.bf16.mxu0 0
      %1854 = vmatpush2.bf16.msra.mxu0 0
      %1855 = vmatprep.subr.bf16.mxu0 0
      %1856 = vmatpush2.bf16.msra.mxu0 0
      %1857 = vmatprep.mubr.bf16.mxu0 0
      %1858 = vmatmul.mubr.bf16.gmra.mxu0 %v1823
      %v1859 = vpop.f32.mrf.mxu0
      %v1860 = vadd.f32 0.0, %v1859
      %v1861 = vpop.f32.mrf.mxu0
      %v1862 = vpop.f32.mrf.mxu0
      %v1863 = vadd.f32 0.0, %v1862
      %v1864 = vpop.f32.mrf.mxu0
      %1865 = vdwg.mxu0
      %v1870 = vunpack.c.l.b16 %v1788
      %v1871 = vunpack.c.l.b16 %v1789
      %v1872 = vunpack.c.l.b16 %v1790
      %v1873 = vunpack.c.l.b16 %v1791
      %v1874 = vpack.c.b16 %v1871, %v1870
      %v1875 = vpack.c.b16 %v1873, %v1872
      %v1879 = vsel %vm282, %v1808, 0
      %1881 = vmatprep.subr.bf16.mxu0 0
      %1882 = vmatpush1.bf16.msra.mxu0 0
      %1883 = vmatprep.subr.bf16.mxu0 0
      %1884 = vmatpush1.bf16.msra.mxu0 0
      %1885 = vmatprep.subr.bf16.mxu0 0
      %1886 = vmatpush1.bf16.msra.mxu0 0
      %1887 = vmatprep.subr.bf16.mxu0 0
      %1888 = vmatpush1.bf16.msra.mxu0 0
      %1889 = vmatprep.subr.bf16.mxu0 0
      %1890 = vmatpush1.bf16.msra.mxu0 0
      %1891 = vmatprep.subr.bf16.mxu0 0
      %1892 = vmatpush1.bf16.msra.mxu0 0
      %1893 = vmatprep.subr.bf16.mxu0 0
      %1894 = vmatpush1.bf16.msra.mxu0 %v1875
      %1895 = vmatprep.subr.bf16.mxu0 0
      %1896 = vmatpush1.bf16.msra.mxu0 %v1874
      %1897 = vmatprep.subr.bf16.mxu0 0
      %1898 = vmatpush2.bf16.msra.mxu0 0
      %1899 = vmatprep.subr.bf16.mxu0 0
      %1900 = vmatpush2.bf16.msra.mxu0 0
      %1901 = vmatprep.subr.bf16.mxu0 0
      %1902 = vmatpush2.bf16.msra.mxu0 0
      %1903 = vmatprep.subr.bf16.mxu0 0
      %1904 = vmatpush2.bf16.msra.mxu0 0
      %1905 = vmatprep.subr.bf16.mxu0 0
      %1906 = vmatpush2.bf16.msra.mxu0 0
      %1907 = vmatprep.subr.bf16.mxu0 0
      %1908 = vmatpush2.bf16.msra.mxu0 0
      %1909 = vmatprep.subr.bf16.mxu0 0
      %1910 = vmatpush2.bf16.msra.mxu0 0
      %1911 = vmatprep.subr.bf16.mxu0 0
      %1912 = vmatpush2.bf16.msra.mxu0 0
      %1913 = vmatprep.mubr.bf16.mxu0 0
      %1914 = vmatmul.mubr.bf16.gmra.mxu0 %v1879
      %v1915 = vpop.f32.mrf.mxu0
      %v1916 = vadd.f32 %v1860, %v1915
      %v1917 = vpop.f32.mrf.mxu0
      %v1918 = vpop.f32.mrf.mxu0
      %v1919 = vadd.f32 %v1863, %v1918
      %v1920 = vpop.f32.mrf.mxu0
      %1921 = vdwg.mxu0
      %v1922 = vrot.slane %v1785, 1
      %v1923 = vrot.slane %v1786, 1
      %v1924 = vsel %vm385, %v1922, %v1923
      %v1925 = vsel %vm385, %v1923, %v1922
      %v1926 = vsel %vm390, %v1924, 0.0
      %v1927 = vsel %vm391, %v1925, 0.0
      %v1928 = vpack.c.bf16 %v1927, %v1926
      %v1933 = vunpack.c.l.b16 %v1796
      %v1934 = vunpack.c.l.b16 %v1797
      %v1935 = vunpack.c.l.b16 %v1798
      %v1936 = vunpack.c.l.b16 %v1799
      %v1937 = vpack.c.b16 %v1934, %v1933
      %v1938 = vpack.c.b16 %v1936, %v1935
      %v1942 = vsel %vm282, %v1928, 0
      %1944 = vmatprep.subr.bf16.mxu0 0
      %1945 = vmatpush1.bf16.msra.mxu0 0
      %1946 = vmatprep.subr.bf16.mxu0 0
      %1947 = vmatpush1.bf16.msra.mxu0 0
      %1948 = vmatprep.subr.bf16.mxu0 0
      %1949 = vmatpush1.bf16.msra.mxu0 0
      %1950 = vmatprep.subr.bf16.mxu0 0
      %1951 = vmatpush1.bf16.msra.mxu0 0
      %1952 = vmatprep.subr.bf16.mxu0 0
      %1953 = vmatpush1.bf16.msra.mxu0 0
      %1954 = vmatprep.subr.bf16.mxu0 0
      %1955 = vmatpush1.bf16.msra.mxu0 0
      %1956 = vmatprep.subr.bf16.mxu0 0
      %1957 = vmatpush1.bf16.msra.mxu0 %v1938
      %1958 = vmatprep.subr.bf16.mxu0 0
      %1959 = vmatpush1.bf16.msra.mxu0 %v1937
      %1960 = vmatprep.subr.bf16.mxu0 0
      %1961 = vmatpush2.bf16.msra.mxu0 0
      %1962 = vmatprep.subr.bf16.mxu0 0
      %1963 = vmatpush2.bf16.msra.mxu0 0
      %1964 = vmatprep.subr.bf16.mxu0 0
      %1965 = vmatpush2.bf16.msra.mxu0 0
      %1966 = vmatprep.subr.bf16.mxu0 0
      %1967 = vmatpush2.bf16.msra.mxu0 0
      %1968 = vmatprep.subr.bf16.mxu0 0
      %1969 = vmatpush2.bf16.msra.mxu0 0
      %1970 = vmatprep.subr.bf16.mxu0 0
      %1971 = vmatpush2.bf16.msra.mxu0 0
      %1972 = vmatprep.subr.bf16.mxu0 0
      %1973 = vmatpush2.bf16.msra.mxu0 0
      %1974 = vmatprep.subr.bf16.mxu0 0
      %1975 = vmatpush2.bf16.msra.mxu0 0
      %1976 = vmatprep.mubr.bf16.mxu0 0
      %1977 = vmatmul.mubr.bf16.gmra.mxu0 %v1942
      %v1978 = vpop.f32.mrf.mxu0
      %v1979 = vadd.f32 0.0, %v1978
      %v1980 = vpop.f32.mrf.mxu0
      %v1981 = vpop.f32.mrf.mxu0
      %v1982 = vadd.f32 0.0, %v1981
      %v1983 = vpop.f32.mrf.mxu0
      %1984 = vdwg.mxu0
      %v1985 = vadd.f32 %v1916, %v1979
      %v1986 = vadd.f32 %v1919, %v1982
      %v1987 = vlaneseq
      %v1988 = vshrl.u32 %v1987, 7
      %v1989 = vsub.s32 0, %v1988
      %v1990 = vrot.slane %v1801, %v1989
      %v1991 = vmul.f32 %v1985, %v1990
      %v1992 = vmul.f32 %v1986, %v1990
      %v1993 = vlaneseq
      %v1994 = vshrl.u32 %v1993, 7
      %v1995 = vsub.s32 1, %v1994
      %v1996 = vrot.slane %v1801, %v1995
      %v1997 = vadd.f32 %v1991, %v1996
      %v1998 = vadd.f32 %v1992, %v1996
      %vm1999 = vcmp.ge.f32.partialorder %v1997, 0.0
      %vm2000 = vcmp.ge.f32.partialorder %v1998, 0.0
      %v2001 = vmul.f32 %v1997, 0.01
      %v2002 = vmul.f32 %v1998, 0.01
      %v2003 = vsel %vm1999, %v1997, %v2001
      %v2004 = vsel %vm2000, %v1998, %v2002
      %v2005 = vadd.f32 %v2003, %v687
      %v2006 = vadd.f32 %v2004, %v688
      %s2007 = scalar_lea.vmem %s1, 192
      %v2008 = vld [vmem:[%s2007] sm:$0xf]
      %v2009 = vld [vmem:[%s2007 + $0x4] sm:$0xf]
      %v2010 = vld [vmem:[%s2007 + $0x8] sm:$0xf]
      %v2011 = vld [vmem:[%s2007 + $0xc] sm:$0xf]
      %v2012 = vld [vmem:[%s2007 + $0x10] sm:$0xf]
      %v2013 = vld [vmem:[%s2007 + $0x14] sm:$0xf]
      %v2014 = vld [vmem:[%s2007 + $0x18] sm:$0xf]
      %v2015 = vld [vmem:[%s2007 + $0x1c] sm:$0xf]
      %v2016 = vld [vmem:[%s2007 + $0x20] sm:$0xf]
      %v2017 = vld [vmem:[%s2007 + $0x24] sm:$0xf]
      %v2018 = vld [vmem:[%s2007 + $0x28] sm:$0xf]
      %v2019 = vld [vmem:[%s2007 + $0x2c] sm:$0xf]
      %s2020 = scalar_lea.vmem %s2, 8
      %v2021 = vld [vmem:[%s2020] sm:$0x3]
      %v2022 = vrot.slane %v2005, 7
      %v2023 = vrot.slane %v2006, 7
      %v2024 = vsel %vm259, %v2022, %v2023
      %v2025 = vsel %vm259, %v2023, %v2022
      %v2026 = vsel %vm264, %v2025, 0.0
      %v2027 = vsel %vm265, %v2024, 0.0
      %v2028 = vpack.c.bf16 %v2027, %v2026
      %v2029 = vpack.c.bf16 %v2006, %v2005
      %v2034 = vunpack.c.l.b16 %v2012
      %v2035 = vunpack.c.l.b16 %v2013
      %v2036 = vunpack.c.l.b16 %v2014
      %v2037 = vunpack.c.l.b16 %v2015
      %v2038 = vpack.c.b16 %v2035, %v2034
      %v2039 = vpack.c.b16 %v2037, %v2036
      %v2043 = vsel %vm282, %v2029, 0
      %2045 = vmatprep.subr.bf16.mxu0 0
      %2046 = vmatpush1.bf16.msra.mxu0 0
      %2047 = vmatprep.subr.bf16.mxu0 0
      %2048 = vmatpush1.bf16.msra.mxu0 0
      %2049 = vmatprep.subr.bf16.mxu0 0
      %2050 = vmatpush1.bf16.msra.mxu0 0
      %2051 = vmatprep.subr.bf16.mxu0 0
      %2052 = vmatpush1.bf16.msra.mxu0 0
      %2053 = vmatprep.subr.bf16.mxu0 0
      %2054 = vmatpush1.bf16.msra.mxu0 0
      %2055 = vmatprep.subr.bf16.mxu0 0
      %2056 = vmatpush1.bf16.msra.mxu0 0
      %2057 = vmatprep.subr.bf16.mxu0 0
      %2058 = vmatpush1.bf16.msra.mxu0 %v2039
      %2059 = vmatprep.subr.bf16.mxu0 0
      %2060 = vmatpush1.bf16.msra.mxu0 %v2038
      %2061 = vmatprep.subr.bf16.mxu0 0
      %2062 = vmatpush2.bf16.msra.mxu0 0
      %2063 = vmatprep.subr.bf16.mxu0 0
      %2064 = vmatpush2.bf16.msra.mxu0 0
      %2065 = vmatprep.subr.bf16.mxu0 0
      %2066 = vmatpush2.bf16.msra.mxu0 0
      %2067 = vmatprep.subr.bf16.mxu0 0
      %2068 = vmatpush2.bf16.msra.mxu0 0
      %2069 = vmatprep.subr.bf16.mxu0 0
      %2070 = vmatpush2.bf16.msra.mxu0 0
      %2071 = vmatprep.subr.bf16.mxu0 0
      %2072 = vmatpush2.bf16.msra.mxu0 0
      %2073 = vmatprep.subr.bf16.mxu0 0
      %2074 = vmatpush2.bf16.msra.mxu0 0
      %2075 = vmatprep.subr.bf16.mxu0 0
      %2076 = vmatpush2.bf16.msra.mxu0 0
      %2077 = vmatprep.mubr.bf16.mxu0 0
      %2078 = vmatmul.mubr.bf16.gmra.mxu0 %v2043
      %v2079 = vpop.f32.mrf.mxu0
      %v2080 = vadd.f32 0.0, %v2079
      %v2081 = vpop.f32.mrf.mxu0
      %v2082 = vpop.f32.mrf.mxu0
      %v2083 = vadd.f32 0.0, %v2082
      %v2084 = vpop.f32.mrf.mxu0
      %2085 = vdwg.mxu0
      %v2090 = vunpack.c.l.b16 %v2008
      %v2091 = vunpack.c.l.b16 %v2009
      %v2092 = vunpack.c.l.b16 %v2010
      %v2093 = vunpack.c.l.b16 %v2011
      %v2094 = vpack.c.b16 %v2091, %v2090
      %v2095 = vpack.c.b16 %v2093, %v2092
      %v2099 = vsel %vm282, %v2028, 0
      %2101 = vmatprep.subr.bf16.mxu0 0
      %2102 = vmatpush1.bf16.msra.mxu0 0
      %2103 = vmatprep.subr.bf16.mxu0 0
      %2104 = vmatpush1.bf16.msra.mxu0 0
      %2105 = vmatprep.subr.bf16.mxu0 0
      %2106 = vmatpush1.bf16.msra.mxu0 0
      %2107 = vmatprep.subr.bf16.mxu0 0
      %2108 = vmatpush1.bf16.msra.mxu0 0
      %2109 = vmatprep.subr.bf16.mxu0 0
      %2110 = vmatpush1.bf16.msra.mxu0 0
      %2111 = vmatprep.subr.bf16.mxu0 0
      %2112 = vmatpush1.bf16.msra.mxu0 0
      %2113 = vmatprep.subr.bf16.mxu0 0
      %2114 = vmatpush1.bf16.msra.mxu0 %v2095
      %2115 = vmatprep.subr.bf16.mxu0 0
      %2116 = vmatpush1.bf16.msra.mxu0 %v2094
      %2117 = vmatprep.subr.bf16.mxu0 0
      %2118 = vmatpush2.bf16.msra.mxu0 0
      %2119 = vmatprep.subr.bf16.mxu0 0
      %2120 = vmatpush2.bf16.msra.mxu0 0
      %2121 = vmatprep.subr.bf16.mxu0 0
      %2122 = vmatpush2.bf16.msra.mxu0 0
      %2123 = vmatprep.subr.bf16.mxu0 0
      %2124 = vmatpush2.bf16.msra.mxu0 0
      %2125 = vmatprep.subr.bf16.mxu0 0
      %2126 = vmatpush2.bf16.msra.mxu0 0
      %2127 = vmatprep.subr.bf16.mxu0 0
      %2128 = vmatpush2.bf16.msra.mxu0 0
      %2129 = vmatprep.subr.bf16.mxu0 0
      %2130 = vmatpush2.bf16.msra.mxu0 0
      %2131 = vmatprep.subr.bf16.mxu0 0
      %2132 = vmatpush2.bf16.msra.mxu0 0
      %2133 = vmatprep.mubr.bf16.mxu0 0
      %2134 = vmatmul.mubr.bf16.gmra.mxu0 %v2099
      %v2135 = vpop.f32.mrf.mxu0
      %v2136 = vadd.f32 %v2080, %v2135
      %v2137 = vpop.f32.mrf.mxu0
      %v2138 = vpop.f32.mrf.mxu0
      %v2139 = vadd.f32 %v2083, %v2138
      %v2140 = vpop.f32.mrf.mxu0
      %2141 = vdwg.mxu0
      %v2142 = vrot.slane %v2005, 1
      %v2143 = vrot.slane %v2006, 1
      %v2144 = vsel %vm385, %v2142, %v2143
      %v2145 = vsel %vm385, %v2143, %v2142
      %v2146 = vsel %vm390, %v2144, 0.0
      %v2147 = vsel %vm391, %v2145, 0.0
      %v2148 = vpack.c.bf16 %v2147, %v2146
      %v2153 = vunpack.c.l.b16 %v2016
      %v2154 = vunpack.c.l.b16 %v2017
      %v2155 = vunpack.c.l.b16 %v2018
      %v2156 = vunpack.c.l.b16 %v2019
      %v2157 = vpack.c.b16 %v2154, %v2153
      %v2158 = vpack.c.b16 %v2156, %v2155
      %v2162 = vsel %vm282, %v2148, 0
      %2164 = vmatprep.subr.bf16.mxu0 0
      %2165 = vmatpush1.bf16.msra.mxu0 0
      %2166 = vmatprep.subr.bf16.mxu0 0
      %2167 = vmatpush1.bf16.msra.mxu0 0
      %2168 = vmatprep.subr.bf16.mxu0 0
      %2169 = vmatpush1.bf16.msra.mxu0 0
      %2170 = vmatprep.subr.bf16.mxu0 0
      %2171 = vmatpush1.bf16.msra.mxu0 0
      %2172 = vmatprep.subr.bf16.mxu0 0
      %2173 = vmatpush1.bf16.msra.mxu0 0
      %2174 = vmatprep.subr.bf16.mxu0 0
      %2175 = vmatpush1.bf16.msra.mxu0 0
      %2176 = vmatprep.subr.bf16.mxu0 0
      %2177 = vmatpush1.bf16.msra.mxu0 %v2158
      %2178 = vmatprep.subr.bf16.mxu0 0
      %2179 = vmatpush1.bf16.msra.mxu0 %v2157
      %2180 = vmatprep.subr.bf16.mxu0 0
      %2181 = vmatpush2.bf16.msra.mxu0 0
      %2182 = vmatprep.subr.bf16.mxu0 0
      %2183 = vmatpush2.bf16.msra.mxu0 0
      %2184 = vmatprep.subr.bf16.mxu0 0
      %2185 = vmatpush2.bf16.msra.mxu0 0
      %2186 = vmatprep.subr.bf16.mxu0 0
      %2187 = vmatpush2.bf16.msra.mxu0 0
      %2188 = vmatprep.subr.bf16.mxu0 0
      %2189 = vmatpush2.bf16.msra.mxu0 0
      %2190 = vmatprep.subr.bf16.mxu0 0
      %2191 = vmatpush2.bf16.msra.mxu0 0
      %2192 = vmatprep.subr.bf16.mxu0 0
      %2193 = vmatpush2.bf16.msra.mxu0 0
      %2194 = vmatprep.subr.bf16.mxu0 0
      %2195 = vmatpush2.bf16.msra.mxu0 0
      %2196 = vmatprep.mubr.bf16.mxu0 0
      %2197 = vmatmul.mubr.bf16.gmra.mxu0 %v2162
      %v2198 = vpop.f32.mrf.mxu0
      %v2199 = vadd.f32 0.0, %v2198
      %v2200 = vpop.f32.mrf.mxu0
      %v2201 = vpop.f32.mrf.mxu0
      %v2202 = vadd.f32 0.0, %v2201
      %v2203 = vpop.f32.mrf.mxu0
      %2204 = vdwg.mxu0
      %v2205 = vadd.f32 %v2136, %v2199
      %v2206 = vadd.f32 %v2139, %v2202
      %v2207 = vlaneseq
      %v2208 = vshrl.u32 %v2207, 7
      %v2209 = vsub.s32 0, %v2208
      %v2210 = vrot.slane %v2021, %v2209
      %v2211 = vmul.f32 %v2205, %v2210
      %v2212 = vmul.f32 %v2206, %v2210
      %v2213 = vlaneseq
      %v2214 = vshrl.u32 %v2213, 7
      %v2215 = vsub.s32 1, %v2214
      %v2216 = vrot.slane %v2021, %v2215
      %v2217 = vadd.f32 %v2211, %v2216
      %v2218 = vadd.f32 %v2212, %v2216
      %vm2219 = vcmp.ge.f32.partialorder %v2217, 0.0
      %vm2220 = vcmp.ge.f32.partialorder %v2218, 0.0
      %v2221 = vmul.f32 %v2217, 0.01
      %v2222 = vmul.f32 %v2218, 0.01
      %v2223 = vsel %vm2219, %v2217, %v2221
      %v2224 = vsel %vm2220, %v2218, %v2222
      %v2225 = vadd.f32 %v2223, %v469
      %v2226 = vadd.f32 %v2224, %v470
      %s2227 = scalar_lea.vmem %s1, 240
      %v2228 = vld [vmem:[%s2227] sm:$0xf]
      %v2229 = vld [vmem:[%s2227 + $0x4] sm:$0xf]
      %v2230 = vld [vmem:[%s2227 + $0x8] sm:$0xf]
      %v2231 = vld [vmem:[%s2227 + $0xc] sm:$0xf]
      %v2232 = vld [vmem:[%s2227 + $0x10] sm:$0xf]
      %v2233 = vld [vmem:[%s2227 + $0x14] sm:$0xf]
      %v2234 = vld [vmem:[%s2227 + $0x18] sm:$0xf]
      %v2235 = vld [vmem:[%s2227 + $0x1c] sm:$0xf]
      %v2236 = vld [vmem:[%s2227 + $0x20] sm:$0xf]
      %v2237 = vld [vmem:[%s2227 + $0x24] sm:$0xf]
      %v2238 = vld [vmem:[%s2227 + $0x28] sm:$0xf]
      %v2239 = vld [vmem:[%s2227 + $0x2c] sm:$0xf]
      %s2240 = scalar_lea.vmem %s2, 10
      %v2241 = vld [vmem:[%s2240] sm:$0x3]
      %v2242 = vrot.slane %v2225, 7
      %v2243 = vrot.slane %v2226, 7
      %v2244 = vsel %vm259, %v2242, %v2243
      %v2245 = vsel %vm259, %v2243, %v2242
      %v2246 = vsel %vm264, %v2245, 0.0
      %v2247 = vsel %vm265, %v2244, 0.0
      %v2248 = vpack.c.bf16 %v2247, %v2246
      %v2249 = vpack.c.bf16 %v2226, %v2225
      %v2254 = vunpack.c.l.b16 %v2232
      %v2255 = vunpack.c.l.b16 %v2233
      %v2256 = vunpack.c.l.b16 %v2234
      %v2257 = vunpack.c.l.b16 %v2235
      %v2258 = vpack.c.b16 %v2255, %v2254
      %v2259 = vpack.c.b16 %v2257, %v2256
      %v2263 = vsel %vm282, %v2249, 0
      %2265 = vmatprep.subr.bf16.mxu0 0
      %2266 = vmatpush1.bf16.msra.mxu0 0
      %2267 = vmatprep.subr.bf16.mxu0 0
      %2268 = vmatpush1.bf16.msra.mxu0 0
      %2269 = vmatprep.subr.bf16.mxu0 0
      %2270 = vmatpush1.bf16.msra.mxu0 0
      %2271 = vmatprep.subr.bf16.mxu0 0
      %2272 = vmatpush1.bf16.msra.mxu0 0
      %2273 = vmatprep.subr.bf16.mxu0 0
      %2274 = vmatpush1.bf16.msra.mxu0 0
      %2275 = vmatprep.subr.bf16.mxu0 0
      %2276 = vmatpush1.bf16.msra.mxu0 0
      %2277 = vmatprep.subr.bf16.mxu0 0
      %2278 = vmatpush1.bf16.msra.mxu0 %v2259
      %2279 = vmatprep.subr.bf16.mxu0 0
      %2280 = vmatpush1.bf16.msra.mxu0 %v2258
      %2281 = vmatprep.subr.bf16.mxu0 0
      %2282 = vmatpush2.bf16.msra.mxu0 0
      %2283 = vmatprep.subr.bf16.mxu0 0
      %2284 = vmatpush2.bf16.msra.mxu0 0
      %2285 = vmatprep.subr.bf16.mxu0 0
      %2286 = vmatpush2.bf16.msra.mxu0 0
      %2287 = vmatprep.subr.bf16.mxu0 0
      %2288 = vmatpush2.bf16.msra.mxu0 0
      %2289 = vmatprep.subr.bf16.mxu0 0
      %2290 = vmatpush2.bf16.msra.mxu0 0
      %2291 = vmatprep.subr.bf16.mxu0 0
      %2292 = vmatpush2.bf16.msra.mxu0 0
      %2293 = vmatprep.subr.bf16.mxu0 0
      %2294 = vmatpush2.bf16.msra.mxu0 0
      %2295 = vmatprep.subr.bf16.mxu0 0
      %2296 = vmatpush2.bf16.msra.mxu0 0
      %2297 = vmatprep.mubr.bf16.mxu0 0
      %2298 = vmatmul.mubr.bf16.gmra.mxu0 %v2263
      %v2299 = vpop.f32.mrf.mxu0
      %v2300 = vadd.f32 0.0, %v2299
      %v2301 = vpop.f32.mrf.mxu0
      %v2302 = vpop.f32.mrf.mxu0
      %v2303 = vadd.f32 0.0, %v2302
      %v2304 = vpop.f32.mrf.mxu0
      %2305 = vdwg.mxu0
      %v2310 = vunpack.c.l.b16 %v2228
      %v2311 = vunpack.c.l.b16 %v2229
      %v2312 = vunpack.c.l.b16 %v2230
      %v2313 = vunpack.c.l.b16 %v2231
      %v2314 = vpack.c.b16 %v2311, %v2310
      %v2315 = vpack.c.b16 %v2313, %v2312
      %v2319 = vsel %vm282, %v2248, 0
      %2321 = vmatprep.subr.bf16.mxu0 0
      %2322 = vmatpush1.bf16.msra.mxu0 0
      %2323 = vmatprep.subr.bf16.mxu0 0
      %2324 = vmatpush1.bf16.msra.mxu0 0
      %2325 = vmatprep.subr.bf16.mxu0 0
      %2326 = vmatpush1.bf16.msra.mxu0 0
      %2327 = vmatprep.subr.bf16.mxu0 0
      %2328 = vmatpush1.bf16.msra.mxu0 0
      %2329 = vmatprep.subr.bf16.mxu0 0
      %2330 = vmatpush1.bf16.msra.mxu0 0
      %2331 = vmatprep.subr.bf16.mxu0 0
      %2332 = vmatpush1.bf16.msra.mxu0 0
      %2333 = vmatprep.subr.bf16.mxu0 0
      %2334 = vmatpush1.bf16.msra.mxu0 %v2315
      %2335 = vmatprep.subr.bf16.mxu0 0
      %2336 = vmatpush1.bf16.msra.mxu0 %v2314
      %2337 = vmatprep.subr.bf16.mxu0 0
      %2338 = vmatpush2.bf16.msra.mxu0 0
      %2339 = vmatprep.subr.bf16.mxu0 0
      %2340 = vmatpush2.bf16.msra.mxu0 0
      %2341 = vmatprep.subr.bf16.mxu0 0
      %2342 = vmatpush2.bf16.msra.mxu0 0
      %2343 = vmatprep.subr.bf16.mxu0 0
      %2344 = vmatpush2.bf16.msra.mxu0 0
      %2345 = vmatprep.subr.bf16.mxu0 0
      %2346 = vmatpush2.bf16.msra.mxu0 0
      %2347 = vmatprep.subr.bf16.mxu0 0
      %2348 = vmatpush2.bf16.msra.mxu0 0
      %2349 = vmatprep.subr.bf16.mxu0 0
      %2350 = vmatpush2.bf16.msra.mxu0 0
      %2351 = vmatprep.subr.bf16.mxu0 0
      %2352 = vmatpush2.bf16.msra.mxu0 0
      %2353 = vmatprep.mubr.bf16.mxu0 0
      %2354 = vmatmul.mubr.bf16.gmra.mxu0 %v2319
      %v2355 = vpop.f32.mrf.mxu0
      %v2356 = vadd.f32 %v2300, %v2355
      %v2357 = vpop.f32.mrf.mxu0
      %v2358 = vpop.f32.mrf.mxu0
      %v2359 = vadd.f32 %v2303, %v2358
      %v2360 = vpop.f32.mrf.mxu0
      %2361 = vdwg.mxu0
      %v2362 = vrot.slane %v2225, 1
      %v2363 = vrot.slane %v2226, 1
      %v2364 = vsel %vm385, %v2362, %v2363
      %v2365 = vsel %vm385, %v2363, %v2362
      %v2366 = vsel %vm390, %v2364, 0.0
      %v2367 = vsel %vm391, %v2365, 0.0
      %v2368 = vpack.c.bf16 %v2367, %v2366
      %v2373 = vunpack.c.l.b16 %v2236
      %v2374 = vunpack.c.l.b16 %v2237
      %v2375 = vunpack.c.l.b16 %v2238
      %v2376 = vunpack.c.l.b16 %v2239
      %v2377 = vpack.c.b16 %v2374, %v2373
      %v2378 = vpack.c.b16 %v2376, %v2375
      %v2382 = vsel %vm282, %v2368, 0
      %2384 = vmatprep.subr.bf16.mxu0 0
      %2385 = vmatpush1.bf16.msra.mxu0 0
      %2386 = vmatprep.subr.bf16.mxu0 0
      %2387 = vmatpush1.bf16.msra.mxu0 0
      %2388 = vmatprep.subr.bf16.mxu0 0
      %2389 = vmatpush1.bf16.msra.mxu0 0
      %2390 = vmatprep.subr.bf16.mxu0 0
      %2391 = vmatpush1.bf16.msra.mxu0 0
      %2392 = vmatprep.subr.bf16.mxu0 0
      %2393 = vmatpush1.bf16.msra.mxu0 0
      %2394 = vmatprep.subr.bf16.mxu0 0
      %2395 = vmatpush1.bf16.msra.mxu0 0
      %2396 = vmatprep.subr.bf16.mxu0 0
      %2397 = vmatpush1.bf16.msra.mxu0 %v2378
      %2398 = vmatprep.subr.bf16.mxu0 0
      %2399 = vmatpush1.bf16.msra.mxu0 %v2377
      %2400 = vmatprep.subr.bf16.mxu0 0
      %2401 = vmatpush2.bf16.msra.mxu0 0
      %2402 = vmatprep.subr.bf16.mxu0 0
      %2403 = vmatpush2.bf16.msra.mxu0 0
      %2404 = vmatprep.subr.bf16.mxu0 0
      %2405 = vmatpush2.bf16.msra.mxu0 0
      %2406 = vmatprep.subr.bf16.mxu0 0
      %2407 = vmatpush2.bf16.msra.mxu0 0
      %2408 = vmatprep.subr.bf16.mxu0 0
      %2409 = vmatpush2.bf16.msra.mxu0 0
      %2410 = vmatprep.subr.bf16.mxu0 0
      %2411 = vmatpush2.bf16.msra.mxu0 0
      %2412 = vmatprep.subr.bf16.mxu0 0
      %2413 = vmatpush2.bf16.msra.mxu0 0
      %2414 = vmatprep.subr.bf16.mxu0 0
      %2415 = vmatpush2.bf16.msra.mxu0 0
      %2416 = vmatprep.mubr.bf16.mxu0 0
      %2417 = vmatmul.mubr.bf16.gmra.mxu0 %v2382
      %v2418 = vpop.f32.mrf.mxu0
      %v2419 = vadd.f32 0.0, %v2418
      %v2420 = vpop.f32.mrf.mxu0
      %v2421 = vpop.f32.mrf.mxu0
      %v2422 = vadd.f32 0.0, %v2421
      %v2423 = vpop.f32.mrf.mxu0
      %2424 = vdwg.mxu0
      %v2425 = vadd.f32 %v2356, %v2419
      %v2426 = vadd.f32 %v2359, %v2422
      %v2427 = vlaneseq
      %v2428 = vshrl.u32 %v2427, 7
      %v2429 = vsub.s32 0, %v2428
      %v2430 = vrot.slane %v2241, %v2429
      %v2431 = vmul.f32 %v2425, %v2430
      %v2432 = vmul.f32 %v2426, %v2430
      %v2433 = vlaneseq
      %v2434 = vshrl.u32 %v2433, 7
      %v2435 = vsub.s32 1, %v2434
      %v2436 = vrot.slane %v2241, %v2435
      %v2437 = vadd.f32 %v2431, %v2436
      %v2438 = vadd.f32 %v2432, %v2436
      %vm2439 = vcmp.ge.f32.partialorder %v2437, 0.0
      %vm2440 = vcmp.ge.f32.partialorder %v2438, 0.0
      %v2441 = vmul.f32 %v2437, 0.01
      %v2442 = vmul.f32 %v2438, 0.01
      %v2443 = vsel %vm2439, %v2437, %v2441
      %v2444 = vsel %vm2440, %v2438, %v2442
      %v2445 = vadd.f32 %v2443, %v229
      %v2446 = vadd.f32 %v2444, %v230
      %2447 = vst.msk [vmem:[%s224] sm:$0xff] %vm282, %v2445
      %2448 = vst.msk [vmem:[%s224 + $0x8] sm:$0xff] %vm282, %v2446
      %p2449 = scmp.lt.s32.totalorder %s16, 1
      %s2450 = scalar_select %p2449, %s16, 1
      %s2451 = smul.addr %s2450, 2
      %s2452 = smul.addr %s2451, 8
      %s2453 = scalar_lea.vmem %s5, %s2452
      // Predicated region
      $region41: #{_lambda_.1} parent=39 // pred_check
        %p2454 = pneg %p144
      $region42: #{_lambda_.1} parent=39 // pred_check_branch
        %2456 = sbr.rel (%p2454) target = $region44
      $region43: #{_lambda_.1} parent=39 // pred_region
        _
      $region44: #{_lambda_.1} parent=39 // pred_fallthru
        _
    $region40: #{_lambda_.1} parent=5 // pred_fallthru
      _
    %p2457 = scmp.le.s32.totalorder 2, %s11
    // Predicated region
    $region45: #{_lambda_.1} parent=5 // pred_check
      %p2458 = pneg %p2457
    $region46: #{_lambda_.1} parent=5 // pred_check_branch
      %2460 = sbr.rel (%p2458) target = $region48
    $region47: #{_lambda_.1} parent=5 // pred_region
      %s2461 = ssub.s32 %s11, 2
      // Predicated region
      $region49: #{_lambda_.1} parent=47 // pred_check
        %p2462 = pneg %p150
      $region50: #{_lambda_.1} parent=47 // pred_check_branch
        %2464 = sbr.rel (%p2462) target = $region52
      $region51: #{_lambda_.1} parent=47 // pred_region
        %p2465 = scmp.lt.s32.totalorder %s17, 1
        %s2466 = scalar_select %p2465, %s17, 1
        %s2467 = smul.addr %s2466, 2
        %s2468 = smul.addr %s2467, 8
        %s2469 = scalar_lea.vmem %s5, %s2468
      $region52: #{_lambda_.1} parent=47 // pred_fallthru
        _
    $region48: #{_lambda_.1} parent=5 // pred_fallthru
      _
  $region6: #{_lambda_.1} parent=0 // loop_footer
    %s15 = sadd.s32 1, %s11
  $region7: #{_lambda_.1} parent=0 // loop_footer_branch
    %10 = sbr.rel target = $region3
  $region8: #{_lambda_.1} parent=0 // loop_exit
    _

</llo_original>
